<compile_context>
chip_gen: v5e
topology: v5e:2x2
jax: 0.10.0
libtpu: 0.0.40
codegen_flags: <defaults>
</compile_context>

<pallas_src>
import jax
import jax.numpy as jnp
import numpy as np
from jax import lax
from jax.experimental import pallas as pl
from jax.experimental.pallas import tpu as pltpu


def _residual_block_kernel(x_ref, xtop_ref, xbot_ref,
                           w1_ref, s1_ref, b1_ref,
                           w3_ref, s2_ref, b2_ref,
                           o_ref, pad_ref, patch_ref):
    # x_ref:    (1, TH, W, Cp)   input row tile (NHWC, f32 or bf16; Cp = lane-padded C)
    # xtop_ref: (1, 1, W, Cp)    row just above the tile (clamped at the image border)
    # xbot_ref: (1, 1, W, Cp)    row just below the tile (clamped at the image border)
    # w1_ref:   (Cp, Chp)        bf16 1x1 conv weights (Chp = lane-padded C // 2)
    # s1/b1:    (1, Chp)         f32 folded BN scale / bias for conv1
    # w3_ref:   (9*Chp, Cp)      bf16 3x3 conv weights, tap-major row index = (ky*3+kx)*Chp + c
    # s2/b2:    (1, Cp)          f32 folded BN scale / bias for conv2
    # o_ref:    (1, TH, W, Cp)   output row tile (same dtype as x)
    # pad_ref:  (TH+2, W+2, Chp) bf16 zero-padded conv1 output (VMEM scratch)
    # patch_ref:(TH*W, 9*Chp)    bf16 im2col patches (VMEM scratch)
    _, TH, W, C = x_ref.shape
    Ch = w1_ref.shape[1]
    h = pl.program_id(1)
    nh = pl.num_programs(1)

    def conv1_bf16(rows, gate=None):
        # (P, Cp) -> (P, Chp) bf16 : 1x1 conv + folded BN + LeakyReLU(0.1), math in f32
        y = jnp.dot(rows.astype(jnp.bfloat16), w1_ref[...],
                    preferred_element_type=jnp.float32)
        y = y * s1_ref[...] + b1_ref[...]
        y = jnp.where(y > 0, y, 0.1 * y)
        if gate is not None:
            y = y * gate
        return y.astype(jnp.bfloat16)

    # ---- Conv1 on the tile interior ----
    y1 = conv1_bf16(x_ref[...].reshape(TH * W, C))
    pad_ref[1:TH + 1, 1:W + 1, :] = y1.reshape(TH, W, Ch)

    # ---- Conv1 on the halo rows; zero them at the image border (== zero padding of conv2) ----
    top = conv1_bf16(xtop_ref[...].reshape(W, C), gate=(h > 0).astype(jnp.float32))
    pad_ref[0:1, 1:W + 1, :] = top.reshape(1, W, Ch)

    bot = conv1_bf16(xbot_ref[...].reshape(W, C), gate=(h < nh - 1).astype(jnp.float32))
    pad_ref[TH + 1:TH + 2, 1:W + 1, :] = bot.reshape(1, W, Ch)

    # ---- zero only the 1-pixel left/right borders (everything else is overwritten each step) ----
    zcol = jnp.zeros((TH + 2, 1, Ch), jnp.bfloat16)
    pad_ref[:, 0:1, :] = zcol
    pad_ref[:, W + 1:W + 2, :] = zcol

    # ---- Conv2 (3x3, pad=1) as a single im2col matmul with K = 9*Chp ----
    # pad_ref is already bf16, so these 9 passes are pure copies (no cast); tap*Ch lane offsets
    # are multiples of 128 thanks to channel lane-padding.
    for ky in range(3):
        for kx in range(3):
            tap = 3 * ky + kx
            patch_ref[:, tap * Ch:(tap + 1) * Ch] = (
                pad_ref[ky:ky + TH, kx:kx + W, :].reshape(TH * W, Ch))
    y2 = jnp.dot(patch_ref[...], w3_ref[...], preferred_element_type=jnp.float32)
    y2 = y2 * s2_ref[...] + b2_ref[...]
    y2 = jnp.where(y2 > 0, y2, 0.1 * y2)

    # ---- residual add (re-read x from its VMEM block; add in f32, store in x's dtype) ----
    out = y2 + x_ref[...].reshape(TH * W, C).astype(jnp.float32)
    o_ref[...] = out.reshape(1, TH, W, C).astype(o_ref.dtype)


def _ceil_to(x, m):
    return -(-x // m) * m


def _buf_bytes(shape, dtype):
    """Rough VMEM footprint of a >=2D buffer, padding the last two dims to the native vreg tile
    for the dtype ((8,128) for 4-byte, (16,128) for 2-byte elements)."""
    itemsize = jnp.dtype(dtype).itemsize
    sub = {4: 8, 2: 16, 1: 32}.get(itemsize, 8)
    lead = 1
    for d in shape[:-2]:
        lead *= d
    return lead * _ceil_to(shape[-2], sub) * _ceil_to(shape[-1], 128) * itemsize


def _step_vmem_bytes(TH, W, C, Ch, x_dtype):
    dbl = 2  # pipeline double-buffering of inputs / outputs
    tiles = dbl * (_buf_bytes((1, TH, W, C), x_dtype)            # x tile
                   + 2 * _buf_bytes((1, 1, W, C), x_dtype)       # halo rows
                   + _buf_bytes((1, TH, W, C), x_dtype)          # out tile
                   + _buf_bytes((C, Ch), jnp.bfloat16)           # w1
                   + _buf_bytes((9 * Ch, C), jnp.bfloat16)       # w3
                   + 2 * _buf_bytes((1, Ch), jnp.float32)        # s1, b1
                   + 2 * _buf_bytes((1, C), jnp.float32))        # s2, b2
    scratch = (_buf_bytes((TH + 2, W + 2, Ch), jnp.bfloat16)     # pad buffer (bf16 now)
               + _buf_bytes((TH * W, 9 * Ch), jnp.bfloat16))     # im2col patches
    return tiles + scratch


def _choose_row_tile(H, W, C, Ch, x_dtype, budget_bytes):
    """Largest row tile dividing H whose per-step footprint fits the budget."""
    best = 1
    for th in range(1, H + 1):
        if H % th == 0 and _step_vmem_bytes(th, W, C, Ch, x_dtype) <= budget_bytes:
            best = th
    return best


def _vmem_budget_and_cap():
    """(row-tile budget, scoped vmem cap) per TPU generation."""
    try:
        kind = jax.devices()[0].device_kind.lower()
    except Exception:
        kind = ""
    if "v7" in kind or "7x" in kind:
        return 20 << 20, 48 << 20      # 64 MiB physical per TC: leave compiler headroom
    if "v4" in kind or "v5" in kind or "v6" in kind:
        return 44 << 20, 96 << 20      # 128 MiB physical: grow TH, fewer grid steps
    return 16 << 20, 40 << 20          # unknown chip: conservative


def residual_block_nhwc(x_nhwc, w1, s1, b1, w3, s2, b2, *, row_tile=None):
    """x_nhwc already lane-padded along C to match the (padded) weight layouts."""
    N, H, W, C = x_nhwc.shape
    Ch = w1.shape[1]
    budget, cap = _vmem_budget_and_cap()
    TH = (_choose_row_tile(H, W, C, Ch, x_nhwc.dtype, budget)
          if row_tile is None else row_tile)
    if H % TH != 0:
        raise ValueError(f"row_tile={TH} must divide H={H}")
    NH = H // TH

    step = _step_vmem_bytes(TH, W, C, Ch, x_nhwc.dtype)
    vmem_limit = min(max(int(1.5 * step) + (2 << 20), 16 << 20), cap)

    tile_map = lambda n, h: (n, h, 0, 0)
    top_map = lambda n, h: (n, jnp.maximum(h * TH - 1, 0), 0, 0)       # row above tile, clamped
    bot_map = lambda n, h: (n, jnp.minimum(h * TH + TH, H - 1), 0, 0)  # row below tile, clamped
    rep = lambda n, h: (0, 0)

    return pl.pallas_call(
        _residual_block_kernel,
        out_shape=jax.ShapeDtypeStruct((N, H, W, C), x_nhwc.dtype),
        grid_spec=pltpu.PrefetchScalarGridSpec(
            num_scalar_prefetch=0,
            grid=(N, NH),
            in_specs=[
                pl.BlockSpec((1, TH, W, C), tile_map),   # x row tile
                pl.BlockSpec((1, 1, W, C), top_map),     # halo row above
                pl.BlockSpec((1, 1, W, C), bot_map),     # halo row below
                pl.BlockSpec((C, Ch), rep),              # w1 (bf16)
                pl.BlockSpec((1, Ch), rep),              # s1
                pl.BlockSpec((1, Ch), rep),              # b1
                pl.BlockSpec((9 * Ch, C), rep),          # w3 (bf16)
                pl.BlockSpec((1, C), rep),               # s2
                pl.BlockSpec((1, C), rep),               # b2
            ],
            out_specs=pl.BlockSpec((1, TH, W, C), tile_map),
            scratch_shapes=[
                pltpu.VMEM((TH + 2, W + 2, Ch), jnp.bfloat16),
                pltpu.VMEM((TH * W, 9 * Ch), jnp.bfloat16),
            ],
        ),
        compiler_params=pltpu.CompilerParams(
            dimension_semantics=("parallel", "parallel"),
            vmem_limit_bytes=vmem_limit),
    )(x_nhwc, x_nhwc, x_nhwc, w1, s1, b1, w3, s2, b2)


def residual_block(x_nchw, params, *, row_tile=None):
    """PyTorch-compatible entry point: x is NCHW (f32 or bf16), returns NCHW in x's dtype."""
    w1, s1, b1, w3, s2, b2 = params
    Cp = w1.shape[0]                                    # lane-padded channel count
    x_nhwc = jnp.transpose(x_nchw, (0, 2, 3, 1))
    C = x_nhwc.shape[-1]
    if Cp != C:                                         # lane-pad channels with zeros
        x_nhwc = jnp.pad(x_nhwc, ((0, 0), (0, 0), (0, 0), (0, Cp - C)))
    out_nhwc = residual_block_nhwc(x_nhwc, w1, s1, b1, w3, s2, b2, row_tile=row_tile)
    if Cp != C:
        out_nhwc = out_nhwc[..., :C]
    return jnp.transpose(out_nhwc, (0, 3, 1, 2))


def make_params(key, in_channels, *, lane_multiple=128):
    """Deterministic synthetic parameters.

    Returns kernel params (lane-padded, bf16 matmul weights, f32 folded BN scale/bias)
    plus raw tensors for the pure-JAX reference.
    """
    C, Ch = in_channels, in_channels // 2
    Cp = _ceil_to(C, lane_multiple)
    Chp = _ceil_to(Ch, lane_multiple)
    ks = jax.random.split(key, 10)
    eps = 1e-5

    w1_oihw = jax.random.normal(ks[0], (Ch, C, 1, 1), jnp.float32) * 0.1
    w3_oihw = jax.random.normal(ks[1], (C, Ch, 3, 3), jnp.float32) * 0.1

    g1 = 1.0 + 0.1 * jax.random.normal(ks[2], (Ch,), jnp.float32)
    be1 = 0.1 * jax.random.normal(ks[3], (Ch,), jnp.float32)
    m1 = 0.1 * jax.random.normal(ks[4], (Ch,), jnp.float32)
    v1 = jax.random.uniform(ks[5], (Ch,), jnp.float32, 0.5, 1.5)

    g2 = 1.0 + 0.1 * jax.random.normal(ks[6], (C,), jnp.float32)
    be2 = 0.1 * jax.random.normal(ks[7], (C,), jnp.float32)
    m2 = 0.1 * jax.random.normal(ks[8], (C,), jnp.float32)
    v2 = jax.random.uniform(ks[9], (C,), jnp.float32, 0.5, 1.5)

    s1 = g1 / jnp.sqrt(v1 + eps)
    b1 = be1 - m1 * s1
    s2 = g2 / jnp.sqrt(v2 + eps)
    b2 = be2 - m2 * s2

    # ---- kernel-side lane-padded layouts ----
    # Padded input channels of x are zero; padded conv1/conv2 output channels get weight
    # columns = 0, BN scale = 1, bias = 0, so they stay exactly zero end-to-end.
    w1_k = jnp.zeros((Cp, Chp), jnp.bfloat16).at[:C, :Ch].set(
        jnp.transpose(w1_oihw[:, :, 0, 0], (1, 0)).astype(jnp.bfloat16))        # (Cp, Chp)

    w3_taps = jnp.transpose(w3_oihw, (2, 3, 1, 0))                              # (3,3,Ch,C)
    w3_k = (jnp.zeros((3, 3, Chp, Cp), jnp.float32)
            .at[:, :, :Ch, :C].set(w3_taps)
            .reshape(9 * Chp, Cp).astype(jnp.bfloat16))                         # (9*Chp, Cp)

    s1_k = jnp.ones((1, Chp), jnp.float32).at[:, :Ch].set(s1.reshape(1, Ch))
    b1_k = jnp.zeros((1, Chp), jnp.float32).at[:, :Ch].set(b1.reshape(1, Ch))
    s2_k = jnp.ones((1, Cp), jnp.float32).at[:, :C].set(s2.reshape(1, C))
    b2_k = jnp.zeros((1, Cp), jnp.float32).at[:, :C].set(b2.reshape(1, C))

    kernel_params = (w1_k, s1_k, b1_k, w3_k, s2_k, b2_k)
    raw = (w1_oihw, w3_oihw, s1, b1, s2, b2)
    return kernel_params, raw


def reference_forward(x_nchw, raw):
    """Pure-JAX (lax.conv, f32) reference of the PyTorch forward."""
    w1_oihw, w3_oihw, s1, b1, s2, b2 = raw
    dn = ("NCHW", "OIHW", "NCHW")
    leaky = lambda t: jnp.where(t > 0, t, 0.1 * t)

    y = lax.conv_general_dilated(x_nchw, w1_oihw, (1, 1), "VALID",
                                 dimension_numbers=dn)
    y = leaky(y * s1[None, :, None, None] + b1[None, :, None, None])
    y = lax.conv_general_dilated(y, w3_oihw, (1, 1), ((1, 1), (1, 1)),
                                 dimension_numbers=dn)
    y = leaky(y * s2[None, :, None, None] + b2[None, :, None, None])
    return y + x_nchw


if __name__ == "__main__":
    key = jax.random.PRNGKey(0)
    k_x, k_p = jax.random.split(key)

    N, C, H, W = 2, 4, 16, 16  # in_channels = 4
    x = jax.random.normal(k_x, (N, C, H, W), jnp.float32)

    kernel_params, raw = make_params(k_p, C)
    ref = jax.block_until_ready(reference_forward(x, raw))

    # row_tile=8 -> 2 row tiles per image: exercises both the interior-halo and border-halo paths.
    # f32 I/O path (bf16 matmul operands, f32 accumulation => loosened tolerance).
    out_f32 = jax.block_until_ready(residual_block(x, kernel_params, row_tile=8))
    np.testing.assert_allclose(np.asarray(out_f32), np.asarray(ref), rtol=5e-2, atol=5e-2)

    # bf16 I/O path (halves HBM traffic on memory-bound stages); math stays f32 in-kernel.
    x_bf16 = x.astype(jnp.bfloat16)
    out_bf16 = jax.block_until_ready(residual_block(x_bf16, kernel_params, row_tile=8))
    ref_bf16 = jax.block_until_ready(reference_forward(x_bf16.astype(jnp.float32), raw))
    np.testing.assert_allclose(np.asarray(out_bf16.astype(jnp.float32)),
                               np.asarray(ref_bf16), rtol=1e-1, atol=1e-1)

    print("KERNEL_OK")
</pallas_src>

<mosaic_0001>
module attributes {stable_mosaic.version = 11 : i64} {
  func.func @_residual_block_kernel(%arg0: i32, %arg1: i32, %arg2: memref<1x8x16x128xf32, #tpu.memory_space<vmem>>, %arg3: memref<1x1x16x128xf32, #tpu.memory_space<vmem>>, %arg4: memref<1x1x16x128xf32, #tpu.memory_space<vmem>>, %arg5: memref<128x128xbf16, #tpu.memory_space<vmem>>, %arg6: memref<1x128xf32, #tpu.memory_space<vmem>>, %arg7: memref<1x128xf32, #tpu.memory_space<vmem>>, %arg8: memref<1152x128xbf16, #tpu.memory_space<vmem>>, %arg9: memref<1x128xf32, #tpu.memory_space<vmem>>, %arg10: memref<1x128xf32, #tpu.memory_space<vmem>>, %arg11: memref<1x8x16x128xf32, #tpu.memory_space<vmem>>, %arg12: memref<10x18x128xbf16, #tpu.memory_space<vmem>>, %arg13: memref<128x1152xbf16, #tpu.memory_space<vmem>>) attributes {dimension_semantics = [#tpu.dimension_semantics<parallel>, #tpu.dimension_semantics<parallel>], iteration_bounds = array<i64: 2, 2>, scalar_prefetch = 0 : i64, scratch_operands = 2 : i64, tpu.core_type = #tpu.core_type<tc>, window_params = [{transform_indices = @transform_0, window_bounds = array<i64: 1, 8, 16, 128>}, {transform_indices = @transform_1, window_bounds = array<i64: 1, 1, 16, 128>}, {transform_indices = @transform_2, window_bounds = array<i64: 1, 1, 16, 128>}, {pipeline_mode = #tpu.pipeline_mode<synchronous>, transform_indices = @transform_3, window_bounds = array<i64: 128, 128>}, {pipeline_mode = #tpu.pipeline_mode<synchronous>, transform_indices = @transform_4, window_bounds = array<i64: 1, 128>}, {pipeline_mode = #tpu.pipeline_mode<synchronous>, transform_indices = @transform_5, window_bounds = array<i64: 1, 128>}, {pipeline_mode = #tpu.pipeline_mode<synchronous>, transform_indices = @transform_6, window_bounds = array<i64: 1152, 128>}, {pipeline_mode = #tpu.pipeline_mode<synchronous>, transform_indices = @transform_7, window_bounds = array<i64: 1, 128>}, {pipeline_mode = #tpu.pipeline_mode<synchronous>, transform_indices = @transform_8, window_bounds = array<i64: 1, 128>}, {transform_indices = @transform_9, window_bounds = array<i64: 1, 8, 16, 128>}]} {
    %c0 = arith.constant 0 : index
    %c0_0 = arith.constant 0 : index
    %c0_1 = arith.constant 0 : index
    %c0_2 = arith.constant 0 : index
    %0 = vector.load %arg2[%c0, %c0_0, %c0_1, %c0_2] : memref<1x8x16x128xf32, #tpu.memory_space<vmem>>, vector<1x8x16x128xf32>
    %1 = vector.shape_cast %0 : vector<1x8x16x128xf32> to vector<128x128xf32>
    %2 = arith.truncf %1 : vector<128x128xf32> to vector<128x128xbf16>
    %c0_3 = arith.constant 0 : index
    %c0_4 = arith.constant 0 : index
    %3 = vector.load %arg5[%c0_3, %c0_4] : memref<128x128xbf16, #tpu.memory_space<vmem>>, vector<128x128xbf16>
    %cst = arith.constant dense<0.000000e+00> : vector<128x128xf32>
    %4 = tpu.matmul %2, %3, %cst {dimension_numbers = #tpu.dot_dimension_numbers<[1], [0], [0], [1], [0, 0, 1, 1], [], []>} : vector<128x128xbf16>, vector<128x128xbf16>, vector<128x128xf32> -> vector<128x128xf32>
    %c0_5 = arith.constant 0 : index
    %c0_6 = arith.constant 0 : index
    %5 = vector.load %arg6[%c0_5, %c0_6] : memref<1x128xf32, #tpu.memory_space<vmem>>, vector<1x128xf32>
    %6 = vector.broadcast %5 : vector<1x128xf32> to vector<128x128xf32>
    %7 = arith.mulf %4, %6 : vector<128x128xf32>
    %c0_7 = arith.constant 0 : index
    %c0_8 = arith.constant 0 : index
    %8 = vector.load %arg7[%c0_7, %c0_8] : memref<1x128xf32, #tpu.memory_space<vmem>>, vector<1x128xf32>
    %9 = vector.broadcast %8 : vector<1x128xf32> to vector<128x128xf32>
    %10 = arith.addf %7, %9 : vector<128x128xf32>
    %cst_9 = arith.constant 0.000000e+00 : f32
    %11 = vector.broadcast %cst_9 : f32 to vector<128x128xf32>
    %12 = arith.cmpf ogt, %10, %11 : vector<128x128xf32>
    %cst_10 = arith.constant 1.000000e-01 : f32
    %13 = vector.broadcast %cst_10 : f32 to vector<128x128xf32>
    %14 = arith.mulf %13, %10 : vector<128x128xf32>
    %15 = arith.select %12, %10, %14 : vector<128x128xi1>, vector<128x128xf32>
    %16 = arith.truncf %15 : vector<128x128xf32> to vector<128x128xbf16>
    %17 = vector.shape_cast %16 : vector<128x128xbf16> to vector<8x16x128xbf16>
    %c1 = arith.constant 1 : index
    %c1_11 = arith.constant 1 : index
    %c0_12 = arith.constant 0 : index
    %18 = vector.load %arg12[%c1, %c1_11, %c0_12] : memref<10x18x128xbf16, #tpu.memory_space<vmem>>, vector<8x16x128xbf16>
    tpu.vector_store %arg12[%c1, %c1_11, %c0_12], %17 {strides = array<i32>} : memref<10x18x128xbf16, #tpu.memory_space<vmem>>, vector<8x16x128xbf16>,
    %c0_13 = arith.constant 0 : index
    %c0_14 = arith.constant 0 : index
    %c0_15 = arith.constant 0 : index
    %c0_16 = arith.constant 0 : index
    %19 = vector.load %arg3[%c0_13, %c0_14, %c0_15, %c0_16] : memref<1x1x16x128xf32, #tpu.memory_space<vmem>>, vector<1x1x16x128xf32>
    %20 = vector.shape_cast %19 : vector<1x1x16x128xf32> to vector<16x128xf32>
    %c0_i32 = arith.constant 0 : i32
    %21 = arith.cmpi sgt, %arg1, %c0_i32 : i32
    %22 = arith.extui %21 : i1 to i32
    %23 = arith.sitofp %22 : i32 to f32
    %24 = arith.truncf %20 : vector<16x128xf32> to vector<16x128xbf16>
    %c0_17 = arith.constant 0 : index
    %c0_18 = arith.constant 0 : index
    %25 = vector.load %arg5[%c0_17, %c0_18] : memref<128x128xbf16, #tpu.memory_space<vmem>>, vector<128x128xbf16>
    %cst_19 = arith.constant dense<0.000000e+00> : vector<16x128xf32>
    %26 = tpu.matmul %24, %25, %cst_19 {dimension_numbers = #tpu.dot_dimension_numbers<[1], [0], [0], [1], [0, 0, 1, 1], [], []>} : vector<16x128xbf16>, vector<128x128xbf16>, vector<16x128xf32> -> vector<16x128xf32>
    %c0_20 = arith.constant 0 : index
    %c0_21 = arith.constant 0 : index
    %27 = vector.load %arg6[%c0_20, %c0_21] : memref<1x128xf32, #tpu.memory_space<vmem>>, vector<1x128xf32>
    %28 = vector.broadcast %27 : vector<1x128xf32> to vector<16x128xf32>
    %29 = arith.mulf %26, %28 : vector<16x128xf32>
    %c0_22 = arith.constant 0 : index
    %c0_23 = arith.constant 0 : index
    %30 = vector.load %arg7[%c0_22, %c0_23] : memref<1x128xf32, #tpu.memory_space<vmem>>, vector<1x128xf32>
    %31 = vector.broadcast %30 : vector<1x128xf32> to vector<16x128xf32>
    %32 = arith.addf %29, %31 : vector<16x128xf32>
    %cst_24 = arith.constant 0.000000e+00 : f32
    %33 = vector.broadcast %cst_24 : f32 to vector<16x128xf32>
    %34 = arith.cmpf ogt, %32, %33 : vector<16x128xf32>
    %cst_25 = arith.constant 1.000000e-01 : f32
    %35 = vector.broadcast %cst_25 : f32 to vector<16x128xf32>
    %36 = arith.mulf %35, %32 : vector<16x128xf32>
    %37 = arith.select %34, %32, %36 : vector<16x128xi1>, vector<16x128xf32>
    %38 = vector.broadcast %23 : f32 to vector<16x128xf32>
    %39 = arith.mulf %37, %38 : vector<16x128xf32>
    %40 = arith.truncf %39 : vector<16x128xf32> to vector<16x128xbf16>
    %41 = vector.shape_cast %40 : vector<16x128xbf16> to vector<1x16x128xbf16>
    %c0_26 = arith.constant 0 : index
    %c1_27 = arith.constant 1 : index
    %c0_28 = arith.constant 0 : index
    %42 = vector.load %arg12[%c0_26, %c1_27, %c0_28] : memref<10x18x128xbf16, #tpu.memory_space<vmem>>, vector<1x16x128xbf16>
    tpu.vector_store %arg12[%c0_26, %c1_27, %c0_28], %41 {strides = array<i32>} : memref<10x18x128xbf16, #tpu.memory_space<vmem>>, vector<1x16x128xbf16>,
    %c0_29 = arith.constant 0 : index
    %c0_30 = arith.constant 0 : index
    %c0_31 = arith.constant 0 : index
    %c0_32 = arith.constant 0 : index
    %43 = vector.load %arg4[%c0_29, %c0_30, %c0_31, %c0_32] : memref<1x1x16x128xf32, #tpu.memory_space<vmem>>, vector<1x1x16x128xf32>
    %44 = vector.shape_cast %43 : vector<1x1x16x128xf32> to vector<16x128xf32>
    %c1_i32 = arith.constant 1 : i32
    %45 = arith.cmpi slt, %arg1, %c1_i32 : i32
    %46 = arith.extui %45 : i1 to i32
    %47 = arith.sitofp %46 : i32 to f32
    %48 = arith.truncf %44 : vector<16x128xf32> to vector<16x128xbf16>
    %c0_33 = arith.constant 0 : index
    %c0_34 = arith.constant 0 : index
    %49 = vector.load %arg5[%c0_33, %c0_34] : memref<128x128xbf16, #tpu.memory_space<vmem>>, vector<128x128xbf16>
    %cst_35 = arith.constant dense<0.000000e+00> : vector<16x128xf32>
    %50 = tpu.matmul %48, %49, %cst_35 {dimension_numbers = #tpu.dot_dimension_numbers<[1], [0], [0], [1], [0, 0, 1, 1], [], []>} : vector<16x128xbf16>, vector<128x128xbf16>, vector<16x128xf32> -> vector<16x128xf32>
    %c0_36 = arith.constant 0 : index
    %c0_37 = arith.constant 0 : index
    %51 = vector.load %arg6[%c0_36, %c0_37] : memref<1x128xf32, #tpu.memory_space<vmem>>, vector<1x128xf32>
    %52 = vector.broadcast %51 : vector<1x128xf32> to vector<16x128xf32>
    %53 = arith.mulf %50, %52 : vector<16x128xf32>
    %c0_38 = arith.constant 0 : index
    %c0_39 = arith.constant 0 : index
    %54 = vector.load %arg7[%c0_38, %c0_39] : memref<1x128xf32, #tpu.memory_space<vmem>>, vector<1x128xf32>
    %55 = vector.broadcast %54 : vector<1x128xf32> to vector<16x128xf32>
    %56 = arith.addf %53, %55 : vector<16x128xf32>
    %cst_40 = arith.constant 0.000000e+00 : f32
    %57 = vector.broadcast %cst_40 : f32 to vector<16x128xf32>
    %58 = arith.cmpf ogt, %56, %57 : vector<16x128xf32>
    %cst_41 = arith.constant 1.000000e-01 : f32
    %59 = vector.broadcast %cst_41 : f32 to vector<16x128xf32>
    %60 = arith.mulf %59, %56 : vector<16x128xf32>
    %61 = arith.select %58, %56, %60 : vector<16x128xi1>, vector<16x128xf32>
    %62 = vector.broadcast %47 : f32 to vector<16x128xf32>
    %63 = arith.mulf %61, %62 : vector<16x128xf32>
    %64 = arith.truncf %63 : vector<16x128xf32> to vector<16x128xbf16>
    %65 = vector.shape_cast %64 : vector<16x128xbf16> to vector<1x16x128xbf16>
    %c9 = arith.constant 9 : index
    %c1_42 = arith.constant 1 : index
    %c0_43 = arith.constant 0 : index
    %66 = vector.load %arg12[%c9, %c1_42, %c0_43] : memref<10x18x128xbf16, #tpu.memory_space<vmem>>, vector<1x16x128xbf16>
    tpu.vector_store %arg12[%c9, %c1_42, %c0_43], %65 {strides = array<i32>} : memref<10x18x128xbf16, #tpu.memory_space<vmem>>, vector<1x16x128xbf16>,
    %cst_44 = arith.constant 0.000000e+00 : bf16
    %67 = vector.broadcast %cst_44 : bf16 to vector<10x1x128xbf16>
    %c0_45 = arith.constant 0 : index
    %c0_46 = arith.constant 0 : index
    %c0_47 = arith.constant 0 : index
    %68 = vector.load %arg12[%c0_45, %c0_46, %c0_47] : memref<10x18x128xbf16, #tpu.memory_space<vmem>>, vector<10x1x128xbf16>
    tpu.vector_store %arg12[%c0_45, %c0_46, %c0_47], %67 {strides = array<i32>} : memref<10x18x128xbf16, #tpu.memory_space<vmem>>, vector<10x1x128xbf16>,
    %c0_48 = arith.constant 0 : index
    %c17 = arith.constant 17 : index
    %c0_49 = arith.constant 0 : index
    %69 = vector.load %arg12[%c0_48, %c17, %c0_49] : memref<10x18x128xbf16, #tpu.memory_space<vmem>>, vector<10x1x128xbf16>
    tpu.vector_store %arg12[%c0_48, %c17, %c0_49], %67 {strides = array<i32>} : memref<10x18x128xbf16, #tpu.memory_space<vmem>>, vector<10x1x128xbf16>,
    %c0_50 = arith.constant 0 : index
    %c0_51 = arith.constant 0 : index
    %c0_52 = arith.constant 0 : index
    %70 = vector.load %arg12[%c0_50, %c0_51, %c0_52] : memref<10x18x128xbf16, #tpu.memory_space<vmem>>, vector<8x16x128xbf16>
    %71 = vector.shape_cast %70 : vector<8x16x128xbf16> to vector<128x128xbf16>
    %c0_53 = arith.constant 0 : index
    %c0_54 = arith.constant 0 : index
    %72 = vector.load %arg13[%c0_53, %c0_54] : memref<128x1152xbf16, #tpu.memory_space<vmem>>, vector<128x128xbf16>
    tpu.vector_store %arg13[%c0_53, %c0_54], %71 {strides = array<i32>} : memref<128x1152xbf16, #tpu.memory_space<vmem>>, vector<128x128xbf16>,
    %c0_55 = arith.constant 0 : index
    %c1_56 = arith.constant 1 : index
    %c0_57 = arith.constant 0 : index
    %73 = vector.load %arg12[%c0_55, %c1_56, %c0_57] : memref<10x18x128xbf16, #tpu.memory_space<vmem>>, vector<8x16x128xbf16>
    %74 = vector.shape_cast %73 : vector<8x16x128xbf16> to vector<128x128xbf16>
    %c0_58 = arith.constant 0 : index
    %c128 = arith.constant 128 : index
    %75 = vector.load %arg13[%c0_58, %c128] : memref<128x1152xbf16, #tpu.memory_space<vmem>>, vector<128x128xbf16>
    tpu.vector_store %arg13[%c0_58, %c128], %74 {strides = array<i32>} : memref<128x1152xbf16, #tpu.memory_space<vmem>>, vector<128x128xbf16>,
    %c0_59 = arith.constant 0 : index
    %c2 = arith.constant 2 : index
    %c0_60 = arith.constant 0 : index
    %76 = vector.load %arg12[%c0_59, %c2, %c0_60] : memref<10x18x128xbf16, #tpu.memory_space<vmem>>, vector<8x16x128xbf16>
    %77 = vector.shape_cast %76 : vector<8x16x128xbf16> to vector<128x128xbf16>
    %c0_61 = arith.constant 0 : index
    %c256 = arith.constant 256 : index
    %78 = vector.load %arg13[%c0_61, %c256] : memref<128x1152xbf16, #tpu.memory_space<vmem>>, vector<128x128xbf16>
    tpu.vector_store %arg13[%c0_61, %c256], %77 {strides = array<i32>} : memref<128x1152xbf16, #tpu.memory_space<vmem>>, vector<128x128xbf16>,
    %c1_62 = arith.constant 1 : index
    %c0_63 = arith.constant 0 : index
    %c0_64 = arith.constant 0 : index
    %79 = vector.load %arg12[%c1_62, %c0_63, %c0_64] : memref<10x18x128xbf16, #tpu.memory_space<vmem>>, vector<8x16x128xbf16>
    %80 = vector.shape_cast %79 : vector<8x16x128xbf16> to vector<128x128xbf16>
    %c0_65 = arith.constant 0 : index
    %c384 = arith.constant 384 : index
    %81 = vector.load %arg13[%c0_65, %c384] : memref<128x1152xbf16, #tpu.memory_space<vmem>>, vector<128x128xbf16>
    tpu.vector_store %arg13[%c0_65, %c384], %80 {strides = array<i32>} : memref<128x1152xbf16, #tpu.memory_space<vmem>>, vector<128x128xbf16>,
    %c1_66 = arith.constant 1 : index
    %c1_67 = arith.constant 1 : index
    %c0_68 = arith.constant 0 : index
    %82 = vector.load %arg12[%c1_66, %c1_67, %c0_68] : memref<10x18x128xbf16, #tpu.memory_space<vmem>>, vector<8x16x128xbf16>
    %83 = vector.shape_cast %82 : vector<8x16x128xbf16> to vector<128x128xbf16>
    %c0_69 = arith.constant 0 : index
    %c512 = arith.constant 512 : index
    %84 = vector.load %arg13[%c0_69, %c512] : memref<128x1152xbf16, #tpu.memory_space<vmem>>, vector<128x128xbf16>
    tpu.vector_store %arg13[%c0_69, %c512], %83 {strides = array<i32>} : memref<128x1152xbf16, #tpu.memory_space<vmem>>, vector<128x128xbf16>,
    %c1_70 = arith.constant 1 : index
    %c2_71 = arith.constant 2 : index
    %c0_72 = arith.constant 0 : index
    %85 = vector.load %arg12[%c1_70, %c2_71, %c0_72] : memref<10x18x128xbf16, #tpu.memory_space<vmem>>, vector<8x16x128xbf16>
    %86 = vector.shape_cast %85 : vector<8x16x128xbf16> to vector<128x128xbf16>
    %c0_73 = arith.constant 0 : index
    %c640 = arith.constant 640 : index
    %87 = vector.load %arg13[%c0_73, %c640] : memref<128x1152xbf16, #tpu.memory_space<vmem>>, vector<128x128xbf16>
    tpu.vector_store %arg13[%c0_73, %c640], %86 {strides = array<i32>} : memref<128x1152xbf16, #tpu.memory_space<vmem>>, vector<128x128xbf16>,
    %c2_74 = arith.constant 2 : index
    %c0_75 = arith.constant 0 : index
    %c0_76 = arith.constant 0 : index
    %88 = vector.load %arg12[%c2_74, %c0_75, %c0_76] : memref<10x18x128xbf16, #tpu.memory_space<vmem>>, vector<8x16x128xbf16>
    %89 = vector.shape_cast %88 : vector<8x16x128xbf16> to vector<128x128xbf16>
    %c0_77 = arith.constant 0 : index
    %c768 = arith.constant 768 : index
    %90 = vector.load %arg13[%c0_77, %c768] : memref<128x1152xbf16, #tpu.memory_space<vmem>>, vector<128x128xbf16>
    tpu.vector_store %arg13[%c0_77, %c768], %89 {strides = array<i32>} : memref<128x1152xbf16, #tpu.memory_space<vmem>>, vector<128x128xbf16>,
    %c2_78 = arith.constant 2 : index
    %c1_79 = arith.constant 1 : index
    %c0_80 = arith.constant 0 : index
    %91 = vector.load %arg12[%c2_78, %c1_79, %c0_80] : memref<10x18x128xbf16, #tpu.memory_space<vmem>>, vector<8x16x128xbf16>
    %92 = vector.shape_cast %91 : vector<8x16x128xbf16> to vector<128x128xbf16>
    %c0_81 = arith.constant 0 : index
    %c896 = arith.constant 896 : index
    %93 = vector.load %arg13[%c0_81, %c896] : memref<128x1152xbf16, #tpu.memory_space<vmem>>, vector<128x128xbf16>
    tpu.vector_store %arg13[%c0_81, %c896], %92 {strides = array<i32>} : memref<128x1152xbf16, #tpu.memory_space<vmem>>, vector<128x128xbf16>,
    %c2_82 = arith.constant 2 : index
    %c2_83 = arith.constant 2 : index
    %c0_84 = arith.constant 0 : index
    %94 = vector.load %arg12[%c2_82, %c2_83, %c0_84] : memref<10x18x128xbf16, #tpu.memory_space<vmem>>, vector<8x16x128xbf16>
    %95 = vector.shape_cast %94 : vector<8x16x128xbf16> to vector<128x128xbf16>
    %c0_85 = arith.constant 0 : index
    %c1024 = arith.constant 1024 : index
    %96 = vector.load %arg13[%c0_85, %c1024] : memref<128x1152xbf16, #tpu.memory_space<vmem>>, vector<128x128xbf16>
    tpu.vector_store %arg13[%c0_85, %c1024], %95 {strides = array<i32>} : memref<128x1152xbf16, #tpu.memory_space<vmem>>, vector<128x128xbf16>,
    %c0_86 = arith.constant 0 : index
    %c0_87 = arith.constant 0 : index
    %97 = vector.load %arg13[%c0_86, %c0_87] : memref<128x1152xbf16, #tpu.memory_space<vmem>>, vector<128x1152xbf16>
    %c0_88 = arith.constant 0 : index
    %c0_89 = arith.constant 0 : index
    %98 = vector.load %arg8[%c0_88, %c0_89] : memref<1152x128xbf16, #tpu.memory_space<vmem>>, vector<1152x128xbf16>
    %cst_90 = arith.constant dense<0.000000e+00> : vector<128x128xf32>
    %99 = tpu.matmul %97, %98, %cst_90 {dimension_numbers = #tpu.dot_dimension_numbers<[1], [0], [0], [1], [0, 0, 1, 1], [], []>} : vector<128x1152xbf16>, vector<1152x128xbf16>, vector<128x128xf32> -> vector<128x128xf32>
    %c0_91 = arith.constant 0 : index
    %c0_92 = arith.constant 0 : index
    %100 = vector.load %arg9[%c0_91, %c0_92] : memref<1x128xf32, #tpu.memory_space<vmem>>, vector<1x128xf32>
    %101 = vector.broadcast %100 : vector<1x128xf32> to vector<128x128xf32>
    %102 = arith.mulf %99, %101 : vector<128x128xf32>
    %c0_93 = arith.constant 0 : index
    %c0_94 = arith.constant 0 : index
    %103 = vector.load %arg10[%c0_93, %c0_94] : memref<1x128xf32, #tpu.memory_space<vmem>>, vector<1x128xf32>
    %104 = vector.broadcast %103 : vector<1x128xf32> to vector<128x128xf32>
    %105 = arith.addf %102, %104 : vector<128x128xf32>
    %cst_95 = arith.constant 0.000000e+00 : f32
    %106 = vector.broadcast %cst_95 : f32 to vector<128x128xf32>
    %107 = arith.cmpf ogt, %105, %106 : vector<128x128xf32>
    %cst_96 = arith.constant 1.000000e-01 : f32
    %108 = vector.broadcast %cst_96 : f32 to vector<128x128xf32>
    %109 = arith.mulf %108, %105 : vector<128x128xf32>
    %110 = arith.select %107, %105, %109 : vector<128x128xi1>, vector<128x128xf32>
    %c0_97 = arith.constant 0 : index
    %c0_98 = arith.constant 0 : index
    %c0_99 = arith.constant 0 : index
    %c0_100 = arith.constant 0 : index
    %111 = vector.load %arg2[%c0_97, %c0_98, %c0_99, %c0_100] : memref<1x8x16x128xf32, #tpu.memory_space<vmem>>, vector<1x8x16x128xf32>
    %112 = vector.shape_cast %111 : vector<1x8x16x128xf32> to vector<128x128xf32>
    %113 = arith.addf %110, %112 : vector<128x128xf32>
    %114 = vector.shape_cast %113 : vector<128x128xf32> to vector<1x8x16x128xf32>
    %c0_101 = arith.constant 0 : index
    %c0_102 = arith.constant 0 : index
    %c0_103 = arith.constant 0 : index
    %c0_104 = arith.constant 0 : index
    %115 = vector.load %arg11[%c0_101, %c0_102, %c0_103, %c0_104] : memref<1x8x16x128xf32, #tpu.memory_space<vmem>>, vector<1x8x16x128xf32>
    tpu.vector_store %arg11[%c0_101, %c0_102, %c0_103, %c0_104], %114 {strides = array<i32>} : memref<1x8x16x128xf32, #tpu.memory_space<vmem>>, vector<1x8x16x128xf32>,
    return
  }
  func.func @transform_0(%arg0: i32, %arg1: i32) -> (i32, i32, i32, i32) {
    %c0_i32 = arith.constant 0 : i32
    %c0_i32_0 = arith.constant 0 : i32
    %c0_i32_1 = arith.constant 0 : i32
    return %arg0, %arg1, %c0_i32, %c0_i32_0 : i32, i32, i32, i32
  }
  func.func @transform_1(%arg0: i32, %arg1: i32) -> (i32, i32, i32, i32) {
    %c8_i32 = arith.constant 8 : i32
    %0 = arith.muli %arg1, %c8_i32 : i32
    %c1_i32 = arith.constant 1 : i32
    %1 = arith.subi %0, %c1_i32 : i32
    %c0_i32 = arith.constant 0 : i32
    %2 = arith.maxsi %1, %c0_i32 : i32
    %c0_i32_0 = arith.constant 0 : i32
    %c0_i32_1 = arith.constant 0 : i32
    %c0_i32_2 = arith.constant 0 : i32
    return %arg0, %2, %c0_i32_0, %c0_i32_1 : i32, i32, i32, i32
  }
  func.func @transform_2(%arg0: i32, %arg1: i32) -> (i32, i32, i32, i32) {
    %c8_i32 = arith.constant 8 : i32
    %0 = arith.muli %arg1, %c8_i32 : i32
    %c8_i32_0 = arith.constant 8 : i32
    %1 = arith.addi %0, %c8_i32_0 : i32
    %c15_i32 = arith.constant 15 : i32
    %2 = arith.minsi %1, %c15_i32 : i32
    %c0_i32 = arith.constant 0 : i32
    %c0_i32_1 = arith.constant 0 : i32
    %c0_i32_2 = arith.constant 0 : i32
    return %arg0, %2, %c0_i32, %c0_i32_1 : i32, i32, i32, i32
  }
  func.func @transform_3(%arg0: i32, %arg1: i32) -> (i32, i32) {
    %c0_i32 = arith.constant 0 : i32
    %c0_i32_0 = arith.constant 0 : i32
    %c0_i32_1 = arith.constant 0 : i32
    return %c0_i32, %c0_i32_0 : i32, i32
  }
  func.func @transform_4(%arg0: i32, %arg1: i32) -> (i32, i32) {
    %c0_i32 = arith.constant 0 : i32
    %c0_i32_0 = arith.constant 0 : i32
    %c0_i32_1 = arith.constant 0 : i32
    return %c0_i32, %c0_i32_0 : i32, i32
  }
  func.func @transform_5(%arg0: i32, %arg1: i32) -> (i32, i32) {
    %c0_i32 = arith.constant 0 : i32
    %c0_i32_0 = arith.constant 0 : i32
    %c0_i32_1 = arith.constant 0 : i32
    return %c0_i32, %c0_i32_0 : i32, i32
  }
  func.func @transform_6(%arg0: i32, %arg1: i32) -> (i32, i32) {
    %c0_i32 = arith.constant 0 : i32
    %c0_i32_0 = arith.constant 0 : i32
    %c0_i32_1 = arith.constant 0 : i32
    return %c0_i32, %c0_i32_0 : i32, i32
  }
  func.func @transform_7(%arg0: i32, %arg1: i32) -> (i32, i32) {
    %c0_i32 = arith.constant 0 : i32
    %c0_i32_0 = arith.constant 0 : i32
    %c0_i32_1 = arith.constant 0 : i32
    return %c0_i32, %c0_i32_0 : i32, i32
  }
  func.func @transform_8(%arg0: i32, %arg1: i32) -> (i32, i32) {
    %c0_i32 = arith.constant 0 : i32
    %c0_i32_0 = arith.constant 0 : i32
    %c0_i32_1 = arith.constant 0 : i32
    return %c0_i32, %c0_i32_0 : i32, i32
  }
  func.func @transform_9(%arg0: i32, %arg1: i32) -> (i32, i32, i32, i32) {
    %c0_i32 = arith.constant 0 : i32
    %c0_i32_0 = arith.constant 0 : i32
    %c0_i32_1 = arith.constant 0 : i32
    return %arg0, %arg1, %c0_i32, %c0_i32_0 : i32, i32, i32, i32
  }
}

</mosaic_0001>

<llo_original>
// kernel: tpu_custom_call.1
$region0: #{tpu_custom_call.1}
  #allocation0 [shape = 'u32[]', space=smem, size = 0x4, offset = 0x4, fixed_abs, tag = 'smem constant byte address 0x4 - core index']
  #allocation1 [shape = 'u32[72,128]{1,0:T(1,128)}', space=vmem, size = 0x9000, scoped, tag = 'internal scratch']
  #allocation2 [shape = 'bf16[10,18,128]{2,1,0:T(8,128)(2,1)}', space=vmem, size = 0xf000, scoped, tag = 'scratch operand']
  #allocation3 [shape = 'bf16[128,1152]{1,0:T(8,128)(2,1)}', space=vmem, size = 0x48000, scoped, tag = 'scratch operand']
  %s0 = inlined_call_operand.hbm [shape: f32[2,16,16,128], index: 0, kind: input, shape index: {}]
  %s1 = inlined_call_operand.hbm [shape: f32[2,16,16,128], index: 1, kind: input, shape index: {}]
  %s2 = inlined_call_operand.hbm [shape: f32[2,16,16,128], index: 2, kind: input, shape index: {}]
  %s3 = inlined_call_operand.hbm [shape: bf16[128,128], index: 3, kind: input, shape index: {}]
  %s4 = inlined_call_operand.vmem [shape: f32[1,128], index: 4, kind: input, shape index: {}]
  %s5 = inlined_call_operand.vmem [shape: f32[1,128], index: 5, kind: input, shape index: {}]
  %s6 = inlined_call_operand.hbm [shape: bf16[1152,128], index: 6, kind: input, shape index: {}]
  %s7 = inlined_call_operand.vmem [shape: f32[1,128], index: 7, kind: input, shape index: {}]
  %s8 = inlined_call_operand.vmem [shape: f32[1,128], index: 8, kind: input, shape index: {}]
  %s9 = inlined_call_operand.hbm [shape: f32[2,16,16,128], index: 9, kind: output, shape index: {}]
  %s10 = sld [smem:[#allocation0]]
  $region89: #{tpu_custom_call.1} parent=0
    _
  %s12 = ssub.s32 1, %s10
  %s13 = scalar_select 0, %s12, %s10
  $region1: #{tpu_custom_call.1} parent=0
    #allocation4 [shape = 'u8[131072]{0}', space=vmem, size = 0x20000, scoped, tag = 'input window, operand 0']
    #allocation5 [shape = 's32[2]{0}', space=sflag, size = 0x8, scoped, tag = 'scoped memory for tpu_custom_call.1']
    #allocation6 [shape = 's32[2]{0}', space=sflag, size = 0x8, scoped, tag = 'scoped memory for tpu_custom_call.1']
    #allocation7 [shape = 'u8[16384]{0}', space=vmem, size = 0x4000, scoped, tag = 'input window, operand 1']
    #allocation8 [shape = 's32[2]{0}', space=sflag, size = 0x8, scoped, tag = 'scoped memory for tpu_custom_call.1']
    #allocation9 [shape = 'u8[16384]{0}', space=vmem, size = 0x4000, scoped, tag = 'input window, operand 2']
    #allocation10 [shape = 'u8[32768]{0}', space=vmem, size = 0x8000, scoped, tag = 'input window, operand 3, single buffered']
    #allocation11 [shape = 's32[1]{0}', space=sflag, size = 0x4, scoped, tag = 'scoped memory for tpu_custom_call.1']
    #allocation12 [shape = 'u8[294912]{0}', space=vmem, size = 0x48000, scoped, tag = 'input window, operand 6, single buffered']
    #allocation13 [shape = 'u8[131072]{0}', space=vmem, size = 0x20000, scoped, tag = 'output window, operand 0']
    %14 = vsyncpa [#allocation5], 0
    %s15 = scalar_lea.sflag [#allocation5], 1
    %16 = vsyncpa %s15, 0
    %17 = vsyncpa [#allocation8], 0
    %s18 = scalar_lea.sflag [#allocation8], 1
    %19 = vsyncpa %s18, 0
    %20 = vsyncpa [#allocation11], 0
    %21 = vsyncpa [#allocation6], 0
    %s22 = scalar_lea.sflag [#allocation6], 1
    %23 = vsyncpa %s22, 0
    loop: start=0, step=1, limit=6
    $region2: #{tpu_custom_call.1} parent=1 // loop_pre_header
      _
    $region3: #{tpu_custom_call.1} parent=1 // loop_header
      %s25 = sphi 0, %s29
      %p26 = scmp.ge.s32.totalorder %s25, 6
      %s32 = sphi 0, %s44
      %s33 = sphi 0, %s40
      %s34 = sphi 0, %s32
      %s35 = sphi 0, %s33
      %s36 = sphi 0, %s34
      %s37 = sphi 0, %s35
      %s49 = sphi 0, %s51
      %s52 = sphi 0, %s49
      %s53 = sphi 0, %s52
      %s69 = sphi 0, %s53
      %s85 = sphi 0, %s87
      %s88 = sphi 0, %s85
      %s89 = sphi 0, %s88
      %s105 = sphi 0, %s89
      %s121 = sphi 0, %s123
      %s124 = sphi 0, %s121
      %s125 = sphi 0, %s124
      %s141 = sphi 0, %s125
      %s145 = sphi 0, %s145
      %s147 = sphi 0, %s145
      %s148 = sphi 0, %s147
      %s162 = sphi 0, %s148
      %s166 = sphi 0, %s166
      %s168 = sphi 0, %s166
      %s169 = sphi 0, %s168
      %s183 = sphi 0, %s169
      %s187 = sphi 0, %s187
      %s189 = sphi 0, %s187
      %s190 = sphi 0, %s189
      %s204 = sphi 0, %s190
      %s208 = sphi 0, %s208
      %s210 = sphi 0, %s208
      %s211 = sphi 0, %s210
      %s225 = sphi 0, %s211
      %s229 = sphi 0, %s229
      %s231 = sphi 0, %s229
      %s232 = sphi 0, %s231
      %s246 = sphi 0, %s232
      %s250 = sphi 0, %s250
      %s252 = sphi 0, %s250
      %s253 = sphi 0, %s252
      %s267 = sphi 0, %s253
      %s275 = sphi 0, %s277
      %s278 = sphi 0, %s275
      %s279 = sphi 0, %s278
      %s295 = sphi 0, %s279
    $region4: #{tpu_custom_call.1} parent=1 // loop_header_branch
      %28 = sbr.rel (%p26) target = $region8
    $region5: #{tpu_custom_call.1} parent=1 // loop_body
      %s30 = ssub.s32 %s25, 1
      %s31 = ssub.s32 %s25, 2
      %s38 = sadd.s32 1, %s33
      %p39 = scmp.ge.s32.totalorder %s38, 2
      %s40 = scalar_select %p39, 0, %s38
      %s41 = sadd.s32 1, %s32
      %s42 = scalar_select %p39, %s41, %s32
      %p43 = scmp.ge.s32.totalorder %s42, 2
      %s44 = scalar_select %p43, 0, %s42
      %s45 = ssub.s32 %s32, %s44
      %s46 = ssub.s32 %s33, %s40
      %s47 = sor.u32 %s45, %s46
      %p48 = scmp.eq.s32.totalorder %s47, 0
      %s50 = sadd.s32 %s49, 1
      %s51 = scalar_select %p48, %s49, %s50
      %p54 = pneg %p48
      %p55 = scmp.eq.s32.totalorder %s25, 3
      %p56 = por %p54, %p55
      %p57 = scmp.ne.s32.totalorder %s49, %s52
      %p58 = scmp.eq.s32.totalorder %s25, 0
      %p59 = por %p57, %p58
      %p60 = scmp.ne.s32.totalorder %s49, %s52
      %p61 = scmp.eq.s32.totalorder %s30, 3
      %p62 = por %p60, %p61
      %p63 = scmp.ne.s32.totalorder %s52, %s53
      %p64 = scmp.eq.s32.totalorder %s30, 0
      %p65 = por %p63, %p64
      %p66 = scmp.ne.s32.totalorder %s52, %s53
      %p67 = scmp.eq.s32.totalorder %s31, 3
      %p68 = por %p66, %p67
      %p70 = scmp.ne.s32.totalorder %s53, %s69
      %p71 = scmp.eq.s32.totalorder %s31, 0
      %p72 = por %p70, %p71
      %s73 = smul.u32 %s33, 8
      %s74 = ssub.s32 %s73, 1
      %p75 = scmp.gt.s32.totalorder %s74, 0
      %s76 = scalar_select %p75, %s74, 0
      %s77 = smul.u32 %s40, 8
      %s78 = ssub.s32 %s77, 1
      %p79 = scmp.gt.s32.totalorder %s78, 0
      %s80 = scalar_select %p79, %s78, 0
      %s81 = ssub.s32 %s32, %s44
      %s82 = ssub.s32 %s76, %s80
      %s83 = sor.u32 %s81, %s82
      %p84 = scmp.eq.s32.totalorder %s83, 0
      %s86 = sadd.s32 %s85, 1
      %s87 = scalar_select %p84, %s85, %s86
      %p90 = pneg %p84
      %p91 = scmp.eq.s32.totalorder %s25, 3
      %p92 = por %p90, %p91
      %p93 = scmp.ne.s32.totalorder %s85, %s88
      %p94 = scmp.eq.s32.totalorder %s25, 0
      %p95 = por %p93, %p94
      %p96 = scmp.ne.s32.totalorder %s85, %s88
      %p97 = scmp.eq.s32.totalorder %s30, 3
      %p98 = por %p96, %p97
      %p99 = scmp.ne.s32.totalorder %s88, %s89
      %p100 = scmp.eq.s32.totalorder %s30, 0
      %p101 = por %p99, %p100
      %p102 = scmp.ne.s32.totalorder %s88, %s89
      %p103 = scmp.eq.s32.totalorder %s31, 3
      %p104 = por %p102, %p103
      %p106 = scmp.ne.s32.totalorder %s89, %s105
      %p107 = scmp.eq.s32.totalorder %s31, 0
      %p108 = por %p106, %p107
      %s109 = smul.u32 %s33, 8
      %s110 = sadd.s32 %s109, 8
      %p111 = scmp.lt.s32.totalorder %s110, 15
      %s112 = scalar_select %p111, %s110, 15
      %s113 = smul.u32 %s40, 8
      %s114 = sadd.s32 %s113, 8
      %p115 = scmp.lt.s32.totalorder %s114, 15
      %s116 = scalar_select %p115, %s114, 15
      %s117 = ssub.s32 %s32, %s44
      %s118 = ssub.s32 %s112, %s116
      %s119 = sor.u32 %s117, %s118
      %p120 = scmp.eq.s32.totalorder %s119, 0
      %s122 = sadd.s32 %s121, 1
      %s123 = scalar_select %p120, %s121, %s122
      %p126 = pneg %p120
      %p127 = scmp.eq.s32.totalorder %s25, 3
      %p128 = por %p126, %p127
      %p129 = scmp.ne.s32.totalorder %s121, %s124
      %p130 = scmp.eq.s32.totalorder %s25, 0
      %p131 = por %p129, %p130
      %p132 = scmp.ne.s32.totalorder %s121, %s124
      %p133 = scmp.eq.s32.totalorder %s30, 3
      %p134 = por %p132, %p133
      %p135 = scmp.ne.s32.totalorder %s124, %s125
      %p136 = scmp.eq.s32.totalorder %s30, 0
      %p137 = por %p135, %p136
      %p138 = scmp.ne.s32.totalorder %s124, %s125
      %p139 = scmp.eq.s32.totalorder %s31, 3
      %p140 = por %p138, %p139
      %p142 = scmp.ne.s32.totalorder %s125, %s141
      %p143 = scmp.eq.s32.totalorder %s31, 0
      %p144 = por %p142, %p143
      %s146 = sadd.s32 %s145, 1
      %p149 = scmp.eq.s32.totalorder %s25, 3
      %p150 = scmp.ne.s32.totalorder %s145, %s147
      %p151 = scmp.eq.s32.totalorder %s25, 0
      %p152 = por %p150, %p151
      %p153 = scmp.ne.s32.totalorder %s145, %s147
      %p154 = scmp.eq.s32.totalorder %s30, 3
      %p155 = por %p153, %p154
      %p156 = scmp.ne.s32.totalorder %s147, %s148
      %p157 = scmp.eq.s32.totalorder %s30, 0
      %p158 = por %p156, %p157
      %p159 = scmp.ne.s32.totalorder %s147, %s148
      %p160 = scmp.eq.s32.totalorder %s31, 3
      %p161 = por %p159, %p160
      %p163 = scmp.ne.s32.totalorder %s148, %s162
      %p164 = scmp.eq.s32.totalorder %s31, 0
      %p165 = por %p163, %p164
      %s167 = sadd.s32 %s166, 1
      %p170 = scmp.eq.s32.totalorder %s25, 3
      %p171 = scmp.ne.s32.totalorder %s166, %s168
      %p172 = scmp.eq.s32.totalorder %s25, 0
      %p173 = por %p171, %p172
      %p174 = scmp.ne.s32.totalorder %s166, %s168
      %p175 = scmp.eq.s32.totalorder %s30, 3
      %p176 = por %p174, %p175
      %p177 = scmp.ne.s32.totalorder %s168, %s169
      %p178 = scmp.eq.s32.totalorder %s30, 0
      %p179 = por %p177, %p178
      %p180 = scmp.ne.s32.totalorder %s168, %s169
      %p181 = scmp.eq.s32.totalorder %s31, 3
      %p182 = por %p180, %p181
      %p184 = scmp.ne.s32.totalorder %s169, %s183
      %p185 = scmp.eq.s32.totalorder %s31, 0
      %p186 = por %p184, %p185
      %s188 = sadd.s32 %s187, 1
      %p191 = scmp.eq.s32.totalorder %s25, 3
      %p192 = scmp.ne.s32.totalorder %s187, %s189
      %p193 = scmp.eq.s32.totalorder %s25, 0
      %p194 = por %p192, %p193
      %p195 = scmp.ne.s32.totalorder %s187, %s189
      %p196 = scmp.eq.s32.totalorder %s30, 3
      %p197 = por %p195, %p196
      %p198 = scmp.ne.s32.totalorder %s189, %s190
      %p199 = scmp.eq.s32.totalorder %s30, 0
      %p200 = por %p198, %p199
      %p201 = scmp.ne.s32.totalorder %s189, %s190
      %p202 = scmp.eq.s32.totalorder %s31, 3
      %p203 = por %p201, %p202
      %p205 = scmp.ne.s32.totalorder %s190, %s204
      %p206 = scmp.eq.s32.totalorder %s31, 0
      %p207 = por %p205, %p206
      %s209 = sadd.s32 %s208, 1
      %p212 = scmp.eq.s32.totalorder %s25, 3
      %p213 = scmp.ne.s32.totalorder %s208, %s210
      %p214 = scmp.eq.s32.totalorder %s25, 0
      %p215 = por %p213, %p214
      %p216 = scmp.ne.s32.totalorder %s208, %s210
      %p217 = scmp.eq.s32.totalorder %s30, 3
      %p218 = por %p216, %p217
      %p219 = scmp.ne.s32.totalorder %s210, %s211
      %p220 = scmp.eq.s32.totalorder %s30, 0
      %p221 = por %p219, %p220
      %p222 = scmp.ne.s32.totalorder %s210, %s211
      %p223 = scmp.eq.s32.totalorder %s31, 3
      %p224 = por %p222, %p223
      %p226 = scmp.ne.s32.totalorder %s211, %s225
      %p227 = scmp.eq.s32.totalorder %s31, 0
      %p228 = por %p226, %p227
      %s230 = sadd.s32 %s229, 1
      %p233 = scmp.eq.s32.totalorder %s25, 3
      %p234 = scmp.ne.s32.totalorder %s229, %s231
      %p235 = scmp.eq.s32.totalorder %s25, 0
      %p236 = por %p234, %p235
      %p237 = scmp.ne.s32.totalorder %s229, %s231
      %p238 = scmp.eq.s32.totalorder %s30, 3
      %p239 = por %p237, %p238
      %p240 = scmp.ne.s32.totalorder %s231, %s232
      %p241 = scmp.eq.s32.totalorder %s30, 0
      %p242 = por %p240, %p241
      %p243 = scmp.ne.s32.totalorder %s231, %s232
      %p244 = scmp.eq.s32.totalorder %s31, 3
      %p245 = por %p243, %p244
      %p247 = scmp.ne.s32.totalorder %s232, %s246
      %p248 = scmp.eq.s32.totalorder %s31, 0
      %p249 = por %p247, %p248
      %s251 = sadd.s32 %s250, 1
      %p254 = scmp.eq.s32.totalorder %s25, 3
      %p255 = scmp.ne.s32.totalorder %s250, %s252
      %p256 = scmp.eq.s32.totalorder %s25, 0
      %p257 = por %p255, %p256
      %p258 = scmp.ne.s32.totalorder %s250, %s252
      %p259 = scmp.eq.s32.totalorder %s30, 3
      %p260 = por %p258, %p259
      %p261 = scmp.ne.s32.totalorder %s252, %s253
      %p262 = scmp.eq.s32.totalorder %s30, 0
      %p263 = por %p261, %p262
      %p264 = scmp.ne.s32.totalorder %s252, %s253
      %p265 = scmp.eq.s32.totalorder %s31, 3
      %p266 = por %p264, %p265
      %p268 = scmp.ne.s32.totalorder %s253, %s267
      %p269 = scmp.eq.s32.totalorder %s31, 0
      %p270 = por %p268, %p269
      %s271 = ssub.s32 %s32, %s44
      %s272 = ssub.s32 %s33, %s40
      %s273 = sor.u32 %s271, %s272
      %p274 = scmp.eq.s32.totalorder %s273, 0
      %s276 = sadd.s32 %s275, 1
      %s277 = scalar_select %p274, %s275, %s276
      %p280 = pneg %p274
      %p281 = scmp.eq.s32.totalorder %s25, 3
      %p282 = por %p280, %p281
      %p283 = scmp.ne.s32.totalorder %s275, %s278
      %p284 = scmp.eq.s32.totalorder %s25, 0
      %p285 = por %p283, %p284
      %p286 = scmp.ne.s32.totalorder %s275, %s278
      %p287 = scmp.eq.s32.totalorder %s30, 3
      %p288 = por %p286, %p287
      %p289 = scmp.ne.s32.totalorder %s278, %s279
      %p290 = scmp.eq.s32.totalorder %s30, 0
      %p291 = por %p289, %p290
      %p292 = scmp.ne.s32.totalorder %s278, %s279
      %p293 = scmp.eq.s32.totalorder %s31, 3
      %p294 = por %p292, %p293
      %p296 = scmp.ne.s32.totalorder %s279, %s295
      %p297 = scmp.eq.s32.totalorder %s31, 0
      %p298 = por %p296, %p297
      %p299 = scmp.le.s32.totalorder 1, %s25
      %p300 = scmp.lt.s32.totalorder %s25, 5
      %p301 = pnand %p299, %p300
      %p302 = pneg %p301
      // Predicated region
      $region9: #{tpu_custom_call.1} parent=5 // pred_check
        _
      $region10: #{tpu_custom_call.1} parent=5 // pred_check_branch
        %304 = sbr.rel (%p301) target = $region12
      $region11: #{tpu_custom_call.1} parent=5 // pred_region
        %s305 = ssub.s32 %s25, 1
        // Predicated region
        $region13: #{tpu_custom_call.1} parent=11 // pred_check
          %p306 = pneg %p158
        $region14: #{tpu_custom_call.1} parent=11 // pred_check_branch
          %308 = sbr.rel (%p306) target = $region16
        $region15: #{tpu_custom_call.1} parent=11 // pred_region
          %310 = vsyncadd [#allocation11], 0
          %s311 = sshll.u32 %s3, 4
          %s312 = int_to_ptr.hbm [resolvable:$true] %s311
          %s313 = sshll.u32 [#allocation10], 4
          %s314 = int_to_ptr.vmem [resolvable:$true] %s313
          %319 = dma.hbm_to_vmem [thread:$0]  %s312, 1024, %s314, [#allocation11], 64, 64, 4
        $region16: #{tpu_custom_call.1} parent=11 // pred_fallthru
          _
        // Predicated region
        $region17: #{tpu_custom_call.1} parent=11 // pred_check
          %p320 = pneg %p179
        $region18: #{tpu_custom_call.1} parent=11 // pred_check_branch
          %322 = sbr.rel (%p320) target = $region20
        $region19: #{tpu_custom_call.1} parent=11 // pred_region
          _
        $region20: #{tpu_custom_call.1} parent=11 // pred_fallthru
          _
        // Predicated region
        $region21: #{tpu_custom_call.1} parent=11 // pred_check
          %p323 = pneg %p200
        $region22: #{tpu_custom_call.1} parent=11 // pred_check_branch
          %325 = sbr.rel (%p323) target = $region24
        $region23: #{tpu_custom_call.1} parent=11 // pred_region
          _
        $region24: #{tpu_custom_call.1} parent=11 // pred_fallthru
          _
        // Predicated region
        $region25: #{tpu_custom_call.1} parent=11 // pred_check
          %p326 = pneg %p221
        $region26: #{tpu_custom_call.1} parent=11 // pred_check_branch
          %328 = sbr.rel (%p326) target = $region28
        $region27: #{tpu_custom_call.1} parent=11 // pred_region
          %330 = vsyncadd [#allocation11], 0
          %s331 = sshll.u32 %s6, 4
          %s332 = int_to_ptr.hbm [resolvable:$true] %s331
          %s333 = sshll.u32 [#allocation12], 4
          %s334 = int_to_ptr.vmem [resolvable:$true] %s333
          %339 = dma.hbm_to_vmem [thread:$0]  %s332, 9216, %s334, [#allocation11], 64, 64, 4
        $region28: #{tpu_custom_call.1} parent=11 // pred_fallthru
          _
        // Predicated region
        $region29: #{tpu_custom_call.1} parent=11 // pred_check
          %p340 = pneg %p242
        $region30: #{tpu_custom_call.1} parent=11 // pred_check_branch
          %342 = sbr.rel (%p340) target = $region32
        $region31: #{tpu_custom_call.1} parent=11 // pred_region
          _
        $region32: #{tpu_custom_call.1} parent=11 // pred_fallthru
          _
        // Predicated region
        $region33: #{tpu_custom_call.1} parent=11 // pred_check
          %p343 = pneg %p263
        $region34: #{tpu_custom_call.1} parent=11 // pred_check_branch
          %345 = sbr.rel (%p343) target = $region36
        $region35: #{tpu_custom_call.1} parent=11 // pred_region
          _
        $region36: #{tpu_custom_call.1} parent=11 // pred_fallthru
          _
      $region12: #{tpu_custom_call.1} parent=5 // pred_fallthru
        _
      %p346 = scmp.lt.s32.totalorder %s25, 4
      // Predicated region
      $region37: #{tpu_custom_call.1} parent=5 // pred_check
        %p347 = pneg %p346
      $region38: #{tpu_custom_call.1} parent=5 // pred_check_branch
        %349 = sbr.rel (%p347) target = $region40
      $region39: #{tpu_custom_call.1} parent=5 // pred_region
        // Predicated region
        $region41: #{tpu_custom_call.1} parent=39 // pred_check
          %p350 = pneg %p59
        $region42: #{tpu_custom_call.1} parent=39 // pred_check_branch
          %352 = sbr.rel (%p350) target = $region44
        $region43: #{tpu_custom_call.1} parent=39 // pred_region
          %s353 = sand.u32 %s49, 1
          %s354 = scalar_lea.sflag [#allocation5], %s353
          %s355 = sand.u32 %s49, 1
          %s356 = smul.addr %s355, 128
          %s357 = scalar_lea.vmem [#allocation4], %s356
          %s358 = smul.u32 8, %s33
          %360 = vsyncadd %s354, 0
          %s361 = smul.addr %s358, 2
          %s362 = smul.addr %s32, 32
          %s363 = sadd.s32 %s361, %s362
          %s364 = smul.addr %s363, 8
          %s365 = scalar_lea.hbm %s0, %s364
          %s366 = sshll.u32 %s365, 4
          %s367 = int_to_ptr.hbm [resolvable:$true] %s366
          %s368 = sshll.u32 %s357, 4
          %s369 = int_to_ptr.vmem [resolvable:$true] %s368
          %374 = dma.hbm_to_vmem [thread:$0]  %s367, 2048, %s369, %s354, 128, 128, 8
        $region44: #{tpu_custom_call.1} parent=39 // pred_fallthru
          _
        // Predicated region
        $region45: #{tpu_custom_call.1} parent=39 // pred_check
          %p375 = pneg %p95
        $region46: #{tpu_custom_call.1} parent=39 // pred_check_branch
          %377 = sbr.rel (%p375) target = $region48
        $region47: #{tpu_custom_call.1} parent=39 // pred_region
          %s378 = sand.u32 %s25, 1
          %s379 = scalar_lea.sflag [#allocation8], %s378
          %s380 = sand.u32 %s85, 1
          %s381 = smul.addr %s380, 16
          %s382 = scalar_lea.vmem [#allocation7], %s381
          %s383 = smul.u32 %s33, 8
          %s384 = ssub.s32 %s383, 1
          %p385 = scmp.gt.s32.totalorder %s384, 0
          %s386 = scalar_select %p385, %s384, 0
          %388 = vsyncadd %s379, 0
          %s389 = smul.addr %s386, 2
          %s390 = smul.addr %s32, 32
          %s391 = sadd.s32 %s389, %s390
          %s392 = smul.addr %s391, 8
          %s393 = scalar_lea.hbm %s1, %s392
          %s394 = sshll.u32 %s393, 4
          %s395 = int_to_ptr.hbm [resolvable:$true] %s394
          %s396 = sshll.u32 %s382, 4
          %s397 = int_to_ptr.vmem [resolvable:$true] %s396
          %402 = dma.hbm_to_vmem [thread:$0]  %s395, 256, %s397, %s379, 128, 128, 8
        $region48: #{tpu_custom_call.1} parent=39 // pred_fallthru
          _
        // Predicated region
        $region49: #{tpu_custom_call.1} parent=39 // pred_check
          %p403 = pneg %p131
        $region50: #{tpu_custom_call.1} parent=39 // pred_check_branch
          %405 = sbr.rel (%p403) target = $region52
        $region51: #{tpu_custom_call.1} parent=39 // pred_region
          %s406 = sand.u32 %s25, 1
          %s407 = scalar_lea.sflag [#allocation8], %s406
          %s408 = sand.u32 %s121, 1
          %s409 = smul.addr %s408, 16
          %s410 = scalar_lea.vmem [#allocation9], %s409
          %s411 = smul.u32 %s33, 8
          %s412 = sadd.s32 %s411, 8
          %p413 = scmp.lt.s32.totalorder %s412, 15
          %s414 = scalar_select %p413, %s412, 15
          %416 = vsyncadd %s407, 0
          %s417 = smul.addr %s414, 2
          %s418 = smul.addr %s32, 32
          %s419 = sadd.s32 %s417, %s418
          %s420 = smul.addr %s419, 8
          %s421 = scalar_lea.hbm %s2, %s420
          %s422 = sshll.u32 %s421, 4
          %s423 = int_to_ptr.hbm [resolvable:$true] %s422
          %s424 = sshll.u32 %s410, 4
          %s425 = int_to_ptr.vmem [resolvable:$true] %s424
          %430 = dma.hbm_to_vmem [thread:$0]  %s423, 256, %s425, %s407, 128, 128, 8
        $region52: #{tpu_custom_call.1} parent=39 // pred_fallthru
          _
      $region40: #{tpu_custom_call.1} parent=5 // pred_fallthru
        _
      %p431 = scmp.le.s32.totalorder 1, %s25
      %p432 = scmp.lt.s32.totalorder %s25, 5
      %p433 = pnand %p431, %p432
      %p434 = pneg %p433
      // Predicated region
      $region53: #{tpu_custom_call.1} parent=5 // pred_check
        _
      $region54: #{tpu_custom_call.1} parent=5 // pred_check_branch
        %436 = sbr.rel (%p433) target = $region56
      $region55: #{tpu_custom_call.1} parent=5 // pred_region
        %s437 = ssub.s32 %s25, 1
        %s438 = sand.u32 %s52, 1
        %s439 = scalar_lea.sflag [#allocation5], %s438
        %s440 = sand.u32 %s52, 1
        %s441 = smul.addr %s440, 128
        %s442 = scalar_lea.vmem [#allocation4], %s441
        // Predicated region
        $region57: #{tpu_custom_call.1} parent=55 // pred_check
          %p443 = pneg %p65
        $region58: #{tpu_custom_call.1} parent=55 // pred_check_branch
          %445 = sbr.rel (%p443) target = $region60
        $region59: #{tpu_custom_call.1} parent=55 // pred_region
          %447 = dma.done %s439, 2048
        $region60: #{tpu_custom_call.1} parent=55 // pred_fallthru
          _
        %s448 = sand.u32 %s30, 1
        %s449 = scalar_lea.sflag [#allocation8], %s448
        %s450 = sand.u32 %s88, 1
        %s451 = smul.addr %s450, 16
        %s452 = scalar_lea.vmem [#allocation7], %s451
        // Predicated region
        $region61: #{tpu_custom_call.1} parent=55 // pred_check
          %p453 = pneg %p101
        $region62: #{tpu_custom_call.1} parent=55 // pred_check_branch
          %455 = sbr.rel (%p453) target = $region64
        $region63: #{tpu_custom_call.1} parent=55 // pred_region
          %457 = dma.done %s449, 256
        $region64: #{tpu_custom_call.1} parent=55 // pred_fallthru
          _
        %s458 = sand.u32 %s30, 1
        %s459 = scalar_lea.sflag [#allocation8], %s458
        %s460 = sand.u32 %s124, 1
        %s461 = smul.addr %s460, 16
        %s462 = scalar_lea.vmem [#allocation9], %s461
        // Predicated region
        $region65: #{tpu_custom_call.1} parent=55 // pred_check
          %p463 = pneg %p137
        $region66: #{tpu_custom_call.1} parent=55 // pred_check_branch
          %465 = sbr.rel (%p463) target = $region68
        $region67: #{tpu_custom_call.1} parent=55 // pred_region
          %467 = dma.done %s459, 256
        $region68: #{tpu_custom_call.1} parent=55 // pred_fallthru
          _
        // Predicated region
        $region69: #{tpu_custom_call.1} parent=55 // pred_check
          %p468 = pneg %p158
        $region70: #{tpu_custom_call.1} parent=55 // pred_check_branch
          %470 = sbr.rel (%p468) target = $region72
        $region71: #{tpu_custom_call.1} parent=55 // pred_region
          %472 = dma.done [#allocation11], 1024
        $region72: #{tpu_custom_call.1} parent=55 // pred_fallthru
          _
        // Predicated region
        $region73: #{tpu_custom_call.1} parent=55 // pred_check
          %p473 = pneg %p221
        $region74: #{tpu_custom_call.1} parent=55 // pred_check_branch
          %475 = sbr.rel (%p473) target = $region76
        $region75: #{tpu_custom_call.1} parent=55 // pred_region
          %477 = dma.done [#allocation11], 9216
        $region76: #{tpu_custom_call.1} parent=55 // pred_fallthru
          _
        %s478 = sand.u32 %s52, 1
        %s479 = scalar_lea.sflag [#allocation5], %s478
        %s480 = sand.u32 %s52, 1
        %s481 = smul.addr %s480, 128
        %s482 = scalar_lea.vmem [#allocation4], %s481
        %p483 = pneg %p65
        %p484 = pneg %p62
        %s485 = sand.u32 %s30, 1
        %s486 = scalar_lea.sflag [#allocation8], %s485
        %s487 = sand.u32 %s88, 1
        %s488 = smul.addr %s487, 16
        %s489 = scalar_lea.vmem [#allocation7], %s488
        %p490 = pneg %p101
        %p491 = pneg %p98
        %s492 = sand.u32 %s30, 1
        %s493 = scalar_lea.sflag [#allocation8], %s492
        %s494 = sand.u32 %s124, 1
        %s495 = smul.addr %s494, 16
        %s496 = scalar_lea.vmem [#allocation9], %s495
        %p497 = pneg %p137
        %p498 = pneg %p134
        %p499 = pneg %p158
        %p500 = pneg %p155
        %p501 = pneg %p179
        %p502 = pneg %p176
        %p503 = pneg %p200
        %p504 = pneg %p197
        %p505 = pneg %p221
        %p506 = pneg %p218
        %p507 = pneg %p242
        %p508 = pneg %p239
        %p509 = pneg %p263
        %p510 = pneg %p260
        %p511 = pneg %p291
        %p512 = pneg %p288
        %s513 = sand.u32 %s278, 1
        %s514 = scalar_lea.sflag [#allocation6], %s513
        %s515 = sand.u32 %s278, 1
        %s516 = smul.addr %s515, 128
        %s517 = scalar_lea.vmem [#allocation13], %s516
        %s518 = smul.u32 8, %s35
        %s519 = smul.u32 %s35, 8
        %s520 = ssub.s32 %s519, 1
        %p521 = scmp.gt.s32.totalorder %s520, 0
        %s522 = scalar_select %p521, %s520, 0
        %s523 = smul.u32 %s35, 8
        %s524 = sadd.s32 %s523, 8
        %p525 = scmp.lt.s32.totalorder %s524, 15
        %s526 = scalar_select %p525, %s524, 15
        %s527 = smul.u32 8, %s35
        %v529 = vld [vmem:[%s442] sm:$0xff]
        %v530 = vld [vmem:[%s442 + $0x8] sm:$0xff]
        %v531 = vld [vmem:[%s442 + $0x10] sm:$0xff]
        %v532 = vld [vmem:[%s442 + $0x18] sm:$0xff]
        %v533 = vld [vmem:[%s442 + $0x20] sm:$0xff]
        %v534 = vld [vmem:[%s442 + $0x28] sm:$0xff]
        %v535 = vld [vmem:[%s442 + $0x30] sm:$0xff]
        %v536 = vld [vmem:[%s442 + $0x38] sm:$0xff]
        %v537 = vld [vmem:[%s442 + $0x40] sm:$0xff]
        %v538 = vld [vmem:[%s442 + $0x48] sm:$0xff]
        %v539 = vld [vmem:[%s442 + $0x50] sm:$0xff]
        %v540 = vld [vmem:[%s442 + $0x58] sm:$0xff]
        %v541 = vld [vmem:[%s442 + $0x60] sm:$0xff]
        %v542 = vld [vmem:[%s442 + $0x68] sm:$0xff]
        %v543 = vld [vmem:[%s442 + $0x70] sm:$0xff]
        %v544 = vld [vmem:[%s442 + $0x78] sm:$0xff]
        %v545 = vpack.c.bf16 %v530, %v529
        %v546 = vpack.c.bf16 %v532, %v531
        %v547 = vpack.c.bf16 %v534, %v533
        %v548 = vpack.c.bf16 %v536, %v535
        %v549 = vpack.c.bf16 %v538, %v537
        %v550 = vpack.c.bf16 %v540, %v539
        %v551 = vpack.c.bf16 %v542, %v541
        %v552 = vpack.c.bf16 %v544, %v543
        %v553 = vld [vmem:[#allocation10] sm:$0xf]
        %v554 = vld [vmem:[#allocation10 + $0x4] sm:$0xf]
        %v555 = vld [vmem:[#allocation10 + $0x8] sm:$0xf]
        %v556 = vld [vmem:[#allocation10 + $0xc] sm:$0xf]
        %v557 = vld [vmem:[#allocation10 + $0x10] sm:$0xf]
        %v558 = vld [vmem:[#allocation10 + $0x14] sm:$0xf]
        %v559 = vld [vmem:[#allocation10 + $0x18] sm:$0xf]
        %v560 = vld [vmem:[#allocation10 + $0x1c] sm:$0xf]
        %v561 = vld [vmem:[#allocation10 + $0x20] sm:$0xf]
        %v562 = vld [vmem:[#allocation10 + $0x24] sm:$0xf]
        %v563 = vld [vmem:[#allocation10 + $0x28] sm:$0xf]
        %v564 = vld [vmem:[#allocation10 + $0x2c] sm:$0xf]
        %v565 = vld [vmem:[#allocation10 + $0x30] sm:$0xf]
        %v566 = vld [vmem:[#allocation10 + $0x34] sm:$0xf]
        %v567 = vld [vmem:[#allocation10 + $0x38] sm:$0xf]
        %v568 = vld [vmem:[#allocation10 + $0x3c] sm:$0xf]
        %v585 = vunpack.c.l.b16 %v553
        %v586 = vunpack.c.l.b16 %v554
        %v587 = vunpack.c.l.b16 %v555
        %v588 = vunpack.c.l.b16 %v556
        %v589 = vunpack.c.l.b16 %v557
        %v590 = vunpack.c.l.b16 %v558
        %v591 = vunpack.c.l.b16 %v559
        %v592 = vunpack.c.l.b16 %v560
        %v593 = vunpack.c.l.b16 %v561
        %v594 = vunpack.c.l.b16 %v562
        %v595 = vunpack.c.l.b16 %v563
        %v596 = vunpack.c.l.b16 %v564
        %v597 = vunpack.c.l.b16 %v565
        %v598 = vunpack.c.l.b16 %v566
        %v599 = vunpack.c.l.b16 %v567
        %v600 = vunpack.c.l.b16 %v568
        %v601 = vpack.c.b16 %v586, %v585
        %v602 = vpack.c.b16 %v588, %v587
        %v603 = vpack.c.b16 %v590, %v589
        %v604 = vpack.c.b16 %v592, %v591
        %v605 = vpack.c.b16 %v594, %v593
        %v606 = vpack.c.b16 %v596, %v595
        %v607 = vpack.c.b16 %v598, %v597
        %v608 = vpack.c.b16 %v600, %v599
        %617 = vmatpush.bf16.msra.mxu0 %v608
        %618 = vmatpush.bf16.msra.mxu0 %v607
        %619 = vmatpush.bf16.msra.mxu0 %v606
        %620 = vmatpush.bf16.msra.mxu0 %v605
        %621 = vmatpush.bf16.msra.mxu0 %v604
        %622 = vmatpush.bf16.msra.mxu0 %v603
        %623 = vmatpush.bf16.msra.mxu0 %v602
        %624 = vmatpush.bf16.msra.mxu0 %v601
        %625 = vmatmul.bf16.gmra.mxu0 %v545
        %v626 = vpop.f32.mrf.mxu0
        %v627 = vadd.f32 0.0, %v626
        %v628 = vpop.f32.mrf.mxu0
        %v629 = vadd.f32 0.0, %v628
        %630 = vmatmul.bf16.gmra.mxu0 %v546
        %v631 = vpop.f32.mrf.mxu0
        %v632 = vadd.f32 0.0, %v631
        %v633 = vpop.f32.mrf.mxu0
        %v634 = vadd.f32 0.0, %v633
        %635 = vmatmul.bf16.gmra.mxu0 %v547
        %v636 = vpop.f32.mrf.mxu0
        %v637 = vadd.f32 0.0, %v636
        %v638 = vpop.f32.mrf.mxu0
        %v639 = vadd.f32 0.0, %v638
        %640 = vmatmul.bf16.gmra.mxu0 %v548
        %v641 = vpop.f32.mrf.mxu0
        %v642 = vadd.f32 0.0, %v641
        %v643 = vpop.f32.mrf.mxu0
        %v644 = vadd.f32 0.0, %v643
        %645 = vmatmul.bf16.gmra.mxu0 %v549
        %v646 = vpop.f32.mrf.mxu0
        %v647 = vadd.f32 0.0, %v646
        %v648 = vpop.f32.mrf.mxu0
        %v649 = vadd.f32 0.0, %v648
        %650 = vmatmul.bf16.gmra.mxu0 %v550
        %v651 = vpop.f32.mrf.mxu0
        %v652 = vadd.f32 0.0, %v651
        %v653 = vpop.f32.mrf.mxu0
        %v654 = vadd.f32 0.0, %v653
        %655 = vmatmul.bf16.gmra.mxu0 %v551
        %v656 = vpop.f32.mrf.mxu0
        %v657 = vadd.f32 0.0, %v656
        %v658 = vpop.f32.mrf.mxu0
        %v659 = vadd.f32 0.0, %v658
        %660 = vmatmul.bf16.gmra.mxu0 %v552
        %v661 = vpop.f32.mrf.mxu0
        %v662 = vadd.f32 0.0, %v661
        %v663 = vpop.f32.mrf.mxu0
        %v664 = vadd.f32 0.0, %v663
        %665 = vdwg.mxu0
        %v666 = vld [vmem:[%s4] sm:$0x1]
        %v668 = vperm.slane %v666, 0
        %v670 = vmul.f32 %v627, %v668
        %v671 = vmul.f32 %v629, %v668
        %v672 = vmul.f32 %v632, %v668
        %v673 = vmul.f32 %v634, %v668
        %v674 = vmul.f32 %v637, %v668
        %v675 = vmul.f32 %v639, %v668
        %v676 = vmul.f32 %v642, %v668
        %v677 = vmul.f32 %v644, %v668
        %v678 = vmul.f32 %v647, %v668
        %v679 = vmul.f32 %v649, %v668
        %v680 = vmul.f32 %v652, %v668
        %v681 = vmul.f32 %v654, %v668
        %v682 = vmul.f32 %v657, %v668
        %v683 = vmul.f32 %v659, %v668
        %v684 = vmul.f32 %v662, %v668
        %v685 = vmul.f32 %v664, %v668
        %v686 = vld [vmem:[%s5] sm:$0x1]
        %v688 = vperm.slane %v686, 0
        %v690 = vadd.f32 %v670, %v688
        %v691 = vadd.f32 %v671, %v688
        %v692 = vadd.f32 %v672, %v688
        %v693 = vadd.f32 %v673, %v688
        %v694 = vadd.f32 %v674, %v688
        %v695 = vadd.f32 %v675, %v688
        %v696 = vadd.f32 %v676, %v688
        %v697 = vadd.f32 %v677, %v688
        %v698 = vadd.f32 %v678, %v688
        %v699 = vadd.f32 %v679, %v688
        %v700 = vadd.f32 %v680, %v688
        %v701 = vadd.f32 %v681, %v688
        %v702 = vadd.f32 %v682, %v688
        %v703 = vadd.f32 %v683, %v688
        %v704 = vadd.f32 %v684, %v688
        %v705 = vadd.f32 %v685, %v688
        %vm706 = vcmp.gt.f32.partialorder %v690, 0.0
        %vm707 = vcmp.gt.f32.partialorder %v691, 0.0
        %vm708 = vcmp.gt.f32.partialorder %v692, 0.0
        %vm709 = vcmp.gt.f32.partialorder %v693, 0.0
        %vm710 = vcmp.gt.f32.partialorder %v694, 0.0
        %vm711 = vcmp.gt.f32.partialorder %v695, 0.0
        %vm712 = vcmp.gt.f32.partialorder %v696, 0.0
        %vm713 = vcmp.gt.f32.partialorder %v697, 0.0
        %vm714 = vcmp.gt.f32.partialorder %v698, 0.0
        %vm715 = vcmp.gt.f32.partialorder %v699, 0.0
        %vm716 = vcmp.gt.f32.partialorder %v700, 0.0
        %vm717 = vcmp.gt.f32.partialorder %v701, 0.0
        %vm718 = vcmp.gt.f32.partialorder %v702, 0.0
        %vm719 = vcmp.gt.f32.partialorder %v703, 0.0
        %vm720 = vcmp.gt.f32.partialorder %v704, 0.0
        %vm721 = vcmp.gt.f32.partialorder %v705, 0.0
        %v722 = vmul.f32 %v690, 0.1
        %v723 = vmul.f32 %v691, 0.1
        %v724 = vmul.f32 %v692, 0.1
        %v725 = vmul.f32 %v693, 0.1
        %v726 = vmul.f32 %v694, 0.1
        %v727 = vmul.f32 %v695, 0.1
        %v728 = vmul.f32 %v696, 0.1
        %v729 = vmul.f32 %v697, 0.1
        %v730 = vmul.f32 %v698, 0.1
        %v731 = vmul.f32 %v699, 0.1
        %v732 = vmul.f32 %v700, 0.1
        %v733 = vmul.f32 %v701, 0.1
        %v734 = vmul.f32 %v702, 0.1
        %v735 = vmul.f32 %v703, 0.1
        %v736 = vmul.f32 %v704, 0.1
        %v737 = vmul.f32 %v705, 0.1
        %v738 = vsel %vm706, %v690, %v722
        %v739 = vsel %vm707, %v691, %v723
        %v740 = vsel %vm708, %v692, %v724
        %v741 = vsel %vm709, %v693, %v725
        %v742 = vsel %vm710, %v694, %v726
        %v743 = vsel %vm711, %v695, %v727
        %v744 = vsel %vm712, %v696, %v728
        %v745 = vsel %vm713, %v697, %v729
        %v746 = vsel %vm714, %v698, %v730
        %v747 = vsel %vm715, %v699, %v731
        %v748 = vsel %vm716, %v700, %v732
        %v749 = vsel %vm717, %v701, %v733
        %v750 = vsel %vm718, %v702, %v734
        %v751 = vsel %vm719, %v703, %v735
        %v752 = vsel %vm720, %v704, %v736
        %v753 = vsel %vm721, %v705, %v737
        %v754 = vpack.c.bf16 %v738, %v738
        %v755 = vpack.c.bf16 %v739, %v739
        %v756 = vpack.c.bf16 %v740, %v740
        %v757 = vpack.c.bf16 %v741, %v741
        %v758 = vpack.c.bf16 %v742, %v742
        %v759 = vpack.c.bf16 %v743, %v743
        %v760 = vpack.c.bf16 %v744, %v744
        %v761 = vpack.c.bf16 %v745, %v745
        %v762 = vpack.c.bf16 %v746, %v746
        %v763 = vpack.c.bf16 %v747, %v747
        %v764 = vpack.c.bf16 %v748, %v748
        %v765 = vpack.c.bf16 %v749, %v749
        %v766 = vpack.c.bf16 %v750, %v750
        %v767 = vpack.c.bf16 %v751, %v751
        %v768 = vpack.c.bf16 %v752, %v752
        %v769 = vpack.c.bf16 %v753, %v753
        %vm770 = vsmask.f32 256
        %vm771 = vsmask.f32 4368
        %vm772 = vmor %vm770, %vm771
        %v774 = vshrl.u32 %v754, 16
        %v776 = vrot.slane %v774, 7
        %v777 = vshll.u32 %v754, 16
        %v779 = vor.u32 %v776, %v777
        %v780 = vrot.slane %v776, 4
        %v782 = vshrl.u32 %v755, 16
        %v784 = vrot.slane %v782, 7
        %v785 = vshll.u32 %v755, 16
        %v787 = vor.u32 %v784, %v785
        %v788 = vsel %vm772, %v780, %v787
        %v789 = vrot.slane %v784, 4
        %v791 = vshrl.u32 %v756, 16
        %v793 = vrot.slane %v791, 7
        %v794 = vshll.u32 %v756, 16
        %v796 = vor.u32 %v793, %v794
        %v797 = vrot.slane %v793, 4
        %v799 = vshrl.u32 %v757, 16
        %v801 = vrot.slane %v799, 7
        %v802 = vshll.u32 %v757, 16
        %v804 = vor.u32 %v801, %v802
        %v805 = vsel %vm772, %v797, %v804
        %v806 = vrot.slane %v801, 4
        %v808 = vshrl.u32 %v758, 16
        %v810 = vrot.slane %v808, 7
        %v811 = vshll.u32 %v758, 16
        %v813 = vor.u32 %v810, %v811
        %v814 = vrot.slane %v810, 4
        %v816 = vshrl.u32 %v759, 16
        %v818 = vrot.slane %v816, 7
        %v819 = vshll.u32 %v759, 16
        %v821 = vor.u32 %v818, %v819
        %v822 = vsel %vm772, %v814, %v821
        %v823 = vrot.slane %v818, 4
        %v825 = vshrl.u32 %v760, 16
        %v827 = vrot.slane %v825, 7
        %v828 = vshll.u32 %v760, 16
        %v830 = vor.u32 %v827, %v828
        %v831 = vrot.slane %v827, 4
        %v833 = vshrl.u32 %v761, 16
        %v835 = vrot.slane %v833, 7
        %v836 = vshll.u32 %v761, 16
        %v838 = vor.u32 %v835, %v836
        %v839 = vsel %vm772, %v831, %v838
        %v840 = vrot.slane %v835, 4
        %v842 = vshrl.u32 %v762, 16
        %v844 = vrot.slane %v842, 7
        %v845 = vshll.u32 %v762, 16
        %v847 = vor.u32 %v844, %v845
        %v848 = vrot.slane %v844, 4
        %v850 = vshrl.u32 %v763, 16
        %v852 = vrot.slane %v850, 7
        %v853 = vshll.u32 %v763, 16
        %v855 = vor.u32 %v852, %v853
        %v856 = vsel %vm772, %v848, %v855
        %v857 = vrot.slane %v852, 4
        %v859 = vshrl.u32 %v764, 16
        %v861 = vrot.slane %v859, 7
        %v862 = vshll.u32 %v764, 16
        %v864 = vor.u32 %v861, %v862
        %v865 = vrot.slane %v861, 4
        %v867 = vshrl.u32 %v765, 16
        %v869 = vrot.slane %v867, 7
        %v870 = vshll.u32 %v765, 16
        %v872 = vor.u32 %v869, %v870
        %v873 = vsel %vm772, %v865, %v872
        %v874 = vrot.slane %v869, 4
        %v876 = vshrl.u32 %v766, 16
        %v878 = vrot.slane %v876, 7
        %v879 = vshll.u32 %v766, 16
        %v881 = vor.u32 %v878, %v879
        %v882 = vrot.slane %v878, 4
        %v884 = vshrl.u32 %v767, 16
        %v886 = vrot.slane %v884, 7
        %v887 = vshll.u32 %v767, 16
        %v889 = vor.u32 %v886, %v887
        %v890 = vsel %vm772, %v882, %v889
        %v891 = vrot.slane %v886, 4
        %v893 = vshrl.u32 %v768, 16
        %v895 = vrot.slane %v893, 7
        %v896 = vshll.u32 %v768, 16
        %v898 = vor.u32 %v895, %v896
        %v899 = vrot.slane %v895, 4
        %v901 = vshrl.u32 %v769, 16
        %v903 = vrot.slane %v901, 7
        %v904 = vshll.u32 %v769, 16
        %v906 = vor.u32 %v903, %v904
        %v907 = vsel %vm772, %v899, %v906
        %v908 = vrot.slane %v903, 4
        %s933 = scalar_lea.vmem [#allocation2], 12
        %vm934 = vcmask 1043456
        %vm935 = vsmask.f32 7938
        %vm936 = vmand %vm934, %vm935
        %v937 = vld [vmem:[%s933] sm:$0xf]
        %v938 = vsel %vm936, %v779, %v937
        %939 = vst [vmem:[%s933] sm:$0xf] %v938
        %940 = vst [vmem:[%s933 + $0x4] sm:$0xf] %v788
        %vm941 = vcmask 1040384
        %vm942 = vmand %vm941, %vm770
        %v943 = vld [vmem:[%s933 + $0x8] sm:$0x1]
        %v944 = vsel %vm942, %v789, %v943
        %945 = vst [vmem:[%s933 + $0x8] sm:$0x1] %v944
        %v946 = vld [vmem:[%s933 + $0xc] sm:$0xf]
        %v947 = vsel %vm936, %v796, %v946
        %948 = vst [vmem:[%s933 + $0xc] sm:$0xf] %v947
        %949 = vst [vmem:[%s933 + $0x10] sm:$0xf] %v805
        %v950 = vld [vmem:[%s933 + $0x14] sm:$0x1]
        %v951 = vsel %vm942, %v806, %v950
        %952 = vst [vmem:[%s933 + $0x14] sm:$0x1] %v951
        %v953 = vld [vmem:[%s933 + $0x18] sm:$0xf]
        %v954 = vsel %vm936, %v813, %v953
        %955 = vst [vmem:[%s933 + $0x18] sm:$0xf] %v954
        %956 = vst [vmem:[%s933 + $0x1c] sm:$0xf] %v822
        %v957 = vld [vmem:[%s933 + $0x20] sm:$0x1]
        %v958 = vsel %vm942, %v823, %v957
        %959 = vst [vmem:[%s933 + $0x20] sm:$0x1] %v958
        %v960 = vld [vmem:[%s933 + $0x24] sm:$0xf]
        %v961 = vsel %vm936, %v830, %v960
        %962 = vst [vmem:[%s933 + $0x24] sm:$0xf] %v961
        %963 = vst [vmem:[%s933 + $0x28] sm:$0xf] %v839
        %v964 = vld [vmem:[%s933 + $0x2c] sm:$0x1]
        %v965 = vsel %vm942, %v840, %v964
        %966 = vst [vmem:[%s933 + $0x2c] sm:$0x1] %v965
        %v967 = vld [vmem:[%s933 + $0x30] sm:$0xf]
        %v968 = vsel %vm936, %v847, %v967
        %969 = vst [vmem:[%s933 + $0x30] sm:$0xf] %v968
        %970 = vst [vmem:[%s933 + $0x34] sm:$0xf] %v856
        %v971 = vld [vmem:[%s933 + $0x38] sm:$0x1]
        %v972 = vsel %vm942, %v857, %v971
        %973 = vst [vmem:[%s933 + $0x38] sm:$0x1] %v972
        %v974 = vld [vmem:[%s933 + $0x3c] sm:$0xf]
        %v975 = vsel %vm936, %v864, %v974
        %976 = vst [vmem:[%s933 + $0x3c] sm:$0xf] %v975
        %977 = vst [vmem:[%s933 + $0x40] sm:$0xf] %v873
        %v978 = vld [vmem:[%s933 + $0x44] sm:$0x1]
        %v979 = vsel %vm942, %v874, %v978
        %980 = vst [vmem:[%s933 + $0x44] sm:$0x1] %v979
        %v981 = vld [vmem:[%s933 + $0x48] sm:$0xf]
        %v982 = vsel %vm936, %v881, %v981
        %983 = vst [vmem:[%s933 + $0x48] sm:$0xf] %v982
        %984 = vst [vmem:[%s933 + $0x4c] sm:$0xf] %v890
        %v985 = vld [vmem:[%s933 + $0x50] sm:$0x1]
        %v986 = vsel %vm942, %v891, %v985
        %987 = vst [vmem:[%s933 + $0x50] sm:$0x1] %v986
        %v988 = vld [vmem:[%s933 + $0x54] sm:$0xf]
        %v989 = vsel %vm936, %v898, %v988
        %990 = vst [vmem:[%s933 + $0x54] sm:$0xf] %v989
        %991 = vst [vmem:[%s933 + $0x58] sm:$0xf] %v907
        %v992 = vld [vmem:[%s933 + $0x5c] sm:$0x1]
        %v993 = vsel %vm942, %v908, %v992
        %994 = vst [vmem:[%s933 + $0x5c] sm:$0x1] %v993
        %v995 = vld [vmem:[%s452] sm:$0xff]
        %v996 = vld [vmem:[%s452 + $0x8] sm:$0xff]
        %p997 = scmp.gt.s32.totalorder %s35, 0
        %s998 = scalar_select %p997, 1, 0
        %s999 = scvt.s32.f32 %s998
        %v1000 = vpack.c.bf16 %v996, %v995
        %v1001 = vld [vmem:[#allocation10] sm:$0xf]
        %v1002 = vld [vmem:[#allocation10 + $0x4] sm:$0xf]
        %v1003 = vld [vmem:[#allocation10 + $0x8] sm:$0xf]
        %v1004 = vld [vmem:[#allocation10 + $0xc] sm:$0xf]
        %v1005 = vld [vmem:[#allocation10 + $0x10] sm:$0xf]
        %v1006 = vld [vmem:[#allocation10 + $0x14] sm:$0xf]
        %v1007 = vld [vmem:[#allocation10 + $0x18] sm:$0xf]
        %v1008 = vld [vmem:[#allocation10 + $0x1c] sm:$0xf]
        %v1009 = vld [vmem:[#allocation10 + $0x20] sm:$0xf]
        %v1010 = vld [vmem:[#allocation10 + $0x24] sm:$0xf]
        %v1011 = vld [vmem:[#allocation10 + $0x28] sm:$0xf]
        %v1012 = vld [vmem:[#allocation10 + $0x2c] sm:$0xf]
        %v1013 = vld [vmem:[#allocation10 + $0x30] sm:$0xf]
        %v1014 = vld [vmem:[#allocation10 + $0x34] sm:$0xf]
        %v1015 = vld [vmem:[#allocation10 + $0x38] sm:$0xf]
        %v1016 = vld [vmem:[#allocation10 + $0x3c] sm:$0xf]
        %v1033 = vunpack.c.l.b16 %v1001
        %v1034 = vunpack.c.l.b16 %v1002
        %v1035 = vunpack.c.l.b16 %v1003
        %v1036 = vunpack.c.l.b16 %v1004
        %v1037 = vunpack.c.l.b16 %v1005
        %v1038 = vunpack.c.l.b16 %v1006
        %v1039 = vunpack.c.l.b16 %v1007
        %v1040 = vunpack.c.l.b16 %v1008
        %v1041 = vunpack.c.l.b16 %v1009
        %v1042 = vunpack.c.l.b16 %v1010
        %v1043 = vunpack.c.l.b16 %v1011
        %v1044 = vunpack.c.l.b16 %v1012
        %v1045 = vunpack.c.l.b16 %v1013
        %v1046 = vunpack.c.l.b16 %v1014
        %v1047 = vunpack.c.l.b16 %v1015
        %v1048 = vunpack.c.l.b16 %v1016
        %v1049 = vpack.c.b16 %v1034, %v1033
        %v1050 = vpack.c.b16 %v1036, %v1035
        %v1051 = vpack.c.b16 %v1038, %v1037
        %v1052 = vpack.c.b16 %v1040, %v1039
        %v1053 = vpack.c.b16 %v1042, %v1041
        %v1054 = vpack.c.b16 %v1044, %v1043
        %v1055 = vpack.c.b16 %v1046, %v1045
        %v1056 = vpack.c.b16 %v1048, %v1047
        %1065 = vmatpush.bf16.msra.mxu0 %v1056
        %1066 = vmatpush.bf16.msra.mxu0 %v1055
        %1067 = vmatpush.bf16.msra.mxu0 %v1054
        %1068 = vmatpush.bf16.msra.mxu0 %v1053
        %1069 = vmatpush.bf16.msra.mxu0 %v1052
        %1070 = vmatpush.bf16.msra.mxu0 %v1051
        %1071 = vmatpush.bf16.msra.mxu0 %v1050
        %1072 = vmatpush.bf16.msra.mxu0 %v1049
        %1073 = vmatmul.bf16.gmra.mxu0 %v1000
        %v1074 = vpop.f32.mrf.mxu0
        %v1075 = vadd.f32 0.0, %v1074
        %v1076 = vpop.f32.mrf.mxu0
        %v1077 = vadd.f32 0.0, %v1076
        %1078 = vdwg.mxu0
        %v1079 = vld [vmem:[%s4] sm:$0x1]
        %v1081 = vperm.slane %v1079, 0
        %v1083 = vmul.f32 %v1075, %v1081
        %v1084 = vmul.f32 %v1077, %v1081
        %v1085 = vld [vmem:[%s5] sm:$0x1]
        %v1087 = vperm.slane %v1085, 0
        %v1089 = vadd.f32 %v1083, %v1087
        %v1090 = vadd.f32 %v1084, %v1087
        %vm1091 = vcmp.gt.f32.partialorder %v1089, 0.0
        %vm1092 = vcmp.gt.f32.partialorder %v1090, 0.0
        %v1093 = vmul.f32 %v1089, 0.1
        %v1094 = vmul.f32 %v1090, 0.1
        %v1095 = vsel %vm1091, %v1089, %v1093
        %v1096 = vsel %vm1092, %v1090, %v1094
        %v1097 = vstv %s999
        %v1098 = vmul.f32 %v1095, %v1097
        %v1099 = vmul.f32 %v1096, %v1097
        %v1100 = vpack.c.bf16 %v1098, %v1098
        %v1101 = vpack.c.bf16 %v1099, %v1099
        %v1103 = vshrl.u32 %v1100, 16
        %v1105 = vrot.slane %v1103, 7
        %v1106 = vshll.u32 %v1100, 16
        %v1108 = vor.u32 %v1105, %v1106
        %v1109 = vrot.slane %v1105, 4
        %v1111 = vshrl.u32 %v1101, 16
        %v1113 = vrot.slane %v1111, 7
        %v1114 = vshll.u32 %v1101, 16
        %v1116 = vor.u32 %v1113, %v1114
        %v1117 = vsel %vm772, %v1109, %v1116
        %v1118 = vrot.slane %v1113, 4
        %v1122 = vld [vmem:[#allocation2] sm:$0xf]
        %v1123 = vsel %vm936, %v1108, %v1122
        %1124 = vst [vmem:[#allocation2] sm:$0xf] %v1123
        %1125 = vst [vmem:[#allocation2 + $0x4] sm:$0xf] %v1117
        %v1126 = vld [vmem:[#allocation2 + $0x8] sm:$0x1]
        %v1127 = vsel %vm942, %v1118, %v1126
        %1128 = vst [vmem:[#allocation2 + $0x8] sm:$0x1] %v1127
        %v1129 = vld [vmem:[%s462] sm:$0xff]
        %v1130 = vld [vmem:[%s462 + $0x8] sm:$0xff]
        %p1131 = scmp.lt.s32.totalorder %s35, 1
        %s1132 = scalar_select %p1131, 1, 0
        %s1133 = scvt.s32.f32 %s1132
        %v1134 = vpack.c.bf16 %v1130, %v1129
        %v1135 = vld [vmem:[#allocation10] sm:$0xf]
        %v1136 = vld [vmem:[#allocation10 + $0x4] sm:$0xf]
        %v1137 = vld [vmem:[#allocation10 + $0x8] sm:$0xf]
        %v1138 = vld [vmem:[#allocation10 + $0xc] sm:$0xf]
        %v1139 = vld [vmem:[#allocation10 + $0x10] sm:$0xf]
        %v1140 = vld [vmem:[#allocation10 + $0x14] sm:$0xf]
        %v1141 = vld [vmem:[#allocation10 + $0x18] sm:$0xf]
        %v1142 = vld [vmem:[#allocation10 + $0x1c] sm:$0xf]
        %v1143 = vld [vmem:[#allocation10 + $0x20] sm:$0xf]
        %v1144 = vld [vmem:[#allocation10 + $0x24] sm:$0xf]
        %v1145 = vld [vmem:[#allocation10 + $0x28] sm:$0xf]
        %v1146 = vld [vmem:[#allocation10 + $0x2c] sm:$0xf]
        %v1147 = vld [vmem:[#allocation10 + $0x30] sm:$0xf]
        %v1148 = vld [vmem:[#allocation10 + $0x34] sm:$0xf]
        %v1149 = vld [vmem:[#allocation10 + $0x38] sm:$0xf]
        %v1150 = vld [vmem:[#allocation10 + $0x3c] sm:$0xf]
        %v1167 = vunpack.c.l.b16 %v1135
        %v1168 = vunpack.c.l.b16 %v1136
        %v1169 = vunpack.c.l.b16 %v1137
        %v1170 = vunpack.c.l.b16 %v1138
        %v1171 = vunpack.c.l.b16 %v1139
        %v1172 = vunpack.c.l.b16 %v1140
        %v1173 = vunpack.c.l.b16 %v1141
        %v1174 = vunpack.c.l.b16 %v1142
        %v1175 = vunpack.c.l.b16 %v1143
        %v1176 = vunpack.c.l.b16 %v1144
        %v1177 = vunpack.c.l.b16 %v1145
        %v1178 = vunpack.c.l.b16 %v1146
        %v1179 = vunpack.c.l.b16 %v1147
        %v1180 = vunpack.c.l.b16 %v1148
        %v1181 = vunpack.c.l.b16 %v1149
        %v1182 = vunpack.c.l.b16 %v1150
        %v1183 = vpack.c.b16 %v1168, %v1167
        %v1184 = vpack.c.b16 %v1170, %v1169
        %v1185 = vpack.c.b16 %v1172, %v1171
        %v1186 = vpack.c.b16 %v1174, %v1173
        %v1187 = vpack.c.b16 %v1176, %v1175
        %v1188 = vpack.c.b16 %v1178, %v1177
        %v1189 = vpack.c.b16 %v1180, %v1179
        %v1190 = vpack.c.b16 %v1182, %v1181
        %1199 = vmatpush.bf16.msra.mxu0 %v1190
        %1200 = vmatpush.bf16.msra.mxu0 %v1189
        %1201 = vmatpush.bf16.msra.mxu0 %v1188
        %1202 = vmatpush.bf16.msra.mxu0 %v1187
        %1203 = vmatpush.bf16.msra.mxu0 %v1186
        %1204 = vmatpush.bf16.msra.mxu0 %v1185
        %1205 = vmatpush.bf16.msra.mxu0 %v1184
        %1206 = vmatpush.bf16.msra.mxu0 %v1183
        %1207 = vmatmul.bf16.gmra.mxu0 %v1134
        %v1208 = vpop.f32.mrf.mxu0
        %v1209 = vadd.f32 0.0, %v1208
        %v1210 = vpop.f32.mrf.mxu0
        %v1211 = vadd.f32 0.0, %v1210
        %1212 = vdwg.mxu0
        %v1213 = vld [vmem:[%s4] sm:$0x1]
        %v1215 = vperm.slane %v1213, 0
        %v1217 = vmul.f32 %v1209, %v1215
        %v1218 = vmul.f32 %v1211, %v1215
        %v1219 = vld [vmem:[%s5] sm:$0x1]
        %v1221 = vperm.slane %v1219, 0
        %v1223 = vadd.f32 %v1217, %v1221
        %v1224 = vadd.f32 %v1218, %v1221
        %vm1225 = vcmp.gt.f32.partialorder %v1223, 0.0
        %vm1226 = vcmp.gt.f32.partialorder %v1224, 0.0
        %v1227 = vmul.f32 %v1223, 0.1
        %v1228 = vmul.f32 %v1224, 0.1
        %v1229 = vsel %vm1225, %v1223, %v1227
        %v1230 = vsel %vm1226, %v1224, %v1228
        %v1231 = vstv %s1133
        %v1232 = vmul.f32 %v1229, %v1231
        %v1233 = vmul.f32 %v1230, %v1231
        %v1234 = vpack.c.bf16 %v1232, %v1232
        %v1235 = vpack.c.bf16 %v1233, %v1233
        %v1237 = vshrl.u32 %v1234, 16
        %v1239 = vrot.slane %v1237, 7
        %v1240 = vshll.u32 %v1234, 16
        %v1242 = vor.u32 %v1239, %v1240
        %v1243 = vrot.slane %v1239, 4
        %v1245 = vshrl.u32 %v1235, 16
        %v1247 = vrot.slane %v1245, 7
        %v1248 = vshll.u32 %v1235, 16
        %v1250 = vor.u32 %v1247, %v1248
        %v1251 = vsel %vm772, %v1243, %v1250
        %v1252 = vrot.slane %v1247, 4
        %s1256 = scalar_lea.vmem [#allocation2], 108
        %v1257 = vld [vmem:[%s1256] sm:$0xf]
        %v1258 = vsel %vm936, %v1242, %v1257
        %1259 = vst [vmem:[%s1256] sm:$0xf] %v1258
        %1260 = vst [vmem:[%s1256 + $0x4] sm:$0xf] %v1251
        %v1261 = vld [vmem:[%s1256 + $0x8] sm:$0x1]
        %v1262 = vsel %vm942, %v1252, %v1261
        %1263 = vst [vmem:[%s1256 + $0x8] sm:$0x1] %v1262
        %v1264 = vld [vmem:[#allocation2] sm:$0x1]
        %v1265 = vsel %vm942, 0, %v1264
        %1266 = vst [vmem:[#allocation2] sm:$0x1] %v1265
        %v1267 = vld [vmem:[#allocation2 + $0xc] sm:$0x1]
        %v1268 = vsel %vm942, 0, %v1267
        %1269 = vst [vmem:[#allocation2 + $0xc] sm:$0x1] %v1268
        %v1270 = vld [vmem:[#allocation2 + $0x18] sm:$0x1]
        %v1271 = vsel %vm942, 0, %v1270
        %1272 = vst [vmem:[#allocation2 + $0x18] sm:$0x1] %v1271
        %v1273 = vld [vmem:[#allocation2 + $0x24] sm:$0x1]
        %v1274 = vsel %vm942, 0, %v1273
        %1275 = vst [vmem:[#allocation2 + $0x24] sm:$0x1] %v1274
        %v1276 = vld [vmem:[#allocation2 + $0x30] sm:$0x1]
        %v1277 = vsel %vm942, 0, %v1276
        %1278 = vst [vmem:[#allocation2 + $0x30] sm:$0x1] %v1277
        %v1279 = vld [vmem:[#allocation2 + $0x3c] sm:$0x1]
        %v1280 = vsel %vm942, 0, %v1279
        %1281 = vst [vmem:[#allocation2 + $0x3c] sm:$0x1] %v1280
        %v1282 = vld [vmem:[#allocation2 + $0x48] sm:$0x1]
        %v1283 = vsel %vm942, 0, %v1282
        %1284 = vst [vmem:[#allocation2 + $0x48] sm:$0x1] %v1283
        %v1285 = vld [vmem:[#allocation2 + $0x54] sm:$0x1]
        %v1286 = vsel %vm942, 0, %v1285
        %1287 = vst [vmem:[#allocation2 + $0x54] sm:$0x1] %v1286
        %v1288 = vld [vmem:[#allocation2 + $0x60] sm:$0x1]
        %v1289 = vsel %vm942, 0, %v1288
        %1290 = vst [vmem:[#allocation2 + $0x60] sm:$0x1] %v1289
        %v1291 = vld [vmem:[#allocation2 + $0x6c] sm:$0x1]
        %v1292 = vsel %vm942, 0, %v1291
        %1293 = vst [vmem:[#allocation2 + $0x6c] sm:$0x1] %v1292
        %vm1294 = vmand %vm941, %vm935
        %v1295 = vld [vmem:[#allocation2 + $0x8] sm:$0x1]
        %v1296 = vsel %vm1294, 0, %v1295
        %1297 = vst [vmem:[#allocation2 + $0x8] sm:$0x1] %v1296
        %v1298 = vld [vmem:[#allocation2 + $0x14] sm:$0x1]
        %v1299 = vsel %vm1294, 0, %v1298
        %1300 = vst [vmem:[#allocation2 + $0x14] sm:$0x1] %v1299
        %v1301 = vld [vmem:[#allocation2 + $0x20] sm:$0x1]
        %v1302 = vsel %vm1294, 0, %v1301
        %1303 = vst [vmem:[#allocation2 + $0x20] sm:$0x1] %v1302
        %v1304 = vld [vmem:[#allocation2 + $0x2c] sm:$0x1]
        %v1305 = vsel %vm1294, 0, %v1304
        %1306 = vst [vmem:[#allocation2 + $0x2c] sm:$0x1] %v1305
        %v1307 = vld [vmem:[#allocation2 + $0x38] sm:$0x1]
        %v1308 = vsel %vm1294, 0, %v1307
        %1309 = vst [vmem:[#allocation2 + $0x38] sm:$0x1] %v1308
        %v1310 = vld [vmem:[#allocation2 + $0x44] sm:$0x1]
        %v1311 = vsel %vm1294, 0, %v1310
        %1312 = vst [vmem:[#allocation2 + $0x44] sm:$0x1] %v1311
        %v1313 = vld [vmem:[#allocation2 + $0x50] sm:$0x1]
        %v1314 = vsel %vm1294, 0, %v1313
        %1315 = vst [vmem:[#allocation2 + $0x50] sm:$0x1] %v1314
        %v1316 = vld [vmem:[#allocation2 + $0x5c] sm:$0x1]
        %v1317 = vsel %vm1294, 0, %v1316
        %1318 = vst [vmem:[#allocation2 + $0x5c] sm:$0x1] %v1317
        %v1319 = vld [vmem:[#allocation2 + $0x68] sm:$0x1]
        %v1320 = vsel %vm1294, 0, %v1319
        %1321 = vst [vmem:[#allocation2 + $0x68] sm:$0x1] %v1320
        %v1322 = vld [vmem:[#allocation2 + $0x74] sm:$0x1]
        %v1323 = vsel %vm1294, 0, %v1322
        %1324 = vst [vmem:[#allocation2 + $0x74] sm:$0x1] %v1323
        %v1325 = vld [vmem:[#allocation2] sm:$0xf]
        %v1326 = vld [vmem:[#allocation2 + $0x4] sm:$0xf]
        %v1327 = vld [vmem:[#allocation2 + $0xc] sm:$0xf]
        %v1328 = vld [vmem:[#allocation2 + $0x10] sm:$0xf]
        %v1329 = vld [vmem:[#allocation2 + $0x18] sm:$0xf]
        %v1330 = vld [vmem:[#allocation2 + $0x1c] sm:$0xf]
        %v1331 = vld [vmem:[#allocation2 + $0x24] sm:$0xf]
        %v1332 = vld [vmem:[#allocation2 + $0x28] sm:$0xf]
        %v1333 = vld [vmem:[#allocation2 + $0x30] sm:$0xf]
        %v1334 = vld [vmem:[#allocation2 + $0x34] sm:$0xf]
        %v1335 = vld [vmem:[#allocation2 + $0x3c] sm:$0xf]
        %v1336 = vld [vmem:[#allocation2 + $0x40] sm:$0xf]
        %v1337 = vld [vmem:[#allocation2 + $0x48] sm:$0xf]
        %v1338 = vld [vmem:[#allocation2 + $0x4c] sm:$0xf]
        %v1339 = vld [vmem:[#allocation2 + $0x54] sm:$0xf]
        %v1340 = vld [vmem:[#allocation2 + $0x58] sm:$0xf]
        %1341 = vst [vmem:[#allocation3] sm:$0xf] %v1325
        %1342 = vst [vmem:[#allocation3 + $0x24] sm:$0xf] %v1326
        %1343 = vst [vmem:[#allocation3 + $0x48] sm:$0xf] %v1327
        %1344 = vst [vmem:[#allocation3 + $0x6c] sm:$0xf] %v1328
        %1345 = vst [vmem:[#allocation3 + $0x90] sm:$0xf] %v1329
        %1346 = vst [vmem:[#allocation3 + $0xb4] sm:$0xf] %v1330
        %1347 = vst [vmem:[#allocation3 + $0xd8] sm:$0xf] %v1331
        %1348 = vst [vmem:[#allocation3 + $0xfc] sm:$0xf] %v1332
        %1349 = vst [vmem:[#allocation3 + $0x120] sm:$0xf] %v1333
        %1350 = vst [vmem:[#allocation3 + $0x144] sm:$0xf] %v1334
        %1351 = vst [vmem:[#allocation3 + $0x168] sm:$0xf] %v1335
        %1352 = vst [vmem:[#allocation3 + $0x18c] sm:$0xf] %v1336
        %1353 = vst [vmem:[#allocation3 + $0x1b0] sm:$0xf] %v1337
        %1354 = vst [vmem:[#allocation3 + $0x1d4] sm:$0xf] %v1338
        %1355 = vst [vmem:[#allocation3 + $0x1f8] sm:$0xf] %v1339
        %1356 = vst [vmem:[#allocation3 + $0x21c] sm:$0xf] %v1340
        %v1357 = vld [vmem:[#allocation2] sm:$0xf]
        %v1358 = vld [vmem:[#allocation2 + $0x4] sm:$0xf]
        %v1359 = vld [vmem:[#allocation2 + $0x8] sm:$0x1]
        %v1360 = vld [vmem:[#allocation2 + $0xc] sm:$0xf]
        %v1361 = vld [vmem:[#allocation2 + $0x10] sm:$0xf]
        %v1362 = vld [vmem:[#allocation2 + $0x14] sm:$0x1]
        %v1363 = vld [vmem:[#allocation2 + $0x18] sm:$0xf]
        %v1364 = vld [vmem:[#allocation2 + $0x1c] sm:$0xf]
        %v1365 = vld [vmem:[#allocation2 + $0x20] sm:$0x1]
        %v1366 = vld [vmem:[#allocation2 + $0x24] sm:$0xf]
        %v1367 = vld [vmem:[#allocation2 + $0x28] sm:$0xf]
        %v1368 = vld [vmem:[#allocation2 + $0x2c] sm:$0x1]
        %v1369 = vld [vmem:[#allocation2 + $0x30] sm:$0xf]
        %v1370 = vld [vmem:[#allocation2 + $0x34] sm:$0xf]
        %v1371 = vld [vmem:[#allocation2 + $0x38] sm:$0x1]
        %v1372 = vld [vmem:[#allocation2 + $0x3c] sm:$0xf]
        %v1373 = vld [vmem:[#allocation2 + $0x40] sm:$0xf]
        %v1374 = vld [vmem:[#allocation2 + $0x44] sm:$0x1]
        %v1375 = vld [vmem:[#allocation2 + $0x48] sm:$0xf]
        %v1376 = vld [vmem:[#allocation2 + $0x4c] sm:$0xf]
        %v1377 = vld [vmem:[#allocation2 + $0x50] sm:$0x1]
        %v1378 = vld [vmem:[#allocation2 + $0x54] sm:$0xf]
        %v1379 = vld [vmem:[#allocation2 + $0x58] sm:$0xf]
        %v1380 = vld [vmem:[#allocation2 + $0x5c] sm:$0x1]
        %vm1381 = vsmask.f32 3328
        %vm1382 = vsmask.f32 7440
        %vm1383 = vmor %vm1381, %vm1382
        %v1385 = vshrl.u32 %v1357, 16
        %v1387 = vrot.slane %v1385, 4
        %v1388 = vshll.u32 %v1357, 16
        %v1390 = vrot.slane %v1388, 5
        %v1391 = vor.u32 %v1387, %v1390
        %v1392 = vrot.slane %v1391, 4
        %v1394 = vshll.u32 %v1358, 16
        %v1396 = vrot.slane %v1394, 5
        %v1397 = vsel %vm1383, %v1392, %v1396
        %v1398 = vshrl.u32 %v1358, 16
        %v1400 = vrot.slane %v1398, 4
        %v1401 = vor.u32 %v1400, %v1396
        %v1402 = vrot.slane %v1401, 4
        %v1404 = vshll.u32 %v1359, 16
        %v1406 = vrot.slane %v1404, 5
        %v1407 = vsel %vm1383, %v1402, %v1406
        %v1409 = vshrl.u32 %v1360, 16
        %v1411 = vrot.slane %v1409, 4
        %v1412 = vshll.u32 %v1360, 16
        %v1414 = vrot.slane %v1412, 5
        %v1415 = vor.u32 %v1411, %v1414
        %v1416 = vrot.slane %v1415, 4
        %v1418 = vshll.u32 %v1361, 16
        %v1420 = vrot.slane %v1418, 5
        %v1421 = vsel %vm1383, %v1416, %v1420
        %v1422 = vshrl.u32 %v1361, 16
        %v1424 = vrot.slane %v1422, 4
        %v1425 = vor.u32 %v1424, %v1420
        %v1426 = vrot.slane %v1425, 4
        %v1428 = vshll.u32 %v1362, 16
        %v1430 = vrot.slane %v1428, 5
        %v1431 = vsel %vm1383, %v1426, %v1430
        %v1433 = vshrl.u32 %v1363, 16
        %v1435 = vrot.slane %v1433, 4
        %v1436 = vshll.u32 %v1363, 16
        %v1438 = vrot.slane %v1436, 5
        %v1439 = vor.u32 %v1435, %v1438
        %v1440 = vrot.slane %v1439, 4
        %v1442 = vshll.u32 %v1364, 16
        %v1444 = vrot.slane %v1442, 5
        %v1445 = vsel %vm1383, %v1440, %v1444
        %v1446 = vshrl.u32 %v1364, 16
        %v1448 = vrot.slane %v1446, 4
        %v1449 = vor.u32 %v1448, %v1444
        %v1450 = vrot.slane %v1449, 4
        %v1452 = vshll.u32 %v1365, 16
        %v1454 = vrot.slane %v1452, 5
        %v1455 = vsel %vm1383, %v1450, %v1454
        %v1457 = vshrl.u32 %v1366, 16
        %v1459 = vrot.slane %v1457, 4
        %v1460 = vshll.u32 %v1366, 16
        %v1462 = vrot.slane %v1460, 5
        %v1463 = vor.u32 %v1459, %v1462
        %v1464 = vrot.slane %v1463, 4
        %v1466 = vshll.u32 %v1367, 16
        %v1468 = vrot.slane %v1466, 5
        %v1469 = vsel %vm1383, %v1464, %v1468
        %v1470 = vshrl.u32 %v1367, 16
        %v1472 = vrot.slane %v1470, 4
        %v1473 = vor.u32 %v1472, %v1468
        %v1474 = vrot.slane %v1473, 4
        %v1476 = vshll.u32 %v1368, 16
        %v1478 = vrot.slane %v1476, 5
        %v1479 = vsel %vm1383, %v1474, %v1478
        %v1481 = vshrl.u32 %v1369, 16
        %v1483 = vrot.slane %v1481, 4
        %v1484 = vshll.u32 %v1369, 16
        %v1486 = vrot.slane %v1484, 5
        %v1487 = vor.u32 %v1483, %v1486
        %v1488 = vrot.slane %v1487, 4
        %v1490 = vshll.u32 %v1370, 16
        %v1492 = vrot.slane %v1490, 5
        %v1493 = vsel %vm1383, %v1488, %v1492
        %v1494 = vshrl.u32 %v1370, 16
        %v1496 = vrot.slane %v1494, 4
        %v1497 = vor.u32 %v1496, %v1492
        %v1498 = vrot.slane %v1497, 4
        %v1500 = vshll.u32 %v1371, 16
        %v1502 = vrot.slane %v1500, 5
        %v1503 = vsel %vm1383, %v1498, %v1502
        %v1505 = vshrl.u32 %v1372, 16
        %v1507 = vrot.slane %v1505, 4
        %v1508 = vshll.u32 %v1372, 16
        %v1510 = vrot.slane %v1508, 5
        %v1511 = vor.u32 %v1507, %v1510
        %v1512 = vrot.slane %v1511, 4
        %v1514 = vshll.u32 %v1373, 16
        %v1516 = vrot.slane %v1514, 5
        %v1517 = vsel %vm1383, %v1512, %v1516
        %v1518 = vshrl.u32 %v1373, 16
        %v1520 = vrot.slane %v1518, 4
        %v1521 = vor.u32 %v1520, %v1516
        %v1522 = vrot.slane %v1521, 4
        %v1524 = vshll.u32 %v1374, 16
        %v1526 = vrot.slane %v1524, 5
        %v1527 = vsel %vm1383, %v1522, %v1526
        %v1529 = vshrl.u32 %v1375, 16
        %v1531 = vrot.slane %v1529, 4
        %v1532 = vshll.u32 %v1375, 16
        %v1534 = vrot.slane %v1532, 5
        %v1535 = vor.u32 %v1531, %v1534
        %v1536 = vrot.slane %v1535, 4
        %v1538 = vshll.u32 %v1376, 16
        %v1540 = vrot.slane %v1538, 5
        %v1541 = vsel %vm1383, %v1536, %v1540
        %v1542 = vshrl.u32 %v1376, 16
        %v1544 = vrot.slane %v1542, 4
        %v1545 = vor.u32 %v1544, %v1540
        %v1546 = vrot.slane %v1545, 4
        %v1548 = vshll.u32 %v1377, 16
        %v1550 = vrot.slane %v1548, 5
        %v1551 = vsel %vm1383, %v1546, %v1550
        %v1553 = vshrl.u32 %v1378, 16
        %v1555 = vrot.slane %v1553, 4
        %v1556 = vshll.u32 %v1378, 16
        %v1558 = vrot.slane %v1556, 5
        %v1559 = vor.u32 %v1555, %v1558
        %v1560 = vrot.slane %v1559, 4
        %v1562 = vshll.u32 %v1379, 16
        %v1564 = vrot.slane %v1562, 5
        %v1565 = vsel %vm1383, %v1560, %v1564
        %v1566 = vshrl.u32 %v1379, 16
        %v1568 = vrot.slane %v1566, 4
        %v1569 = vor.u32 %v1568, %v1564
        %v1570 = vrot.slane %v1569, 4
        %v1572 = vshll.u32 %v1380, 16
        %v1574 = vrot.slane %v1572, 5
        %v1575 = vsel %vm1383, %v1570, %v1574
        %1592 = vst [vmem:[#allocation3 + $0x4] sm:$0xf] %v1397
        %1593 = vst [vmem:[#allocation3 + $0x28] sm:$0xf] %v1407
        %1594 = vst [vmem:[#allocation3 + $0x4c] sm:$0xf] %v1421
        %1595 = vst [vmem:[#allocation3 + $0x70] sm:$0xf] %v1431
        %1596 = vst [vmem:[#allocation3 + $0x94] sm:$0xf] %v1445
        %1597 = vst [vmem:[#allocation3 + $0xb8] sm:$0xf] %v1455
        %1598 = vst [vmem:[#allocation3 + $0xdc] sm:$0xf] %v1469
        %1599 = vst [vmem:[#allocation3 + $0x100] sm:$0xf] %v1479
        %1600 = vst [vmem:[#allocation3 + $0x124] sm:$0xf] %v1493
        %1601 = vst [vmem:[#allocation3 + $0x148] sm:$0xf] %v1503
        %1602 = vst [vmem:[#allocation3 + $0x16c] sm:$0xf] %v1517
        %1603 = vst [vmem:[#allocation3 + $0x190] sm:$0xf] %v1527
        %1604 = vst [vmem:[#allocation3 + $0x1b4] sm:$0xf] %v1541
        %1605 = vst [vmem:[#allocation3 + $0x1d8] sm:$0xf] %v1551
        %1606 = vst [vmem:[#allocation3 + $0x1fc] sm:$0xf] %v1565
        %1607 = vst [vmem:[#allocation3 + $0x220] sm:$0xf] %v1575
        %v1608 = vld [vmem:[#allocation2] sm:$0xe]
        %v1609 = vld [vmem:[#allocation2 + $0x4] sm:$0xf]
        %v1610 = vld [vmem:[#allocation2 + $0x8] sm:$0x1]
        %v1611 = vld [vmem:[#allocation2 + $0xc] sm:$0xe]
        %v1612 = vld [vmem:[#allocation2 + $0x10] sm:$0xf]
        %v1613 = vld [vmem:[#allocation2 + $0x14] sm:$0x1]
        %v1614 = vld [vmem:[#allocation2 + $0x18] sm:$0xe]
        %v1615 = vld [vmem:[#allocation2 + $0x1c] sm:$0xf]
        %v1616 = vld [vmem:[#allocation2 + $0x20] sm:$0x1]
        %v1617 = vld [vmem:[#allocation2 + $0x24] sm:$0xe]
        %v1618 = vld [vmem:[#allocation2 + $0x28] sm:$0xf]
        %v1619 = vld [vmem:[#allocation2 + $0x2c] sm:$0x1]
        %v1620 = vld [vmem:[#allocation2 + $0x30] sm:$0xe]
        %v1621 = vld [vmem:[#allocation2 + $0x34] sm:$0xf]
        %v1622 = vld [vmem:[#allocation2 + $0x38] sm:$0x1]
        %v1623 = vld [vmem:[#allocation2 + $0x3c] sm:$0xe]
        %v1624 = vld [vmem:[#allocation2 + $0x40] sm:$0xf]
        %v1625 = vld [vmem:[#allocation2 + $0x44] sm:$0x1]
        %v1626 = vld [vmem:[#allocation2 + $0x48] sm:$0xe]
        %v1627 = vld [vmem:[#allocation2 + $0x4c] sm:$0xf]
        %v1628 = vld [vmem:[#allocation2 + $0x50] sm:$0x1]
        %v1629 = vld [vmem:[#allocation2 + $0x54] sm:$0xe]
        %v1630 = vld [vmem:[#allocation2 + $0x58] sm:$0xf]
        %v1631 = vld [vmem:[#allocation2 + $0x5c] sm:$0x1]
        %vm1656 = vcmask 1042432
        %vm1657 = vcmask 1046532
        %vm1658 = vmor %vm1656, %vm1657
        %v1659 = vrot.slane %v1608, 5
        %v1660 = vrot.slane %v1659, 4
        %v1661 = vrot.slane %v1609, 5
        %v1662 = vsel %vm1658, %v1660, %v1661
        %v1663 = vrot.slane %v1661, 4
        %v1664 = vrot.slane %v1610, 5
        %v1665 = vsel %vm1658, %v1663, %v1664
        %v1666 = vrot.slane %v1611, 5
        %v1667 = vrot.slane %v1666, 4
        %v1668 = vrot.slane %v1612, 5
        %v1669 = vsel %vm1658, %v1667, %v1668
        %v1670 = vrot.slane %v1668, 4
        %v1671 = vrot.slane %v1613, 5
        %v1672 = vsel %vm1658, %v1670, %v1671
        %v1673 = vrot.slane %v1614, 5
        %v1674 = vrot.slane %v1673, 4
        %v1675 = vrot.slane %v1615, 5
        %v1676 = vsel %vm1658, %v1674, %v1675
        %v1677 = vrot.slane %v1675, 4
        %v1678 = vrot.slane %v1616, 5
        %v1679 = vsel %vm1658, %v1677, %v1678
        %v1680 = vrot.slane %v1617, 5
        %v1681 = vrot.slane %v1680, 4
        %v1682 = vrot.slane %v1618, 5
        %v1683 = vsel %vm1658, %v1681, %v1682
        %v1684 = vrot.slane %v1682, 4
        %v1685 = vrot.slane %v1619, 5
        %v1686 = vsel %vm1658, %v1684, %v1685
        %v1687 = vrot.slane %v1620, 5
        %v1688 = vrot.slane %v1687, 4
        %v1689 = vrot.slane %v1621, 5
        %v1690 = vsel %vm1658, %v1688, %v1689
        %v1691 = vrot.slane %v1689, 4
        %v1692 = vrot.slane %v1622, 5
        %v1693 = vsel %vm1658, %v1691, %v1692
        %v1694 = vrot.slane %v1623, 5
        %v1695 = vrot.slane %v1694, 4
        %v1696 = vrot.slane %v1624, 5
        %v1697 = vsel %vm1658, %v1695, %v1696
        %v1698 = vrot.slane %v1696, 4
        %v1699 = vrot.slane %v1625, 5
        %v1700 = vsel %vm1658, %v1698, %v1699
        %v1701 = vrot.slane %v1626, 5
        %v1702 = vrot.slane %v1701, 4
        %v1703 = vrot.slane %v1627, 5
        %v1704 = vsel %vm1658, %v1702, %v1703
        %v1705 = vrot.slane %v1703, 4
        %v1706 = vrot.slane %v1628, 5
        %v1707 = vsel %vm1658, %v1705, %v1706
        %v1708 = vrot.slane %v1629, 5
        %v1709 = vrot.slane %v1708, 4
        %v1710 = vrot.slane %v1630, 5
        %v1711 = vsel %vm1658, %v1709, %v1710
        %v1712 = vrot.slane %v1710, 4
        %v1713 = vrot.slane %v1631, 5
        %v1714 = vsel %vm1658, %v1712, %v1713
        %1731 = vst [vmem:[#allocation3 + $0x8] sm:$0xf] %v1662
        %1732 = vst [vmem:[#allocation3 + $0x2c] sm:$0xf] %v1665
        %1733 = vst [vmem:[#allocation3 + $0x50] sm:$0xf] %v1669
        %1734 = vst [vmem:[#allocation3 + $0x74] sm:$0xf] %v1672
        %1735 = vst [vmem:[#allocation3 + $0x98] sm:$0xf] %v1676
        %1736 = vst [vmem:[#allocation3 + $0xbc] sm:$0xf] %v1679
        %1737 = vst [vmem:[#allocation3 + $0xe0] sm:$0xf] %v1683
        %1738 = vst [vmem:[#allocation3 + $0x104] sm:$0xf] %v1686
        %1739 = vst [vmem:[#allocation3 + $0x128] sm:$0xf] %v1690
        %1740 = vst [vmem:[#allocation3 + $0x14c] sm:$0xf] %v1693
        %1741 = vst [vmem:[#allocation3 + $0x170] sm:$0xf] %v1697
        %1742 = vst [vmem:[#allocation3 + $0x194] sm:$0xf] %v1700
        %1743 = vst [vmem:[#allocation3 + $0x1b8] sm:$0xf] %v1704
        %1744 = vst [vmem:[#allocation3 + $0x1dc] sm:$0xf] %v1707
        %1745 = vst [vmem:[#allocation3 + $0x200] sm:$0xf] %v1711
        %1746 = vst [vmem:[#allocation3 + $0x224] sm:$0xf] %v1714
        %v1747 = vld [vmem:[%s933] sm:$0xf]
        %v1748 = vld [vmem:[%s933 + $0x4] sm:$0xf]
        %v1749 = vld [vmem:[%s933 + $0xc] sm:$0xf]
        %v1750 = vld [vmem:[%s933 + $0x10] sm:$0xf]
        %v1751 = vld [vmem:[%s933 + $0x18] sm:$0xf]
        %v1752 = vld [vmem:[%s933 + $0x1c] sm:$0xf]
        %v1753 = vld [vmem:[%s933 + $0x24] sm:$0xf]
        %v1754 = vld [vmem:[%s933 + $0x28] sm:$0xf]
        %v1755 = vld [vmem:[%s933 + $0x30] sm:$0xf]
        %v1756 = vld [vmem:[%s933 + $0x34] sm:$0xf]
        %v1757 = vld [vmem:[%s933 + $0x3c] sm:$0xf]
        %v1758 = vld [vmem:[%s933 + $0x40] sm:$0xf]
        %v1759 = vld [vmem:[%s933 + $0x48] sm:$0xf]
        %v1760 = vld [vmem:[%s933 + $0x4c] sm:$0xf]
        %v1761 = vld [vmem:[%s933 + $0x54] sm:$0xf]
        %v1762 = vld [vmem:[%s933 + $0x58] sm:$0xf]
        %1763 = vst [vmem:[#allocation3 + $0xc] sm:$0xf] %v1747
        %1764 = vst [vmem:[#allocation3 + $0x30] sm:$0xf] %v1748
        %1765 = vst [vmem:[#allocation3 + $0x54] sm:$0xf] %v1749
        %1766 = vst [vmem:[#allocation3 + $0x78] sm:$0xf] %v1750
        %1767 = vst [vmem:[#allocation3 + $0x9c] sm:$0xf] %v1751
        %1768 = vst [vmem:[#allocation3 + $0xc0] sm:$0xf] %v1752
        %1769 = vst [vmem:[#allocation3 + $0xe4] sm:$0xf] %v1753
        %1770 = vst [vmem:[#allocation3 + $0x108] sm:$0xf] %v1754
        %1771 = vst [vmem:[#allocation3 + $0x12c] sm:$0xf] %v1755
        %1772 = vst [vmem:[#allocation3 + $0x150] sm:$0xf] %v1756
        %1773 = vst [vmem:[#allocation3 + $0x174] sm:$0xf] %v1757
        %1774 = vst [vmem:[#allocation3 + $0x198] sm:$0xf] %v1758
        %1775 = vst [vmem:[#allocation3 + $0x1bc] sm:$0xf] %v1759
        %1776 = vst [vmem:[#allocation3 + $0x1e0] sm:$0xf] %v1760
        %1777 = vst [vmem:[#allocation3 + $0x204] sm:$0xf] %v1761
        %1778 = vst [vmem:[#allocation3 + $0x228] sm:$0xf] %v1762
        %v1779 = vld [vmem:[%s933] sm:$0xf]
        %v1780 = vld [vmem:[%s933 + $0x4] sm:$0xf]
        %v1781 = vld [vmem:[%s933 + $0x8] sm:$0x1]
        %v1782 = vld [vmem:[%s933 + $0xc] sm:$0xf]
        %v1783 = vld [vmem:[%s933 + $0x10] sm:$0xf]
        %v1784 = vld [vmem:[%s933 + $0x14] sm:$0x1]
        %v1785 = vld [vmem:[%s933 + $0x18] sm:$0xf]
        %v1786 = vld [vmem:[%s933 + $0x1c] sm:$0xf]
        %v1787 = vld [vmem:[%s933 + $0x20] sm:$0x1]
        %v1788 = vld [vmem:[%s933 + $0x24] sm:$0xf]
        %v1789 = vld [vmem:[%s933 + $0x28] sm:$0xf]
        %v1790 = vld [vmem:[%s933 + $0x2c] sm:$0x1]
        %v1791 = vld [vmem:[%s933 + $0x30] sm:$0xf]
        %v1792 = vld [vmem:[%s933 + $0x34] sm:$0xf]
        %v1793 = vld [vmem:[%s933 + $0x38] sm:$0x1]
        %v1794 = vld [vmem:[%s933 + $0x3c] sm:$0xf]
        %v1795 = vld [vmem:[%s933 + $0x40] sm:$0xf]
        %v1796 = vld [vmem:[%s933 + $0x44] sm:$0x1]
        %v1797 = vld [vmem:[%s933 + $0x48] sm:$0xf]
        %v1798 = vld [vmem:[%s933 + $0x4c] sm:$0xf]
        %v1799 = vld [vmem:[%s933 + $0x50] sm:$0x1]
        %v1800 = vld [vmem:[%s933 + $0x54] sm:$0xf]
        %v1801 = vld [vmem:[%s933 + $0x58] sm:$0xf]
        %v1802 = vld [vmem:[%s933 + $0x5c] sm:$0x1]
        %v1804 = vshrl.u32 %v1779, 16
        %v1806 = vrot.slane %v1804, 4
        %v1807 = vshll.u32 %v1779, 16
        %v1809 = vrot.slane %v1807, 5
        %v1810 = vor.u32 %v1806, %v1809
        %v1811 = vrot.slane %v1810, 4
        %v1813 = vshll.u32 %v1780, 16
        %v1815 = vrot.slane %v1813, 5
        %v1816 = vsel %vm1383, %v1811, %v1815
        %v1817 = vshrl.u32 %v1780, 16
        %v1819 = vrot.slane %v1817, 4
        %v1820 = vor.u32 %v1819, %v1815
        %v1821 = vrot.slane %v1820, 4
        %v1823 = vshll.u32 %v1781, 16
        %v1825 = vrot.slane %v1823, 5
        %v1826 = vsel %vm1383, %v1821, %v1825
        %v1828 = vshrl.u32 %v1782, 16
        %v1830 = vrot.slane %v1828, 4
        %v1831 = vshll.u32 %v1782, 16
        %v1833 = vrot.slane %v1831, 5
        %v1834 = vor.u32 %v1830, %v1833
        %v1835 = vrot.slane %v1834, 4
        %v1837 = vshll.u32 %v1783, 16
        %v1839 = vrot.slane %v1837, 5
        %v1840 = vsel %vm1383, %v1835, %v1839
        %v1841 = vshrl.u32 %v1783, 16
        %v1843 = vrot.slane %v1841, 4
        %v1844 = vor.u32 %v1843, %v1839
        %v1845 = vrot.slane %v1844, 4
        %v1847 = vshll.u32 %v1784, 16
        %v1849 = vrot.slane %v1847, 5
        %v1850 = vsel %vm1383, %v1845, %v1849
        %v1852 = vshrl.u32 %v1785, 16
        %v1854 = vrot.slane %v1852, 4
        %v1855 = vshll.u32 %v1785, 16
        %v1857 = vrot.slane %v1855, 5
        %v1858 = vor.u32 %v1854, %v1857
        %v1859 = vrot.slane %v1858, 4
        %v1861 = vshll.u32 %v1786, 16
        %v1863 = vrot.slane %v1861, 5
        %v1864 = vsel %vm1383, %v1859, %v1863
        %v1865 = vshrl.u32 %v1786, 16
        %v1867 = vrot.slane %v1865, 4
        %v1868 = vor.u32 %v1867, %v1863
        %v1869 = vrot.slane %v1868, 4
        %v1871 = vshll.u32 %v1787, 16
        %v1873 = vrot.slane %v1871, 5
        %v1874 = vsel %vm1383, %v1869, %v1873
        %v1876 = vshrl.u32 %v1788, 16
        %v1878 = vrot.slane %v1876, 4
        %v1879 = vshll.u32 %v1788, 16
        %v1881 = vrot.slane %v1879, 5
        %v1882 = vor.u32 %v1878, %v1881
        %v1883 = vrot.slane %v1882, 4
        %v1885 = vshll.u32 %v1789, 16
        %v1887 = vrot.slane %v1885, 5
        %v1888 = vsel %vm1383, %v1883, %v1887
        %v1889 = vshrl.u32 %v1789, 16
        %v1891 = vrot.slane %v1889, 4
        %v1892 = vor.u32 %v1891, %v1887
        %v1893 = vrot.slane %v1892, 4
        %v1895 = vshll.u32 %v1790, 16
        %v1897 = vrot.slane %v1895, 5
        %v1898 = vsel %vm1383, %v1893, %v1897
        %v1900 = vshrl.u32 %v1791, 16
        %v1902 = vrot.slane %v1900, 4
        %v1903 = vshll.u32 %v1791, 16
        %v1905 = vrot.slane %v1903, 5
        %v1906 = vor.u32 %v1902, %v1905
        %v1907 = vrot.slane %v1906, 4
        %v1909 = vshll.u32 %v1792, 16
        %v1911 = vrot.slane %v1909, 5
        %v1912 = vsel %vm1383, %v1907, %v1911
        %v1913 = vshrl.u32 %v1792, 16
        %v1915 = vrot.slane %v1913, 4
        %v1916 = vor.u32 %v1915, %v1911
        %v1917 = vrot.slane %v1916, 4
        %v1919 = vshll.u32 %v1793, 16
        %v1921 = vrot.slane %v1919, 5
        %v1922 = vsel %vm1383, %v1917, %v1921
        %v1924 = vshrl.u32 %v1794, 16
        %v1926 = vrot.slane %v1924, 4
        %v1927 = vshll.u32 %v1794, 16
        %v1929 = vrot.slane %v1927, 5
        %v1930 = vor.u32 %v1926, %v1929
        %v1931 = vrot.slane %v1930, 4
        %v1933 = vshll.u32 %v1795, 16
        %v1935 = vrot.slane %v1933, 5
        %v1936 = vsel %vm1383, %v1931, %v1935
        %v1937 = vshrl.u32 %v1795, 16
        %v1939 = vrot.slane %v1937, 4
        %v1940 = vor.u32 %v1939, %v1935
        %v1941 = vrot.slane %v1940, 4
        %v1943 = vshll.u32 %v1796, 16
        %v1945 = vrot.slane %v1943, 5
        %v1946 = vsel %vm1383, %v1941, %v1945
        %v1948 = vshrl.u32 %v1797, 16
        %v1950 = vrot.slane %v1948, 4
        %v1951 = vshll.u32 %v1797, 16
        %v1953 = vrot.slane %v1951, 5
        %v1954 = vor.u32 %v1950, %v1953
        %v1955 = vrot.slane %v1954, 4
        %v1957 = vshll.u32 %v1798, 16
        %v1959 = vrot.slane %v1957, 5
        %v1960 = vsel %vm1383, %v1955, %v1959
        %v1961 = vshrl.u32 %v1798, 16
        %v1963 = vrot.slane %v1961, 4
        %v1964 = vor.u32 %v1963, %v1959
        %v1965 = vrot.slane %v1964, 4
        %v1967 = vshll.u32 %v1799, 16
        %v1969 = vrot.slane %v1967, 5
        %v1970 = vsel %vm1383, %v1965, %v1969
        %v1972 = vshrl.u32 %v1800, 16
        %v1974 = vrot.slane %v1972, 4
        %v1975 = vshll.u32 %v1800, 16
        %v1977 = vrot.slane %v1975, 5
        %v1978 = vor.u32 %v1974, %v1977
        %v1979 = vrot.slane %v1978, 4
        %v1981 = vshll.u32 %v1801, 16
        %v1983 = vrot.slane %v1981, 5
        %v1984 = vsel %vm1383, %v1979, %v1983
        %v1985 = vshrl.u32 %v1801, 16
        %v1987 = vrot.slane %v1985, 4
        %v1988 = vor.u32 %v1987, %v1983
        %v1989 = vrot.slane %v1988, 4
        %v1991 = vshll.u32 %v1802, 16
        %v1993 = vrot.slane %v1991, 5
        %v1994 = vsel %vm1383, %v1989, %v1993
        %2011 = vst [vmem:[#allocation3 + $0x10] sm:$0xf] %v1816
        %2012 = vst [vmem:[#allocation3 + $0x34] sm:$0xf] %v1826
        %2013 = vst [vmem:[#allocation3 + $0x58] sm:$0xf] %v1840
        %2014 = vst [vmem:[#allocation3 + $0x7c] sm:$0xf] %v1850
        %2015 = vst [vmem:[#allocation3 + $0xa0] sm:$0xf] %v1864
        %2016 = vst [vmem:[#allocation3 + $0xc4] sm:$0xf] %v1874
        %2017 = vst [vmem:[#allocation3 + $0xe8] sm:$0xf] %v1888
        %2018 = vst [vmem:[#allocation3 + $0x10c] sm:$0xf] %v1898
        %2019 = vst [vmem:[#allocation3 + $0x130] sm:$0xf] %v1912
        %2020 = vst [vmem:[#allocation3 + $0x154] sm:$0xf] %v1922
        %2021 = vst [vmem:[#allocation3 + $0x178] sm:$0xf] %v1936
        %2022 = vst [vmem:[#allocation3 + $0x19c] sm:$0xf] %v1946
        %2023 = vst [vmem:[#allocation3 + $0x1c0] sm:$0xf] %v1960
        %2024 = vst [vmem:[#allocation3 + $0x1e4] sm:$0xf] %v1970
        %2025 = vst [vmem:[#allocation3 + $0x208] sm:$0xf] %v1984
        %2026 = vst [vmem:[#allocation3 + $0x22c] sm:$0xf] %v1994
        %v2027 = vld [vmem:[%s933] sm:$0xe]
        %v2028 = vld [vmem:[%s933 + $0x4] sm:$0xf]
        %v2029 = vld [vmem:[%s933 + $0x8] sm:$0x1]
        %v2030 = vld [vmem:[%s933 + $0xc] sm:$0xe]
        %v2031 = vld [vmem:[%s933 + $0x10] sm:$0xf]
        %v2032 = vld [vmem:[%s933 + $0x14] sm:$0x1]
        %v2033 = vld [vmem:[%s933 + $0x18] sm:$0xe]
        %v2034 = vld [vmem:[%s933 + $0x1c] sm:$0xf]
        %v2035 = vld [vmem:[%s933 + $0x20] sm:$0x1]
        %v2036 = vld [vmem:[%s933 + $0x24] sm:$0xe]
        %v2037 = vld [vmem:[%s933 + $0x28] sm:$0xf]
        %v2038 = vld [vmem:[%s933 + $0x2c] sm:$0x1]
        %v2039 = vld [vmem:[%s933 + $0x30] sm:$0xe]
        %v2040 = vld [vmem:[%s933 + $0x34] sm:$0xf]
        %v2041 = vld [vmem:[%s933 + $0x38] sm:$0x1]
        %v2042 = vld [vmem:[%s933 + $0x3c] sm:$0xe]
        %v2043 = vld [vmem:[%s933 + $0x40] sm:$0xf]
        %v2044 = vld [vmem:[%s933 + $0x44] sm:$0x1]
        %v2045 = vld [vmem:[%s933 + $0x48] sm:$0xe]
        %v2046 = vld [vmem:[%s933 + $0x4c] sm:$0xf]
        %v2047 = vld [vmem:[%s933 + $0x50] sm:$0x1]
        %v2048 = vld [vmem:[%s933 + $0x54] sm:$0xe]
        %v2049 = vld [vmem:[%s933 + $0x58] sm:$0xf]
        %v2050 = vld [vmem:[%s933 + $0x5c] sm:$0x1]
        %v2075 = vrot.slane %v2027, 5
        %v2076 = vrot.slane %v2075, 4
        %v2077 = vrot.slane %v2028, 5
        %v2078 = vsel %vm1658, %v2076, %v2077
        %v2079 = vrot.slane %v2077, 4
        %v2080 = vrot.slane %v2029, 5
        %v2081 = vsel %vm1658, %v2079, %v2080
        %v2082 = vrot.slane %v2030, 5
        %v2083 = vrot.slane %v2082, 4
        %v2084 = vrot.slane %v2031, 5
        %v2085 = vsel %vm1658, %v2083, %v2084
        %v2086 = vrot.slane %v2084, 4
        %v2087 = vrot.slane %v2032, 5
        %v2088 = vsel %vm1658, %v2086, %v2087
        %v2089 = vrot.slane %v2033, 5
        %v2090 = vrot.slane %v2089, 4
        %v2091 = vrot.slane %v2034, 5
        %v2092 = vsel %vm1658, %v2090, %v2091
        %v2093 = vrot.slane %v2091, 4
        %v2094 = vrot.slane %v2035, 5
        %v2095 = vsel %vm1658, %v2093, %v2094
        %v2096 = vrot.slane %v2036, 5
        %v2097 = vrot.slane %v2096, 4
        %v2098 = vrot.slane %v2037, 5
        %v2099 = vsel %vm1658, %v2097, %v2098
        %v2100 = vrot.slane %v2098, 4
        %v2101 = vrot.slane %v2038, 5
        %v2102 = vsel %vm1658, %v2100, %v2101
        %v2103 = vrot.slane %v2039, 5
        %v2104 = vrot.slane %v2103, 4
        %v2105 = vrot.slane %v2040, 5
        %v2106 = vsel %vm1658, %v2104, %v2105
        %v2107 = vrot.slane %v2105, 4
        %v2108 = vrot.slane %v2041, 5
        %v2109 = vsel %vm1658, %v2107, %v2108
        %v2110 = vrot.slane %v2042, 5
        %v2111 = vrot.slane %v2110, 4
        %v2112 = vrot.slane %v2043, 5
        %v2113 = vsel %vm1658, %v2111, %v2112
        %v2114 = vrot.slane %v2112, 4
        %v2115 = vrot.slane %v2044, 5
        %v2116 = vsel %vm1658, %v2114, %v2115
        %v2117 = vrot.slane %v2045, 5
        %v2118 = vrot.slane %v2117, 4
        %v2119 = vrot.slane %v2046, 5
        %v2120 = vsel %vm1658, %v2118, %v2119
        %v2121 = vrot.slane %v2119, 4
        %v2122 = vrot.slane %v2047, 5
        %v2123 = vsel %vm1658, %v2121, %v2122
        %v2124 = vrot.slane %v2048, 5
        %v2125 = vrot.slane %v2124, 4
        %v2126 = vrot.slane %v2049, 5
        %v2127 = vsel %vm1658, %v2125, %v2126
        %v2128 = vrot.slane %v2126, 4
        %v2129 = vrot.slane %v2050, 5
        %v2130 = vsel %vm1658, %v2128, %v2129
        %2147 = vst [vmem:[#allocation3 + $0x14] sm:$0xf] %v2078
        %2148 = vst [vmem:[#allocation3 + $0x38] sm:$0xf] %v2081
        %2149 = vst [vmem:[#allocation3 + $0x5c] sm:$0xf] %v2085
        %2150 = vst [vmem:[#allocation3 + $0x80] sm:$0xf] %v2088
        %2151 = vst [vmem:[#allocation3 + $0xa4] sm:$0xf] %v2092
        %2152 = vst [vmem:[#allocation3 + $0xc8] sm:$0xf] %v2095
        %2153 = vst [vmem:[#allocation3 + $0xec] sm:$0xf] %v2099
        %2154 = vst [vmem:[#allocation3 + $0x110] sm:$0xf] %v2102
        %2155 = vst [vmem:[#allocation3 + $0x134] sm:$0xf] %v2106
        %2156 = vst [vmem:[#allocation3 + $0x158] sm:$0xf] %v2109
        %2157 = vst [vmem:[#allocation3 + $0x17c] sm:$0xf] %v2113
        %2158 = vst [vmem:[#allocation3 + $0x1a0] sm:$0xf] %v2116
        %2159 = vst [vmem:[#allocation3 + $0x1c4] sm:$0xf] %v2120
        %2160 = vst [vmem:[#allocation3 + $0x1e8] sm:$0xf] %v2123
        %2161 = vst [vmem:[#allocation3 + $0x20c] sm:$0xf] %v2127
        %2162 = vst [vmem:[#allocation3 + $0x230] sm:$0xf] %v2130
        %s2163 = scalar_lea.vmem [#allocation2], 24
        %v2164 = vld [vmem:[%s2163] sm:$0xf]
        %v2165 = vld [vmem:[%s2163 + $0x4] sm:$0xf]
        %v2166 = vld [vmem:[%s2163 + $0xc] sm:$0xf]
        %v2167 = vld [vmem:[%s2163 + $0x10] sm:$0xf]
        %v2168 = vld [vmem:[%s2163 + $0x18] sm:$0xf]
        %v2169 = vld [vmem:[%s2163 + $0x1c] sm:$0xf]
        %v2170 = vld [vmem:[%s2163 + $0x24] sm:$0xf]
        %v2171 = vld [vmem:[%s2163 + $0x28] sm:$0xf]
        %v2172 = vld [vmem:[%s2163 + $0x30] sm:$0xf]
        %v2173 = vld [vmem:[%s2163 + $0x34] sm:$0xf]
        %v2174 = vld [vmem:[%s2163 + $0x3c] sm:$0xf]
        %v2175 = vld [vmem:[%s2163 + $0x40] sm:$0xf]
        %v2176 = vld [vmem:[%s2163 + $0x48] sm:$0xf]
        %v2177 = vld [vmem:[%s2163 + $0x4c] sm:$0xf]
        %v2178 = vld [vmem:[%s2163 + $0x54] sm:$0xf]
        %v2179 = vld [vmem:[%s2163 + $0x58] sm:$0xf]
        %2180 = vst [vmem:[#allocation3 + $0x18] sm:$0xf] %v2164
        %2181 = vst [vmem:[#allocation3 + $0x3c] sm:$0xf] %v2165
        %2182 = vst [vmem:[#allocation3 + $0x60] sm:$0xf] %v2166
        %2183 = vst [vmem:[#allocation3 + $0x84] sm:$0xf] %v2167
        %2184 = vst [vmem:[#allocation3 + $0xa8] sm:$0xf] %v2168
        %2185 = vst [vmem:[#allocation3 + $0xcc] sm:$0xf] %v2169
        %2186 = vst [vmem:[#allocation3 + $0xf0] sm:$0xf] %v2170
        %2187 = vst [vmem:[#allocation3 + $0x114] sm:$0xf] %v2171
        %2188 = vst [vmem:[#allocation3 + $0x138] sm:$0xf] %v2172
        %2189 = vst [vmem:[#allocation3 + $0x15c] sm:$0xf] %v2173
        %2190 = vst [vmem:[#allocation3 + $0x180] sm:$0xf] %v2174
        %2191 = vst [vmem:[#allocation3 + $0x1a4] sm:$0xf] %v2175
        %2192 = vst [vmem:[#allocation3 + $0x1c8] sm:$0xf] %v2176
        %2193 = vst [vmem:[#allocation3 + $0x1ec] sm:$0xf] %v2177
        %2194 = vst [vmem:[#allocation3 + $0x210] sm:$0xf] %v2178
        %2195 = vst [vmem:[#allocation3 + $0x234] sm:$0xf] %v2179
        %v2196 = vld [vmem:[%s2163] sm:$0xf]
        %v2197 = vld [vmem:[%s2163 + $0x4] sm:$0xf]
        %v2198 = vld [vmem:[%s2163 + $0x8] sm:$0x1]
        %v2199 = vld [vmem:[%s2163 + $0xc] sm:$0xf]
        %v2200 = vld [vmem:[%s2163 + $0x10] sm:$0xf]
        %v2201 = vld [vmem:[%s2163 + $0x14] sm:$0x1]
        %v2202 = vld [vmem:[%s2163 + $0x18] sm:$0xf]
        %v2203 = vld [vmem:[%s2163 + $0x1c] sm:$0xf]
        %v2204 = vld [vmem:[%s2163 + $0x20] sm:$0x1]
        %v2205 = vld [vmem:[%s2163 + $0x24] sm:$0xf]
        %v2206 = vld [vmem:[%s2163 + $0x28] sm:$0xf]
        %v2207 = vld [vmem:[%s2163 + $0x2c] sm:$0x1]
        %v2208 = vld [vmem:[%s2163 + $0x30] sm:$0xf]
        %v2209 = vld [vmem:[%s2163 + $0x34] sm:$0xf]
        %v2210 = vld [vmem:[%s2163 + $0x38] sm:$0x1]
        %v2211 = vld [vmem:[%s2163 + $0x3c] sm:$0xf]
        %v2212 = vld [vmem:[%s2163 + $0x40] sm:$0xf]
        %v2213 = vld [vmem:[%s2163 + $0x44] sm:$0x1]
        %v2214 = vld [vmem:[%s2163 + $0x48] sm:$0xf]
        %v2215 = vld [vmem:[%s2163 + $0x4c] sm:$0xf]
        %v2216 = vld [vmem:[%s2163 + $0x50] sm:$0x1]
        %v2217 = vld [vmem:[%s2163 + $0x54] sm:$0xf]
        %v2218 = vld [vmem:[%s2163 + $0x58] sm:$0xf]
        %v2219 = vld [vmem:[%s2163 + $0x5c] sm:$0x1]
        %v2221 = vshrl.u32 %v2196, 16
        %v2223 = vrot.slane %v2221, 4
        %v2224 = vshll.u32 %v2196, 16
        %v2226 = vrot.slane %v2224, 5
        %v2227 = vor.u32 %v2223, %v2226
        %v2228 = vrot.slane %v2227, 4
        %v2230 = vshll.u32 %v2197, 16
        %v2232 = vrot.slane %v2230, 5
        %v2233 = vsel %vm1383, %v2228, %v2232
        %v2234 = vshrl.u32 %v2197, 16
        %v2236 = vrot.slane %v2234, 4
        %v2237 = vor.u32 %v2236, %v2232
        %v2238 = vrot.slane %v2237, 4
        %v2240 = vshll.u32 %v2198, 16
        %v2242 = vrot.slane %v2240, 5
        %v2243 = vsel %vm1383, %v2238, %v2242
        %v2245 = vshrl.u32 %v2199, 16
        %v2247 = vrot.slane %v2245, 4
        %v2248 = vshll.u32 %v2199, 16
        %v2250 = vrot.slane %v2248, 5
        %v2251 = vor.u32 %v2247, %v2250
        %v2252 = vrot.slane %v2251, 4
        %v2254 = vshll.u32 %v2200, 16
        %v2256 = vrot.slane %v2254, 5
        %v2257 = vsel %vm1383, %v2252, %v2256
        %v2258 = vshrl.u32 %v2200, 16
        %v2260 = vrot.slane %v2258, 4
        %v2261 = vor.u32 %v2260, %v2256
        %v2262 = vrot.slane %v2261, 4
        %v2264 = vshll.u32 %v2201, 16
        %v2266 = vrot.slane %v2264, 5
        %v2267 = vsel %vm1383, %v2262, %v2266
        %v2269 = vshrl.u32 %v2202, 16
        %v2271 = vrot.slane %v2269, 4
        %v2272 = vshll.u32 %v2202, 16
        %v2274 = vrot.slane %v2272, 5
        %v2275 = vor.u32 %v2271, %v2274
        %v2276 = vrot.slane %v2275, 4
        %v2278 = vshll.u32 %v2203, 16
        %v2280 = vrot.slane %v2278, 5
        %v2281 = vsel %vm1383, %v2276, %v2280
        %v2282 = vshrl.u32 %v2203, 16
        %v2284 = vrot.slane %v2282, 4
        %v2285 = vor.u32 %v2284, %v2280
        %v2286 = vrot.slane %v2285, 4
        %v2288 = vshll.u32 %v2204, 16
        %v2290 = vrot.slane %v2288, 5
        %v2291 = vsel %vm1383, %v2286, %v2290
        %v2293 = vshrl.u32 %v2205, 16
        %v2295 = vrot.slane %v2293, 4
        %v2296 = vshll.u32 %v2205, 16
        %v2298 = vrot.slane %v2296, 5
        %v2299 = vor.u32 %v2295, %v2298
        %v2300 = vrot.slane %v2299, 4
        %v2302 = vshll.u32 %v2206, 16
        %v2304 = vrot.slane %v2302, 5
        %v2305 = vsel %vm1383, %v2300, %v2304
        %v2306 = vshrl.u32 %v2206, 16
        %v2308 = vrot.slane %v2306, 4
        %v2309 = vor.u32 %v2308, %v2304
        %v2310 = vrot.slane %v2309, 4
        %v2312 = vshll.u32 %v2207, 16
        %v2314 = vrot.slane %v2312, 5
        %v2315 = vsel %vm1383, %v2310, %v2314
        %v2317 = vshrl.u32 %v2208, 16
        %v2319 = vrot.slane %v2317, 4
        %v2320 = vshll.u32 %v2208, 16
        %v2322 = vrot.slane %v2320, 5
        %v2323 = vor.u32 %v2319, %v2322
        %v2324 = vrot.slane %v2323, 4
        %v2326 = vshll.u32 %v2209, 16
        %v2328 = vrot.slane %v2326, 5
        %v2329 = vsel %vm1383, %v2324, %v2328
        %v2330 = vshrl.u32 %v2209, 16
        %v2332 = vrot.slane %v2330, 4
        %v2333 = vor.u32 %v2332, %v2328
        %v2334 = vrot.slane %v2333, 4
        %v2336 = vshll.u32 %v2210, 16
        %v2338 = vrot.slane %v2336, 5
        %v2339 = vsel %vm1383, %v2334, %v2338
        %v2341 = vshrl.u32 %v2211, 16
        %v2343 = vrot.slane %v2341, 4
        %v2344 = vshll.u32 %v2211, 16
        %v2346 = vrot.slane %v2344, 5
        %v2347 = vor.u32 %v2343, %v2346
        %v2348 = vrot.slane %v2347, 4
        %v2350 = vshll.u32 %v2212, 16
        %v2352 = vrot.slane %v2350, 5
        %v2353 = vsel %vm1383, %v2348, %v2352
        %v2354 = vshrl.u32 %v2212, 16
        %v2356 = vrot.slane %v2354, 4
        %v2357 = vor.u32 %v2356, %v2352
        %v2358 = vrot.slane %v2357, 4
        %v2360 = vshll.u32 %v2213, 16
        %v2362 = vrot.slane %v2360, 5
        %v2363 = vsel %vm1383, %v2358, %v2362
        %v2365 = vshrl.u32 %v2214, 16
        %v2367 = vrot.slane %v2365, 4
        %v2368 = vshll.u32 %v2214, 16
        %v2370 = vrot.slane %v2368, 5
        %v2371 = vor.u32 %v2367, %v2370
        %v2372 = vrot.slane %v2371, 4
        %v2374 = vshll.u32 %v2215, 16
        %v2376 = vrot.slane %v2374, 5
        %v2377 = vsel %vm1383, %v2372, %v2376
        %v2378 = vshrl.u32 %v2215, 16
        %v2380 = vrot.slane %v2378, 4
        %v2381 = vor.u32 %v2380, %v2376
        %v2382 = vrot.slane %v2381, 4
        %v2384 = vshll.u32 %v2216, 16
        %v2386 = vrot.slane %v2384, 5
        %v2387 = vsel %vm1383, %v2382, %v2386
        %v2389 = vshrl.u32 %v2217, 16
        %v2391 = vrot.slane %v2389, 4
        %v2392 = vshll.u32 %v2217, 16
        %v2394 = vrot.slane %v2392, 5
        %v2395 = vor.u32 %v2391, %v2394
        %v2396 = vrot.slane %v2395, 4
        %v2398 = vshll.u32 %v2218, 16
        %v2400 = vrot.slane %v2398, 5
        %v2401 = vsel %vm1383, %v2396, %v2400
        %v2402 = vshrl.u32 %v2218, 16
        %v2404 = vrot.slane %v2402, 4
        %v2405 = vor.u32 %v2404, %v2400
        %v2406 = vrot.slane %v2405, 4
        %v2408 = vshll.u32 %v2219, 16
        %v2410 = vrot.slane %v2408, 5
        %v2411 = vsel %vm1383, %v2406, %v2410
        %2428 = vst [vmem:[#allocation3 + $0x1c] sm:$0xf] %v2233
        %2429 = vst [vmem:[#allocation3 + $0x40] sm:$0xf] %v2243
        %2430 = vst [vmem:[#allocation3 + $0x64] sm:$0xf] %v2257
        %2431 = vst [vmem:[#allocation3 + $0x88] sm:$0xf] %v2267
        %2432 = vst [vmem:[#allocation3 + $0xac] sm:$0xf] %v2281
        %2433 = vst [vmem:[#allocation3 + $0xd0] sm:$0xf] %v2291
        %2434 = vst [vmem:[#allocation3 + $0xf4] sm:$0xf] %v2305
        %2435 = vst [vmem:[#allocation3 + $0x118] sm:$0xf] %v2315
        %2436 = vst [vmem:[#allocation3 + $0x13c] sm:$0xf] %v2329
        %2437 = vst [vmem:[#allocation3 + $0x160] sm:$0xf] %v2339
        %2438 = vst [vmem:[#allocation3 + $0x184] sm:$0xf] %v2353
        %2439 = vst [vmem:[#allocation3 + $0x1a8] sm:$0xf] %v2363
        %2440 = vst [vmem:[#allocation3 + $0x1cc] sm:$0xf] %v2377
        %2441 = vst [vmem:[#allocation3 + $0x1f0] sm:$0xf] %v2387
        %2442 = vst [vmem:[#allocation3 + $0x214] sm:$0xf] %v2401
        %2443 = vst [vmem:[#allocation3 + $0x238] sm:$0xf] %v2411
        %v2444 = vld [vmem:[%s2163] sm:$0xe]
        %v2445 = vld [vmem:[%s2163 + $0x4] sm:$0xf]
        %v2446 = vld [vmem:[%s2163 + $0x8] sm:$0x1]
        %v2447 = vld [vmem:[%s2163 + $0xc] sm:$0xe]
        %v2448 = vld [vmem:[%s2163 + $0x10] sm:$0xf]
        %v2449 = vld [vmem:[%s2163 + $0x14] sm:$0x1]
        %v2450 = vld [vmem:[%s2163 + $0x18] sm:$0xe]
        %v2451 = vld [vmem:[%s2163 + $0x1c] sm:$0xf]
        %v2452 = vld [vmem:[%s2163 + $0x20] sm:$0x1]
        %v2453 = vld [vmem:[%s2163 + $0x24] sm:$0xe]
        %v2454 = vld [vmem:[%s2163 + $0x28] sm:$0xf]
        %v2455 = vld [vmem:[%s2163 + $0x2c] sm:$0x1]
        %v2456 = vld [vmem:[%s2163 + $0x30] sm:$0xe]
        %v2457 = vld [vmem:[%s2163 + $0x34] sm:$0xf]
        %v2458 = vld [vmem:[%s2163 + $0x38] sm:$0x1]
        %v2459 = vld [vmem:[%s2163 + $0x3c] sm:$0xe]
        %v2460 = vld [vmem:[%s2163 + $0x40] sm:$0xf]
        %v2461 = vld [vmem:[%s2163 + $0x44] sm:$0x1]
        %v2462 = vld [vmem:[%s2163 + $0x48] sm:$0xe]
        %v2463 = vld [vmem:[%s2163 + $0x4c] sm:$0xf]
        %v2464 = vld [vmem:[%s2163 + $0x50] sm:$0x1]
        %v2465 = vld [vmem:[%s2163 + $0x54] sm:$0xe]
        %v2466 = vld [vmem:[%s2163 + $0x58] sm:$0xf]
        %v2467 = vld [vmem:[%s2163 + $0x5c] sm:$0x1]
        %v2492 = vrot.slane %v2444, 5
        %v2493 = vrot.slane %v2492, 4
        %v2494 = vrot.slane %v2445, 5
        %v2495 = vsel %vm1658, %v2493, %v2494
        %v2496 = vrot.slane %v2494, 4
        %v2497 = vrot.slane %v2446, 5
        %v2498 = vsel %vm1658, %v2496, %v2497
        %v2499 = vrot.slane %v2447, 5
        %v2500 = vrot.slane %v2499, 4
        %v2501 = vrot.slane %v2448, 5
        %v2502 = vsel %vm1658, %v2500, %v2501
        %v2503 = vrot.slane %v2501, 4
        %v2504 = vrot.slane %v2449, 5
        %v2505 = vsel %vm1658, %v2503, %v2504
        %v2506 = vrot.slane %v2450, 5
        %v2507 = vrot.slane %v2506, 4
        %v2508 = vrot.slane %v2451, 5
        %v2509 = vsel %vm1658, %v2507, %v2508
        %v2510 = vrot.slane %v2508, 4
        %v2511 = vrot.slane %v2452, 5
        %v2512 = vsel %vm1658, %v2510, %v2511
        %v2513 = vrot.slane %v2453, 5
        %v2514 = vrot.slane %v2513, 4
        %v2515 = vrot.slane %v2454, 5
        %v2516 = vsel %vm1658, %v2514, %v2515
        %v2517 = vrot.slane %v2515, 4
        %v2518 = vrot.slane %v2455, 5
        %v2519 = vsel %vm1658, %v2517, %v2518
        %v2520 = vrot.slane %v2456, 5
        %v2521 = vrot.slane %v2520, 4
        %v2522 = vrot.slane %v2457, 5
        %v2523 = vsel %vm1658, %v2521, %v2522
        %v2524 = vrot.slane %v2522, 4
        %v2525 = vrot.slane %v2458, 5
        %v2526 = vsel %vm1658, %v2524, %v2525
        %v2527 = vrot.slane %v2459, 5
        %v2528 = vrot.slane %v2527, 4
        %v2529 = vrot.slane %v2460, 5
        %v2530 = vsel %vm1658, %v2528, %v2529
        %v2531 = vrot.slane %v2529, 4
        %v2532 = vrot.slane %v2461, 5
        %v2533 = vsel %vm1658, %v2531, %v2532
        %v2534 = vrot.slane %v2462, 5
        %v2535 = vrot.slane %v2534, 4
        %v2536 = vrot.slane %v2463, 5
        %v2537 = vsel %vm1658, %v2535, %v2536
        %v2538 = vrot.slane %v2536, 4
        %v2539 = vrot.slane %v2464, 5
        %v2540 = vsel %vm1658, %v2538, %v2539
        %v2541 = vrot.slane %v2465, 5
        %v2542 = vrot.slane %v2541, 4
        %v2543 = vrot.slane %v2466, 5
        %v2544 = vsel %vm1658, %v2542, %v2543
        %v2545 = vrot.slane %v2543, 4
        %v2546 = vrot.slane %v2467, 5
        %v2547 = vsel %vm1658, %v2545, %v2546
        %2564 = vst [vmem:[#allocation3 + $0x20] sm:$0xf] %v2495
        %2565 = vst [vmem:[#allocation3 + $0x44] sm:$0xf] %v2498
        %2566 = vst [vmem:[#allocation3 + $0x68] sm:$0xf] %v2502
        %2567 = vst [vmem:[#allocation3 + $0x8c] sm:$0xf] %v2505
        %2568 = vst [vmem:[#allocation3 + $0xb0] sm:$0xf] %v2509
        %2569 = vst [vmem:[#allocation3 + $0xd4] sm:$0xf] %v2512
        %2570 = vst [vmem:[#allocation3 + $0xf8] sm:$0xf] %v2516
        %2571 = vst [vmem:[#allocation3 + $0x11c] sm:$0xf] %v2519
        %2572 = vst [vmem:[#allocation3 + $0x140] sm:$0xf] %v2523
        %2573 = vst [vmem:[#allocation3 + $0x164] sm:$0xf] %v2526
        %2574 = vst [vmem:[#allocation3 + $0x188] sm:$0xf] %v2530
        %2575 = vst [vmem:[#allocation3 + $0x1ac] sm:$0xf] %v2533
        %2576 = vst [vmem:[#allocation3 + $0x1d0] sm:$0xf] %v2537
        %2577 = vst [vmem:[#allocation3 + $0x1f4] sm:$0xf] %v2540
        %2578 = vst [vmem:[#allocation3 + $0x218] sm:$0xf] %v2544
        %2579 = vst [vmem:[#allocation3 + $0x23c] sm:$0xf] %v2547
        %v2580 = vld [vmem:[#allocation3] sm:$0xff]
        %v2581 = vld [vmem:[#allocation3 + $0x8] sm:$0xff]
        %v2582 = vld [vmem:[#allocation3 + $0x10] sm:$0xff]
        %v2583 = vld [vmem:[#allocation3 + $0x18] sm:$0xff]
        %v2584 = vld [vmem:[#allocation3 + $0x20] sm:$0xf]
        %v2585 = vld [vmem:[#allocation3 + $0x24] sm:$0xff]
        %v2586 = vld [vmem:[#allocation3 + $0x2c] sm:$0xff]
        %v2587 = vld [vmem:[#allocation3 + $0x34] sm:$0xff]
        %v2588 = vld [vmem:[#allocation3 + $0x3c] sm:$0xff]
        %v2589 = vld [vmem:[#allocation3 + $0x44] sm:$0xf]
        %v2590 = vld [vmem:[#allocation3 + $0x48] sm:$0xff]
        %v2591 = vld [vmem:[#allocation3 + $0x50] sm:$0xff]
        %v2592 = vld [vmem:[#allocation3 + $0x58] sm:$0xff]
        %v2593 = vld [vmem:[#allocation3 + $0x60] sm:$0xff]
        %v2594 = vld [vmem:[#allocation3 + $0x68] sm:$0xf]
        %v2595 = vld [vmem:[#allocation3 + $0x6c] sm:$0xff]
        %v2596 = vld [vmem:[#allocation3 + $0x74] sm:$0xff]
        %v2597 = vld [vmem:[#allocation3 + $0x7c] sm:$0xff]
        %v2598 = vld [vmem:[#allocation3 + $0x84] sm:$0xff]
        %v2599 = vld [vmem:[#allocation3 + $0x8c] sm:$0xf]
        %v2600 = vld [vmem:[#allocation3 + $0x90] sm:$0xff]
        %v2601 = vld [vmem:[#allocation3 + $0x98] sm:$0xff]
        %v2602 = vld [vmem:[#allocation3 + $0xa0] sm:$0xff]
        %v2603 = vld [vmem:[#allocation3 + $0xa8] sm:$0xff]
        %v2604 = vld [vmem:[#allocation3 + $0xb0] sm:$0xf]
        %v2605 = vld [vmem:[#allocation3 + $0xb4] sm:$0xff]
        %v2606 = vld [vmem:[#allocation3 + $0xbc] sm:$0xff]
        %v2607 = vld [vmem:[#allocation3 + $0xc4] sm:$0xff]
        %v2608 = vld [vmem:[#allocation3 + $0xcc] sm:$0xff]
        %v2609 = vld [vmem:[#allocation3 + $0xd4] sm:$0xf]
        %v2610 = vld [vmem:[#allocation3 + $0xd8] sm:$0xff]
        %v2611 = vld [vmem:[#allocation3 + $0xe0] sm:$0xff]
        %v2612 = vld [vmem:[#allocation3 + $0xe8] sm:$0xff]
        %v2613 = vld [vmem:[#allocation3 + $0xf0] sm:$0xff]
        %v2614 = vld [vmem:[#allocation3 + $0xf8] sm:$0xf]
        %v2615 = vld [vmem:[#allocation3 + $0xfc] sm:$0xff]
        %v2616 = vld [vmem:[#allocation3 + $0x104] sm:$0xff]
        %v2617 = vld [vmem:[#allocation3 + $0x10c] sm:$0xff]
        %v2618 = vld [vmem:[#allocation3 + $0x114] sm:$0xff]
        %v2619 = vld [vmem:[#allocation3 + $0x11c] sm:$0xf]
        %v2620 = vld [vmem:[#allocation3 + $0x120] sm:$0xff]
        %v2621 = vld [vmem:[#allocation3 + $0x128] sm:$0xff]
        %v2622 = vld [vmem:[#allocation3 + $0x130] sm:$0xff]
        %v2623 = vld [vmem:[#allocation3 + $0x138] sm:$0xff]
        %v2624 = vld [vmem:[#allocation3 + $0x140] sm:$0xf]
        %v2625 = vld [vmem:[#allocation3 + $0x144] sm:$0xff]
        %v2626 = vld [vmem:[#allocation3 + $0x14c] sm:$0xff]
        %v2627 = vld [vmem:[#allocation3 + $0x154] sm:$0xff]
        %v2628 = vld [vmem:[#allocation3 + $0x15c] sm:$0xff]
        %v2629 = vld [vmem:[#allocation3 + $0x164] sm:$0xf]
        %v2630 = vld [vmem:[#allocation3 + $0x168] sm:$0xff]
        %v2631 = vld [vmem:[#allocation3 + $0x170] sm:$0xff]
        %v2632 = vld [vmem:[#allocation3 + $0x178] sm:$0xff]
        %v2633 = vld [vmem:[#allocation3 + $0x180] sm:$0xff]
        %v2634 = vld [vmem:[#allocation3 + $0x188] sm:$0xf]
        %v2635 = vld [vmem:[#allocation3 + $0x18c] sm:$0xff]
        %v2636 = vld [vmem:[#allocation3 + $0x194] sm:$0xff]
        %v2637 = vld [vmem:[#allocation3 + $0x19c] sm:$0xff]
        %v2638 = vld [vmem:[#allocation3 + $0x1a4] sm:$0xff]
        %v2639 = vld [vmem:[#allocation3 + $0x1ac] sm:$0xf]
        %v2640 = vld [vmem:[#allocation3 + $0x1b0] sm:$0xff]
        %v2641 = vld [vmem:[#allocation3 + $0x1b8] sm:$0xff]
        %v2642 = vld [vmem:[#allocation3 + $0x1c0] sm:$0xff]
        %v2643 = vld [vmem:[#allocation3 + $0x1c8] sm:$0xff]
        %v2644 = vld [vmem:[#allocation3 + $0x1d0] sm:$0xf]
        %v2645 = vld [vmem:[#allocation3 + $0x1d4] sm:$0xff]
        %v2646 = vld [vmem:[#allocation3 + $0x1dc] sm:$0xff]
        %v2647 = vld [vmem:[#allocation3 + $0x1e4] sm:$0xff]
        %v2648 = vld [vmem:[#allocation3 + $0x1ec] sm:$0xff]
        %v2649 = vld [vmem:[#allocation3 + $0x1f4] sm:$0xf]
        %v2650 = vld [vmem:[#allocation3 + $0x1f8] sm:$0xff]
        %v2651 = vld [vmem:[#allocation3 + $0x200] sm:$0xff]
        %v2652 = vld [vmem:[#allocation3 + $0x208] sm:$0xff]
        %v2653 = vld [vmem:[#allocation3 + $0x210] sm:$0xff]
        %v2654 = vld [vmem:[#allocation3 + $0x218] sm:$0xf]
        %v2655 = vld [vmem:[#allocation3 + $0x21c] sm:$0xff]
        %v2656 = vld [vmem:[#allocation3 + $0x224] sm:$0xff]
        %v2657 = vld [vmem:[#allocation3 + $0x22c] sm:$0xff]
        %v2658 = vld [vmem:[#allocation3 + $0x234] sm:$0xff]
        %v2659 = vld [vmem:[#allocation3 + $0x23c] sm:$0xf]
        %v2660 = vld [vmem:[#allocation12] sm:$0xf]
        %v2661 = vld [vmem:[#allocation12 + $0x4] sm:$0xf]
        %v2662 = vld [vmem:[#allocation12 + $0x8] sm:$0xf]
        %v2663 = vld [vmem:[#allocation12 + $0xc] sm:$0xf]
        %v2664 = vld [vmem:[#allocation12 + $0x10] sm:$0xf]
        %v2665 = vld [vmem:[#allocation12 + $0x14] sm:$0xf]
        %v2666 = vld [vmem:[#allocation12 + $0x18] sm:$0xf]
        %v2667 = vld [vmem:[#allocation12 + $0x1c] sm:$0xf]
        %v2668 = vld [vmem:[#allocation12 + $0x20] sm:$0xf]
        %v2669 = vld [vmem:[#allocation12 + $0x24] sm:$0xf]
        %v2670 = vld [vmem:[#allocation12 + $0x28] sm:$0xf]
        %v2671 = vld [vmem:[#allocation12 + $0x2c] sm:$0xf]
        %v2672 = vld [vmem:[#allocation12 + $0x30] sm:$0xf]
        %v2673 = vld [vmem:[#allocation12 + $0x34] sm:$0xf]
        %v2674 = vld [vmem:[#allocation12 + $0x38] sm:$0xf]
        %v2675 = vld [vmem:[#allocation12 + $0x3c] sm:$0xf]
        %v2676 = vld [vmem:[#allocation12 + $0x40] sm:$0xf]
        %v2677 = vld [vmem:[#allocation12 + $0x44] sm:$0xf]
        %v2678 = vld [vmem:[#allocation12 + $0x48] sm:$0xf]
        %v2679 = vld [vmem:[#allocation12 + $0x4c] sm:$0xf]
        %v2680 = vld [vmem:[#allocation12 + $0x50] sm:$0xf]
        %v2681 = vld [vmem:[#allocation12 + $0x54] sm:$0xf]
        %v2682 = vld [vmem:[#allocation12 + $0x58] sm:$0xf]
        %v2683 = vld [vmem:[#allocation12 + $0x5c] sm:$0xf]
        %v2684 = vld [vmem:[#allocation12 + $0x60] sm:$0xf]
        %v2685 = vld [vmem:[#allocation12 + $0x64] sm:$0xf]
        %v2686 = vld [vmem:[#allocation12 + $0x68] sm:$0xf]
        %v2687 = vld [vmem:[#allocation12 + $0x6c] sm:$0xf]
        %v2688 = vld [vmem:[#allocation12 + $0x70] sm:$0xf]
        %v2689 = vld [vmem:[#allocation12 + $0x74] sm:$0xf]
        %v2690 = vld [vmem:[#allocation12 + $0x78] sm:$0xf]
        %v2691 = vld [vmem:[#allocation12 + $0x7c] sm:$0xf]
        %v2692 = vld [vmem:[#allocation12 + $0x80] sm:$0xf]
        %v2693 = vld [vmem:[#allocation12 + $0x84] sm:$0xf]
        %v2694 = vld [vmem:[#allocation12 + $0x88] sm:$0xf]
        %v2695 = vld [vmem:[#allocation12 + $0x8c] sm:$0xf]
        %v2696 = vld [vmem:[#allocation12 + $0x90] sm:$0xf]
        %v2697 = vld [vmem:[#allocation12 + $0x94] sm:$0xf]
        %v2698 = vld [vmem:[#allocation12 + $0x98] sm:$0xf]
        %v2699 = vld [vmem:[#allocation12 + $0x9c] sm:$0xf]
        %v2700 = vld [vmem:[#allocation12 + $0xa0] sm:$0xf]
        %v2701 = vld [vmem:[#allocation12 + $0xa4] sm:$0xf]
        %v2702 = vld [vmem:[#allocation12 + $0xa8] sm:$0xf]
        %v2703 = vld [vmem:[#allocation12 + $0xac] sm:$0xf]
        %v2704 = vld [vmem:[#allocation12 + $0xb0] sm:$0xf]
        %v2705 = vld [vmem:[#allocation12 + $0xb4] sm:$0xf]
        %v2706 = vld [vmem:[#allocation12 + $0xb8] sm:$0xf]
        %v2707 = vld [vmem:[#allocation12 + $0xbc] sm:$0xf]
        %v2708 = vld [vmem:[#allocation12 + $0xc0] sm:$0xf]
        %v2709 = vld [vmem:[#allocation12 + $0xc4] sm:$0xf]
        %v2710 = vld [vmem:[#allocation12 + $0xc8] sm:$0xf]
        %v2711 = vld [vmem:[#allocation12 + $0xcc] sm:$0xf]
        %v2712 = vld [vmem:[#allocation12 + $0xd0] sm:$0xf]
        %v2713 = vld [vmem:[#allocation12 + $0xd4] sm:$0xf]
        %v2714 = vld [vmem:[#allocation12 + $0xd8] sm:$0xf]
        %v2715 = vld [vmem:[#allocation12 + $0xdc] sm:$0xf]
        %v2716 = vld [vmem:[#allocation12 + $0xe0] sm:$0xf]
        %v2717 = vld [vmem:[#allocation12 + $0xe4] sm:$0xf]
        %v2718 = vld [vmem:[#allocation12 + $0xe8] sm:$0xf]
        %v2719 = vld [vmem:[#allocation12 + $0xec] sm:$0xf]
        %v2720 = vld [vmem:[#allocation12 + $0xf0] sm:$0xf]
        %v2721 = vld [vmem:[#allocation12 + $0xf4] sm:$0xf]
        %v2722 = vld [vmem:[#allocation12 + $0xf8] sm:$0xf]
        %v2723 = vld [vmem:[#allocation12 + $0xfc] sm:$0xf]
        %v2724 = vld [vmem:[#allocation12 + $0x100] sm:$0xf]
        %v2725 = vld [vmem:[#allocation12 + $0x104] sm:$0xf]
        %v2726 = vld [vmem:[#allocation12 + $0x108] sm:$0xf]
        %v2727 = vld [vmem:[#allocation12 + $0x10c] sm:$0xf]
        %v2728 = vld [vmem:[#allocation12 + $0x110] sm:$0xf]
        %v2729 = vld [vmem:[#allocation12 + $0x114] sm:$0xf]
        %v2730 = vld [vmem:[#allocation12 + $0x118] sm:$0xf]
        %v2731 = vld [vmem:[#allocation12 + $0x11c] sm:$0xf]
        %v2732 = vld [vmem:[#allocation12 + $0x120] sm:$0xf]
        %v2733 = vld [vmem:[#allocation12 + $0x124] sm:$0xf]
        %v2734 = vld [vmem:[#allocation12 + $0x128] sm:$0xf]
        %v2735 = vld [vmem:[#allocation12 + $0x12c] sm:$0xf]
        %v2736 = vld [vmem:[#allocation12 + $0x130] sm:$0xf]
        %v2737 = vld [vmem:[#allocation12 + $0x134] sm:$0xf]
        %v2738 = vld [vmem:[#allocation12 + $0x138] sm:$0xf]
        %v2739 = vld [vmem:[#allocation12 + $0x13c] sm:$0xf]
        %v2740 = vld [vmem:[#allocation12 + $0x140] sm:$0xf]
        %v2741 = vld [vmem:[#allocation12 + $0x144] sm:$0xf]
        %v2742 = vld [vmem:[#allocation12 + $0x148] sm:$0xf]
        %v2743 = vld [vmem:[#allocation12 + $0x14c] sm:$0xf]
        %v2744 = vld [vmem:[#allocation12 + $0x150] sm:$0xf]
        %v2745 = vld [vmem:[#allocation12 + $0x154] sm:$0xf]
        %v2746 = vld [vmem:[#allocation12 + $0x158] sm:$0xf]
        %v2747 = vld [vmem:[#allocation12 + $0x15c] sm:$0xf]
        %v2748 = vld [vmem:[#allocation12 + $0x160] sm:$0xf]
        %v2749 = vld [vmem:[#allocation12 + $0x164] sm:$0xf]
        %v2750 = vld [vmem:[#allocation12 + $0x168] sm:$0xf]
        %v2751 = vld [vmem:[#allocation12 + $0x16c] sm:$0xf]
        %v2752 = vld [vmem:[#allocation12 + $0x170] sm:$0xf]
        %v2753 = vld [vmem:[#allocation12 + $0x174] sm:$0xf]
        %v2754 = vld [vmem:[#allocation12 + $0x178] sm:$0xf]
        %v2755 = vld [vmem:[#allocation12 + $0x17c] sm:$0xf]
        %v2756 = vld [vmem:[#allocation12 + $0x180] sm:$0xf]
        %v2757 = vld [vmem:[#allocation12 + $0x184] sm:$0xf]
        %v2758 = vld [vmem:[#allocation12 + $0x188] sm:$0xf]
        %v2759 = vld [vmem:[#allocation12 + $0x18c] sm:$0xf]
        %v2760 = vld [vmem:[#allocation12 + $0x190] sm:$0xf]
        %v2761 = vld [vmem:[#allocation12 + $0x194] sm:$0xf]
        %v2762 = vld [vmem:[#allocation12 + $0x198] sm:$0xf]
        %v2763 = vld [vmem:[#allocation12 + $0x19c] sm:$0xf]
        %v2764 = vld [vmem:[#allocation12 + $0x1a0] sm:$0xf]
        %v2765 = vld [vmem:[#allocation12 + $0x1a4] sm:$0xf]
        %v2766 = vld [vmem:[#allocation12 + $0x1a8] sm:$0xf]
        %v2767 = vld [vmem:[#allocation12 + $0x1ac] sm:$0xf]
        %v2768 = vld [vmem:[#allocation12 + $0x1b0] sm:$0xf]
        %v2769 = vld [vmem:[#allocation12 + $0x1b4] sm:$0xf]
        %v2770 = vld [vmem:[#allocation12 + $0x1b8] sm:$0xf]
        %v2771 = vld [vmem:[#allocation12 + $0x1bc] sm:$0xf]
        %v2772 = vld [vmem:[#allocation12 + $0x1c0] sm:$0xf]
        %v2773 = vld [vmem:[#allocation12 + $0x1c4] sm:$0xf]
        %v2774 = vld [vmem:[#allocation12 + $0x1c8] sm:$0xf]
        %v2775 = vld [vmem:[#allocation12 + $0x1cc] sm:$0xf]
        %v2776 = vld [vmem:[#allocation12 + $0x1d0] sm:$0xf]
        %v2777 = vld [vmem:[#allocation12 + $0x1d4] sm:$0xf]
        %v2778 = vld [vmem:[#allocation12 + $0x1d8] sm:$0xf]
        %v2779 = vld [vmem:[#allocation12 + $0x1dc] sm:$0xf]
        %v2780 = vld [vmem:[#allocation12 + $0x1e0] sm:$0xf]
        %v2781 = vld [vmem:[#allocation12 + $0x1e4] sm:$0xf]
        %v2782 = vld [vmem:[#allocation12 + $0x1e8] sm:$0xf]
        %v2783 = vld [vmem:[#allocation12 + $0x1ec] sm:$0xf]
        %v2784 = vld [vmem:[#allocation12 + $0x1f0] sm:$0xf]
        %v2785 = vld [vmem:[#allocation12 + $0x1f4] sm:$0xf]
        %v2786 = vld [vmem:[#allocation12 + $0x1f8] sm:$0xf]
        %v2787 = vld [vmem:[#allocation12 + $0x1fc] sm:$0xf]
        %v2788 = vld [vmem:[#allocation12 + $0x200] sm:$0xf]
        %v2789 = vld [vmem:[#allocation12 + $0x204] sm:$0xf]
        %v2790 = vld [vmem:[#allocation12 + $0x208] sm:$0xf]
        %v2791 = vld [vmem:[#allocation12 + $0x20c] sm:$0xf]
        %v2792 = vld [vmem:[#allocation12 + $0x210] sm:$0xf]
        %v2793 = vld [vmem:[#allocation12 + $0x214] sm:$0xf]
        %v2794 = vld [vmem:[#allocation12 + $0x218] sm:$0xf]
        %v2795 = vld [vmem:[#allocation12 + $0x21c] sm:$0xf]
        %v2796 = vld [vmem:[#allocation12 + $0x220] sm:$0xf]
        %v2797 = vld [vmem:[#allocation12 + $0x224] sm:$0xf]
        %v2798 = vld [vmem:[#allocation12 + $0x228] sm:$0xf]
        %v2799 = vld [vmem:[#allocation12 + $0x22c] sm:$0xf]
        %v2800 = vld [vmem:[#allocation12 + $0x230] sm:$0xf]
        %v2801 = vld [vmem:[#allocation12 + $0x234] sm:$0xf]
        %v2802 = vld [vmem:[#allocation12 + $0x238] sm:$0xf]
        %v2803 = vld [vmem:[#allocation12 + $0x23c] sm:$0xf]
        %v2884 = vunpack.c.l.b16 %v2580
        %v2885 = vunpack.c.h.b16 %v2580
        %v2886 = vunpack.c.l.b16 %v2581
        %v2887 = vunpack.c.h.b16 %v2581
        %v2888 = vunpack.c.l.b16 %v2582
        %v2889 = vunpack.c.h.b16 %v2582
        %v2890 = vunpack.c.l.b16 %v2583
        %v2891 = vunpack.c.h.b16 %v2583
        %v2892 = vunpack.c.l.b16 %v2584
        %v2893 = vunpack.c.l.b16 %v2585
        %v2894 = vunpack.c.h.b16 %v2585
        %v2895 = vunpack.c.l.b16 %v2586
        %v2896 = vunpack.c.h.b16 %v2586
        %v2897 = vunpack.c.l.b16 %v2587
        %v2898 = vunpack.c.h.b16 %v2587
        %v2899 = vunpack.c.l.b16 %v2588
        %v2900 = vunpack.c.h.b16 %v2588
        %v2901 = vunpack.c.l.b16 %v2589
        %v2902 = vunpack.c.l.b16 %v2590
        %v2903 = vunpack.c.h.b16 %v2590
        %v2904 = vunpack.c.l.b16 %v2591
        %v2905 = vunpack.c.h.b16 %v2591
        %v2906 = vunpack.c.l.b16 %v2592
        %v2907 = vunpack.c.h.b16 %v2592
        %v2908 = vunpack.c.l.b16 %v2593
        %v2909 = vunpack.c.h.b16 %v2593
        %v2910 = vunpack.c.l.b16 %v2594
        %v2911 = vunpack.c.l.b16 %v2595
        %v2912 = vunpack.c.h.b16 %v2595
        %v2913 = vunpack.c.l.b16 %v2596
        %v2914 = vunpack.c.h.b16 %v2596
        %v2915 = vunpack.c.l.b16 %v2597
        %v2916 = vunpack.c.h.b16 %v2597
        %v2917 = vunpack.c.l.b16 %v2598
        %v2918 = vunpack.c.h.b16 %v2598
        %v2919 = vunpack.c.l.b16 %v2599
        %v2920 = vunpack.c.l.b16 %v2600
        %v2921 = vunpack.c.h.b16 %v2600
        %v2922 = vunpack.c.l.b16 %v2601
        %v2923 = vunpack.c.h.b16 %v2601
        %v2924 = vunpack.c.l.b16 %v2602
        %v2925 = vunpack.c.h.b16 %v2602
        %v2926 = vunpack.c.l.b16 %v2603
        %v2927 = vunpack.c.h.b16 %v2603
        %v2928 = vunpack.c.l.b16 %v2604
        %v2929 = vunpack.c.l.b16 %v2605
        %v2930 = vunpack.c.h.b16 %v2605
        %v2931 = vunpack.c.l.b16 %v2606
        %v2932 = vunpack.c.h.b16 %v2606
        %v2933 = vunpack.c.l.b16 %v2607
        %v2934 = vunpack.c.h.b16 %v2607
        %v2935 = vunpack.c.l.b16 %v2608
        %v2936 = vunpack.c.h.b16 %v2608
        %v2937 = vunpack.c.l.b16 %v2609
        %v2938 = vunpack.c.l.b16 %v2610
        %v2939 = vunpack.c.h.b16 %v2610
        %v2940 = vunpack.c.l.b16 %v2611
        %v2941 = vunpack.c.h.b16 %v2611
        %v2942 = vunpack.c.l.b16 %v2612
        %v2943 = vunpack.c.h.b16 %v2612
        %v2944 = vunpack.c.l.b16 %v2613
        %v2945 = vunpack.c.h.b16 %v2613
        %v2946 = vunpack.c.l.b16 %v2614
        %v2947 = vunpack.c.l.b16 %v2615
        %v2948 = vunpack.c.h.b16 %v2615
        %v2949 = vunpack.c.l.b16 %v2616
        %v2950 = vunpack.c.h.b16 %v2616
        %v2951 = vunpack.c.l.b16 %v2617
        %v2952 = vunpack.c.h.b16 %v2617
        %v2953 = vunpack.c.l.b16 %v2618
        %v2954 = vunpack.c.h.b16 %v2618
        %v2955 = vunpack.c.l.b16 %v2619
        %v2956 = vunpack.c.l.b16 %v2620
        %v2957 = vunpack.c.h.b16 %v2620
        %v2958 = vunpack.c.l.b16 %v2621
        %v2959 = vunpack.c.h.b16 %v2621
        %v2960 = vunpack.c.l.b16 %v2622
        %v2961 = vunpack.c.h.b16 %v2622
        %v2962 = vunpack.c.l.b16 %v2623
        %v2963 = vunpack.c.h.b16 %v2623
        %v2964 = vunpack.c.l.b16 %v2624
        %v2965 = vunpack.c.l.b16 %v2625
        %v2966 = vunpack.c.h.b16 %v2625
        %v2967 = vunpack.c.l.b16 %v2626
        %v2968 = vunpack.c.h.b16 %v2626
        %v2969 = vunpack.c.l.b16 %v2627
        %v2970 = vunpack.c.h.b16 %v2627
        %v2971 = vunpack.c.l.b16 %v2628
        %v2972 = vunpack.c.h.b16 %v2628
        %v2973 = vunpack.c.l.b16 %v2629
        %v2974 = vunpack.c.l.b16 %v2630
        %v2975 = vunpack.c.h.b16 %v2630
        %v2976 = vunpack.c.l.b16 %v2631
        %v2977 = vunpack.c.h.b16 %v2631
        %v2978 = vunpack.c.l.b16 %v2632
        %v2979 = vunpack.c.h.b16 %v2632
        %v2980 = vunpack.c.l.b16 %v2633
        %v2981 = vunpack.c.h.b16 %v2633
        %v2982 = vunpack.c.l.b16 %v2634
        %v2983 = vunpack.c.l.b16 %v2635
        %v2984 = vunpack.c.h.b16 %v2635
        %v2985 = vunpack.c.l.b16 %v2636
        %v2986 = vunpack.c.h.b16 %v2636
        %v2987 = vunpack.c.l.b16 %v2637
        %v2988 = vunpack.c.h.b16 %v2637
        %v2989 = vunpack.c.l.b16 %v2638
        %v2990 = vunpack.c.h.b16 %v2638
        %v2991 = vunpack.c.l.b16 %v2639
        %v2992 = vunpack.c.l.b16 %v2640
        %v2993 = vunpack.c.h.b16 %v2640
        %v2994 = vunpack.c.l.b16 %v2641
        %v2995 = vunpack.c.h.b16 %v2641
        %v2996 = vunpack.c.l.b16 %v2642
        %v2997 = vunpack.c.h.b16 %v2642
        %v2998 = vunpack.c.l.b16 %v2643
        %v2999 = vunpack.c.h.b16 %v2643
        %v3000 = vunpack.c.l.b16 %v2644
        %v3001 = vunpack.c.l.b16 %v2645
        %v3002 = vunpack.c.h.b16 %v2645
        %v3003 = vunpack.c.l.b16 %v2646
        %v3004 = vunpack.c.h.b16 %v2646
        %v3005 = vunpack.c.l.b16 %v2647
        %v3006 = vunpack.c.h.b16 %v2647
        %v3007 = vunpack.c.l.b16 %v2648
        %v3008 = vunpack.c.h.b16 %v2648
        %v3009 = vunpack.c.l.b16 %v2649
        %v3010 = vunpack.c.l.b16 %v2650
        %v3011 = vunpack.c.h.b16 %v2650
        %v3012 = vunpack.c.l.b16 %v2651
        %v3013 = vunpack.c.h.b16 %v2651
        %v3014 = vunpack.c.l.b16 %v2652
        %v3015 = vunpack.c.h.b16 %v2652
        %v3016 = vunpack.c.l.b16 %v2653
        %v3017 = vunpack.c.h.b16 %v2653
        %v3018 = vunpack.c.l.b16 %v2654
        %v3019 = vunpack.c.l.b16 %v2655
        %v3020 = vunpack.c.h.b16 %v2655
        %v3021 = vunpack.c.l.b16 %v2656
        %v3022 = vunpack.c.h.b16 %v2656
        %v3023 = vunpack.c.l.b16 %v2657
        %v3024 = vunpack.c.h.b16 %v2657
        %v3025 = vunpack.c.l.b16 %v2658
        %v3026 = vunpack.c.h.b16 %v2658
        %v3027 = vunpack.c.l.b16 %v2659
        %v3028 = vpack.c.b16 %v2893, %v2884
        %v3029 = vpack.c.b16 %v2894, %v2885
        %v3030 = vpack.c.b16 %v2895, %v2886
        %v3031 = vpack.c.b16 %v2896, %v2887
        %v3032 = vpack.c.b16 %v2897, %v2888
        %v3033 = vpack.c.b16 %v2898, %v2889
        %v3034 = vpack.c.b16 %v2899, %v2890
        %v3035 = vpack.c.b16 %v2900, %v2891
        %v3036 = vpack.c.b16 %v2901, %v2892
        %v3037 = vpack.c.b16 %v2911, %v2902
        %v3038 = vpack.c.b16 %v2912, %v2903
        %v3039 = vpack.c.b16 %v2913, %v2904
        %v3040 = vpack.c.b16 %v2914, %v2905
        %v3041 = vpack.c.b16 %v2915, %v2906
        %v3042 = vpack.c.b16 %v2916, %v2907
        %v3043 = vpack.c.b16 %v2917, %v2908
        %v3044 = vpack.c.b16 %v2918, %v2909
        %v3045 = vpack.c.b16 %v2919, %v2910
        %v3046 = vpack.c.b16 %v2929, %v2920
        %v3047 = vpack.c.b16 %v2930, %v2921
        %v3048 = vpack.c.b16 %v2931, %v2922
        %v3049 = vpack.c.b16 %v2932, %v2923
        %v3050 = vpack.c.b16 %v2933, %v2924
        %v3051 = vpack.c.b16 %v2934, %v2925
        %v3052 = vpack.c.b16 %v2935, %v2926
        %v3053 = vpack.c.b16 %v2936, %v2927
        %v3054 = vpack.c.b16 %v2937, %v2928
        %v3055 = vpack.c.b16 %v2947, %v2938
        %v3056 = vpack.c.b16 %v2948, %v2939
        %v3057 = vpack.c.b16 %v2949, %v2940
        %v3058 = vpack.c.b16 %v2950, %v2941
        %v3059 = vpack.c.b16 %v2951, %v2942
        %v3060 = vpack.c.b16 %v2952, %v2943
        %v3061 = vpack.c.b16 %v2953, %v2944
        %v3062 = vpack.c.b16 %v2954, %v2945
        %v3063 = vpack.c.b16 %v2955, %v2946
        %v3064 = vpack.c.b16 %v2965, %v2956
        %v3065 = vpack.c.b16 %v2966, %v2957
        %v3066 = vpack.c.b16 %v2967, %v2958
        %v3067 = vpack.c.b16 %v2968, %v2959
        %v3068 = vpack.c.b16 %v2969, %v2960
        %v3069 = vpack.c.b16 %v2970, %v2961
        %v3070 = vpack.c.b16 %v2971, %v2962
        %v3071 = vpack.c.b16 %v2972, %v2963
        %v3072 = vpack.c.b16 %v2973, %v2964
        %v3073 = vpack.c.b16 %v2983, %v2974
        %v3074 = vpack.c.b16 %v2984, %v2975
        %v3075 = vpack.c.b16 %v2985, %v2976
        %v3076 = vpack.c.b16 %v2986, %v2977
        %v3077 = vpack.c.b16 %v2987, %v2978
        %v3078 = vpack.c.b16 %v2988, %v2979
        %v3079 = vpack.c.b16 %v2989, %v2980
        %v3080 = vpack.c.b16 %v2990, %v2981
        %v3081 = vpack.c.b16 %v2991, %v2982
        %v3082 = vpack.c.b16 %v3001, %v2992
        %v3083 = vpack.c.b16 %v3002, %v2993
        %v3084 = vpack.c.b16 %v3003, %v2994
        %v3085 = vpack.c.b16 %v3004, %v2995
        %v3086 = vpack.c.b16 %v3005, %v2996
        %v3087 = vpack.c.b16 %v3006, %v2997
        %v3088 = vpack.c.b16 %v3007, %v2998
        %v3089 = vpack.c.b16 %v3008, %v2999
        %v3090 = vpack.c.b16 %v3009, %v3000
        %v3091 = vpack.c.b16 %v3019, %v3010
        %v3092 = vpack.c.b16 %v3020, %v3011
        %v3093 = vpack.c.b16 %v3021, %v3012
        %v3094 = vpack.c.b16 %v3022, %v3013
        %v3095 = vpack.c.b16 %v3023, %v3014
        %v3096 = vpack.c.b16 %v3024, %v3015
        %v3097 = vpack.c.b16 %v3025, %v3016
        %v3098 = vpack.c.b16 %v3026, %v3017
        %v3099 = vpack.c.b16 %v3027, %v3018
        %v3316 = vunpack.c.l.b16 %v2660
        %v3317 = vunpack.c.l.b16 %v2661
        %v3318 = vunpack.c.l.b16 %v2662
        %v3319 = vunpack.c.l.b16 %v2663
        %v3320 = vunpack.c.l.b16 %v2664
        %v3321 = vunpack.c.l.b16 %v2665
        %v3322 = vunpack.c.l.b16 %v2666
        %v3323 = vunpack.c.l.b16 %v2667
        %v3324 = vunpack.c.l.b16 %v2668
        %v3325 = vunpack.c.l.b16 %v2669
        %v3326 = vunpack.c.l.b16 %v2670
        %v3327 = vunpack.c.l.b16 %v2671
        %v3328 = vunpack.c.l.b16 %v2672
        %v3329 = vunpack.c.l.b16 %v2673
        %v3330 = vunpack.c.l.b16 %v2674
        %v3331 = vunpack.c.l.b16 %v2675
        %v3332 = vunpack.c.l.b16 %v2676
        %v3333 = vunpack.c.l.b16 %v2677
        %v3334 = vunpack.c.l.b16 %v2678
        %v3335 = vunpack.c.l.b16 %v2679
        %v3336 = vunpack.c.l.b16 %v2680
        %v3337 = vunpack.c.l.b16 %v2681
        %v3338 = vunpack.c.l.b16 %v2682
        %v3339 = vunpack.c.l.b16 %v2683
        %v3340 = vunpack.c.l.b16 %v2684
        %v3341 = vunpack.c.l.b16 %v2685
        %v3342 = vunpack.c.l.b16 %v2686
        %v3343 = vunpack.c.l.b16 %v2687
        %v3344 = vunpack.c.l.b16 %v2688
        %v3345 = vunpack.c.l.b16 %v2689
        %v3346 = vunpack.c.l.b16 %v2690
        %v3347 = vunpack.c.l.b16 %v2691
        %v3348 = vunpack.c.l.b16 %v2692
        %v3349 = vunpack.c.l.b16 %v2693
        %v3350 = vunpack.c.l.b16 %v2694
        %v3351 = vunpack.c.l.b16 %v2695
        %v3352 = vunpack.c.l.b16 %v2696
        %v3353 = vunpack.c.l.b16 %v2697
        %v3354 = vunpack.c.l.b16 %v2698
        %v3355 = vunpack.c.l.b16 %v2699
        %v3356 = vunpack.c.l.b16 %v2700
        %v3357 = vunpack.c.l.b16 %v2701
        %v3358 = vunpack.c.l.b16 %v2702
        %v3359 = vunpack.c.l.b16 %v2703
        %v3360 = vunpack.c.l.b16 %v2704
        %v3361 = vunpack.c.l.b16 %v2705
        %v3362 = vunpack.c.l.b16 %v2706
        %v3363 = vunpack.c.l.b16 %v2707
        %v3364 = vunpack.c.l.b16 %v2708
        %v3365 = vunpack.c.l.b16 %v2709
        %v3366 = vunpack.c.l.b16 %v2710
        %v3367 = vunpack.c.l.b16 %v2711
        %v3368 = vunpack.c.l.b16 %v2712
        %v3369 = vunpack.c.l.b16 %v2713
        %v3370 = vunpack.c.l.b16 %v2714
        %v3371 = vunpack.c.l.b16 %v2715
        %v3372 = vunpack.c.l.b16 %v2716
        %v3373 = vunpack.c.l.b16 %v2717
        %v3374 = vunpack.c.l.b16 %v2718
        %v3375 = vunpack.c.l.b16 %v2719
        %v3376 = vunpack.c.l.b16 %v2720
        %v3377 = vunpack.c.l.b16 %v2721
        %v3378 = vunpack.c.l.b16 %v2722
        %v3379 = vunpack.c.l.b16 %v2723
        %v3380 = vunpack.c.l.b16 %v2724
        %v3381 = vunpack.c.l.b16 %v2725
        %v3382 = vunpack.c.l.b16 %v2726
        %v3383 = vunpack.c.l.b16 %v2727
        %v3384 = vunpack.c.l.b16 %v2728
        %v3385 = vunpack.c.l.b16 %v2729
        %v3386 = vunpack.c.l.b16 %v2730
        %v3387 = vunpack.c.l.b16 %v2731
        %v3388 = vunpack.c.l.b16 %v2732
        %v3389 = vunpack.c.l.b16 %v2733
        %v3390 = vunpack.c.l.b16 %v2734
        %v3391 = vunpack.c.l.b16 %v2735
        %v3392 = vunpack.c.l.b16 %v2736
        %v3393 = vunpack.c.l.b16 %v2737
        %v3394 = vunpack.c.l.b16 %v2738
        %v3395 = vunpack.c.l.b16 %v2739
        %v3396 = vunpack.c.l.b16 %v2740
        %v3397 = vunpack.c.l.b16 %v2741
        %v3398 = vunpack.c.l.b16 %v2742
        %v3399 = vunpack.c.l.b16 %v2743
        %v3400 = vunpack.c.l.b16 %v2744
        %v3401 = vunpack.c.l.b16 %v2745
        %v3402 = vunpack.c.l.b16 %v2746
        %v3403 = vunpack.c.l.b16 %v2747
        %v3404 = vunpack.c.l.b16 %v2748
        %v3405 = vunpack.c.l.b16 %v2749
        %v3406 = vunpack.c.l.b16 %v2750
        %v3407 = vunpack.c.l.b16 %v2751
        %v3408 = vunpack.c.l.b16 %v2752
        %v3409 = vunpack.c.l.b16 %v2753
        %v3410 = vunpack.c.l.b16 %v2754
        %v3411 = vunpack.c.l.b16 %v2755
        %v3412 = vunpack.c.l.b16 %v2756
        %v3413 = vunpack.c.l.b16 %v2757
        %v3414 = vunpack.c.l.b16 %v2758
        %v3415 = vunpack.c.l.b16 %v2759
        %v3416 = vunpack.c.l.b16 %v2760
        %v3417 = vunpack.c.l.b16 %v2761
        %v3418 = vunpack.c.l.b16 %v2762
        %v3419 = vunpack.c.l.b16 %v2763
        %v3420 = vunpack.c.l.b16 %v2764
        %v3421 = vunpack.c.l.b16 %v2765
        %v3422 = vunpack.c.l.b16 %v2766
        %v3423 = vunpack.c.l.b16 %v2767
        %v3424 = vunpack.c.l.b16 %v2768
        %v3425 = vunpack.c.l.b16 %v2769
        %v3426 = vunpack.c.l.b16 %v2770
        %v3427 = vunpack.c.l.b16 %v2771
        %v3428 = vunpack.c.l.b16 %v2772
        %v3429 = vunpack.c.l.b16 %v2773
        %v3430 = vunpack.c.l.b16 %v2774
        %v3431 = vunpack.c.l.b16 %v2775
        %v3432 = vunpack.c.l.b16 %v2776
        %v3433 = vunpack.c.l.b16 %v2777
        %v3434 = vunpack.c.l.b16 %v2778
        %v3435 = vunpack.c.l.b16 %v2779
        %v3436 = vunpack.c.l.b16 %v2780
        %v3437 = vunpack.c.l.b16 %v2781
        %v3438 = vunpack.c.l.b16 %v2782
        %v3439 = vunpack.c.l.b16 %v2783
        %v3440 = vunpack.c.l.b16 %v2784
        %v3441 = vunpack.c.l.b16 %v2785
        %v3442 = vunpack.c.l.b16 %v2786
        %v3443 = vunpack.c.l.b16 %v2787
        %v3444 = vunpack.c.l.b16 %v2788
        %v3445 = vunpack.c.l.b16 %v2789
        %v3446 = vunpack.c.l.b16 %v2790
        %v3447 = vunpack.c.l.b16 %v2791
        %v3448 = vunpack.c.l.b16 %v2792
        %v3449 = vunpack.c.l.b16 %v2793
        %v3450 = vunpack.c.l.b16 %v2794
        %v3451 = vunpack.c.l.b16 %v2795
        %v3452 = vunpack.c.l.b16 %v2796
        %v3453 = vunpack.c.l.b16 %v2797
        %v3454 = vunpack.c.l.b16 %v2798
        %v3455 = vunpack.c.l.b16 %v2799
        %v3456 = vunpack.c.l.b16 %v2800
        %v3457 = vunpack.c.l.b16 %v2801
        %v3458 = vunpack.c.l.b16 %v2802
        %v3459 = vunpack.c.l.b16 %v2803
        %v3460 = vpack.c.b16 %v3317, %v3316
        %v3461 = vpack.c.b16 %v3319, %v3318
        %v3462 = vpack.c.b16 %v3321, %v3320
        %v3463 = vpack.c.b16 %v3323, %v3322
        %v3464 = vpack.c.b16 %v3325, %v3324
        %v3465 = vpack.c.b16 %v3327, %v3326
        %v3466 = vpack.c.b16 %v3329, %v3328
        %v3467 = vpack.c.b16 %v3331, %v3330
        %v3468 = vpack.c.b16 %v3333, %v3332
        %v3469 = vpack.c.b16 %v3335, %v3334
        %v3470 = vpack.c.b16 %v3337, %v3336
        %v3471 = vpack.c.b16 %v3339, %v3338
        %v3472 = vpack.c.b16 %v3341, %v3340
        %v3473 = vpack.c.b16 %v3343, %v3342
        %v3474 = vpack.c.b16 %v3345, %v3344
        %v3475 = vpack.c.b16 %v3347, %v3346
        %v3476 = vpack.c.b16 %v3349, %v3348
        %v3477 = vpack.c.b16 %v3351, %v3350
        %v3478 = vpack.c.b16 %v3353, %v3352
        %v3479 = vpack.c.b16 %v3355, %v3354
        %v3480 = vpack.c.b16 %v3357, %v3356
        %v3481 = vpack.c.b16 %v3359, %v3358
        %v3482 = vpack.c.b16 %v3361, %v3360
        %v3483 = vpack.c.b16 %v3363, %v3362
        %v3484 = vpack.c.b16 %v3365, %v3364
        %v3485 = vpack.c.b16 %v3367, %v3366
        %v3486 = vpack.c.b16 %v3369, %v3368
        %v3487 = vpack.c.b16 %v3371, %v3370
        %v3488 = vpack.c.b16 %v3373, %v3372
        %v3489 = vpack.c.b16 %v3375, %v3374
        %v3490 = vpack.c.b16 %v3377, %v3376
        %v3491 = vpack.c.b16 %v3379, %v3378
        %v3492 = vpack.c.b16 %v3381, %v3380
        %v3493 = vpack.c.b16 %v3383, %v3382
        %v3494 = vpack.c.b16 %v3385, %v3384
        %v3495 = vpack.c.b16 %v3387, %v3386
        %v3496 = vpack.c.b16 %v3389, %v3388
        %v3497 = vpack.c.b16 %v3391, %v3390
        %v3498 = vpack.c.b16 %v3393, %v3392
        %v3499 = vpack.c.b16 %v3395, %v3394
        %v3500 = vpack.c.b16 %v3397, %v3396
        %v3501 = vpack.c.b16 %v3399, %v3398
        %v3502 = vpack.c.b16 %v3401, %v3400
        %v3503 = vpack.c.b16 %v3403, %v3402
        %v3504 = vpack.c.b16 %v3405, %v3404
        %v3505 = vpack.c.b16 %v3407, %v3406
        %v3506 = vpack.c.b16 %v3409, %v3408
        %v3507 = vpack.c.b16 %v3411, %v3410
        %v3508 = vpack.c.b16 %v3413, %v3412
        %v3509 = vpack.c.b16 %v3415, %v3414
        %v3510 = vpack.c.b16 %v3417, %v3416
        %v3511 = vpack.c.b16 %v3419, %v3418
        %v3512 = vpack.c.b16 %v3421, %v3420
        %v3513 = vpack.c.b16 %v3423, %v3422
        %v3514 = vpack.c.b16 %v3425, %v3424
        %v3515 = vpack.c.b16 %v3427, %v3426
        %v3516 = vpack.c.b16 %v3429, %v3428
        %v3517 = vpack.c.b16 %v3431, %v3430
        %v3518 = vpack.c.b16 %v3433, %v3432
        %v3519 = vpack.c.b16 %v3435, %v3434
        %v3520 = vpack.c.b16 %v3437, %v3436
        %v3521 = vpack.c.b16 %v3439, %v3438
        %v3522 = vpack.c.b16 %v3441, %v3440
        %v3523 = vpack.c.b16 %v3443, %v3442
        %v3524 = vpack.c.b16 %v3445, %v3444
        %v3525 = vpack.c.b16 %v3447, %v3446
        %v3526 = vpack.c.b16 %v3449, %v3448
        %v3527 = vpack.c.b16 %v3451, %v3450
        %v3528 = vpack.c.b16 %v3453, %v3452
        %v3529 = vpack.c.b16 %v3455, %v3454
        %v3530 = vpack.c.b16 %v3457, %v3456
        %v3531 = vpack.c.b16 %v3459, %v3458
        %3604 = vmatpush.bf16.msra.mxu0 %v3467
        %3605 = vmatpush.bf16.msra.mxu0 %v3466
        %3606 = vmatpush.bf16.msra.mxu0 %v3465
        %3607 = vmatpush.bf16.msra.mxu0 %v3464
        %3608 = vmatpush.bf16.msra.mxu0 %v3463
        %3609 = vmatpush.bf16.msra.mxu0 %v3462
        %3610 = vmatpush.bf16.msra.mxu0 %v3461
        %3611 = vmatpush.bf16.msra.mxu0 %v3460
        %3612 = vmatmul.bf16.gmra.mxu0 %v3028
        %v3613 = vpop.f32.mrf.mxu0
        %v3614 = vadd.f32 0.0, %v3613
        %v3615 = vpop.f32.mrf.mxu0
        %v3616 = vadd.f32 0.0, %v3615
        %3617 = vmatmul.bf16.gmra.mxu0 %v3037
        %v3618 = vpop.f32.mrf.mxu0
        %v3619 = vadd.f32 0.0, %v3618
        %v3620 = vpop.f32.mrf.mxu0
        %v3621 = vadd.f32 0.0, %v3620
        %3622 = vmatmul.bf16.gmra.mxu0 %v3046
        %v3623 = vpop.f32.mrf.mxu0
        %v3624 = vadd.f32 0.0, %v3623
        %v3625 = vpop.f32.mrf.mxu0
        %v3626 = vadd.f32 0.0, %v3625
        %3627 = vmatmul.bf16.gmra.mxu0 %v3055
        %v3628 = vpop.f32.mrf.mxu0
        %v3629 = vadd.f32 0.0, %v3628
        %v3630 = vpop.f32.mrf.mxu0
        %v3631 = vadd.f32 0.0, %v3630
        %3632 = vmatmul.bf16.gmra.mxu0 %v3064
        %v3633 = vpop.f32.mrf.mxu0
        %v3634 = vadd.f32 0.0, %v3633
        %v3635 = vpop.f32.mrf.mxu0
        %v3636 = vadd.f32 0.0, %v3635
        %3637 = vmatmul.bf16.gmra.mxu0 %v3073
        %v3638 = vpop.f32.mrf.mxu0
        %v3639 = vadd.f32 0.0, %v3638
        %v3640 = vpop.f32.mrf.mxu0
        %v3641 = vadd.f32 0.0, %v3640
        %3642 = vmatmul.bf16.gmra.mxu0 %v3082
        %v3643 = vpop.f32.mrf.mxu0
        %v3644 = vadd.f32 0.0, %v3643
        %v3645 = vpop.f32.mrf.mxu0
        %v3646 = vadd.f32 0.0, %v3645
        %3647 = vmatmul.bf16.gmra.mxu0 %v3091
        %v3648 = vpop.f32.mrf.mxu0
        %v3649 = vadd.f32 0.0, %v3648
        %v3650 = vpop.f32.mrf.mxu0
        %v3651 = vadd.f32 0.0, %v3650
        %3652 = vdwg.mxu0
        %3653 = vmatpush.bf16.msra.mxu0 %v3475
        %3654 = vmatpush.bf16.msra.mxu0 %v3474
        %3655 = vmatpush.bf16.msra.mxu0 %v3473
        %3656 = vmatpush.bf16.msra.mxu0 %v3472
        %3657 = vmatpush.bf16.msra.mxu0 %v3471
        %3658 = vmatpush.bf16.msra.mxu0 %v3470
        %3659 = vmatpush.bf16.msra.mxu0 %v3469
        %3660 = vmatpush.bf16.msra.mxu0 %v3468
        %3661 = vmatmul.bf16.gmra.mxu0 %v3029
        %v3662 = vpop.f32.mrf.mxu0
        %v3663 = vadd.f32 %v3614, %v3662
        %v3664 = vpop.f32.mrf.mxu0
        %v3665 = vadd.f32 %v3616, %v3664
        %3666 = vmatmul.bf16.gmra.mxu0 %v3038
        %v3667 = vpop.f32.mrf.mxu0
        %v3668 = vadd.f32 %v3619, %v3667
        %v3669 = vpop.f32.mrf.mxu0
        %v3670 = vadd.f32 %v3621, %v3669
        %3671 = vmatmul.bf16.gmra.mxu0 %v3047
        %v3672 = vpop.f32.mrf.mxu0
        %v3673 = vadd.f32 %v3624, %v3672
        %v3674 = vpop.f32.mrf.mxu0
        %v3675 = vadd.f32 %v3626, %v3674
        %3676 = vmatmul.bf16.gmra.mxu0 %v3056
        %v3677 = vpop.f32.mrf.mxu0
        %v3678 = vadd.f32 %v3629, %v3677
        %v3679 = vpop.f32.mrf.mxu0
        %v3680 = vadd.f32 %v3631, %v3679
        %3681 = vmatmul.bf16.gmra.mxu0 %v3065
        %v3682 = vpop.f32.mrf.mxu0
        %v3683 = vadd.f32 %v3634, %v3682
        %v3684 = vpop.f32.mrf.mxu0
        %v3685 = vadd.f32 %v3636, %v3684
        %3686 = vmatmul.bf16.gmra.mxu0 %v3074
        %v3687 = vpop.f32.mrf.mxu0
        %v3688 = vadd.f32 %v3639, %v3687
        %v3689 = vpop.f32.mrf.mxu0
        %v3690 = vadd.f32 %v3641, %v3689
        %3691 = vmatmul.bf16.gmra.mxu0 %v3083
        %v3692 = vpop.f32.mrf.mxu0
        %v3693 = vadd.f32 %v3644, %v3692
        %v3694 = vpop.f32.mrf.mxu0
        %v3695 = vadd.f32 %v3646, %v3694
        %3696 = vmatmul.bf16.gmra.mxu0 %v3092
        %v3697 = vpop.f32.mrf.mxu0
        %v3698 = vadd.f32 %v3649, %v3697
        %v3699 = vpop.f32.mrf.mxu0
        %v3700 = vadd.f32 %v3651, %v3699
        %3701 = vdwg.mxu0
        %3702 = vmatpush.bf16.msra.mxu0 %v3483
        %3703 = vmatpush.bf16.msra.mxu0 %v3482
        %3704 = vmatpush.bf16.msra.mxu0 %v3481
        %3705 = vmatpush.bf16.msra.mxu0 %v3480
        %3706 = vmatpush.bf16.msra.mxu0 %v3479
        %3707 = vmatpush.bf16.msra.mxu0 %v3478
        %3708 = vmatpush.bf16.msra.mxu0 %v3477
        %3709 = vmatpush.bf16.msra.mxu0 %v3476
        %3710 = vmatmul.bf16.gmra.mxu0 %v3030
        %v3711 = vpop.f32.mrf.mxu0
        %v3712 = vadd.f32 %v3663, %v3711
        %v3713 = vpop.f32.mrf.mxu0
        %v3714 = vadd.f32 %v3665, %v3713
        %3715 = vmatmul.bf16.gmra.mxu0 %v3039
        %v3716 = vpop.f32.mrf.mxu0
        %v3717 = vadd.f32 %v3668, %v3716
        %v3718 = vpop.f32.mrf.mxu0
        %v3719 = vadd.f32 %v3670, %v3718
        %3720 = vmatmul.bf16.gmra.mxu0 %v3048
        %v3721 = vpop.f32.mrf.mxu0
        %v3722 = vadd.f32 %v3673, %v3721
        %v3723 = vpop.f32.mrf.mxu0
        %v3724 = vadd.f32 %v3675, %v3723
        %3725 = vmatmul.bf16.gmra.mxu0 %v3057
        %v3726 = vpop.f32.mrf.mxu0
        %v3727 = vadd.f32 %v3678, %v3726
        %v3728 = vpop.f32.mrf.mxu0
        %v3729 = vadd.f32 %v3680, %v3728
        %3730 = vmatmul.bf16.gmra.mxu0 %v3066
        %v3731 = vpop.f32.mrf.mxu0
        %v3732 = vadd.f32 %v3683, %v3731
        %v3733 = vpop.f32.mrf.mxu0
        %v3734 = vadd.f32 %v3685, %v3733
        %3735 = vmatmul.bf16.gmra.mxu0 %v3075
        %v3736 = vpop.f32.mrf.mxu0
        %v3737 = vadd.f32 %v3688, %v3736
        %v3738 = vpop.f32.mrf.mxu0
        %v3739 = vadd.f32 %v3690, %v3738
        %3740 = vmatmul.bf16.gmra.mxu0 %v3084
        %v3741 = vpop.f32.mrf.mxu0
        %v3742 = vadd.f32 %v3693, %v3741
        %v3743 = vpop.f32.mrf.mxu0
        %v3744 = vadd.f32 %v3695, %v3743
        %3745 = vmatmul.bf16.gmra.mxu0 %v3093
        %v3746 = vpop.f32.mrf.mxu0
        %v3747 = vadd.f32 %v3698, %v3746
        %v3748 = vpop.f32.mrf.mxu0
        %v3749 = vadd.f32 %v3700, %v3748
        %3750 = vdwg.mxu0
        %3751 = vmatpush.bf16.msra.mxu0 %v3491
        %3752 = vmatpush.bf16.msra.mxu0 %v3490
        %3753 = vmatpush.bf16.msra.mxu0 %v3489
        %3754 = vmatpush.bf16.msra.mxu0 %v3488
        %3755 = vmatpush.bf16.msra.mxu0 %v3487
        %3756 = vmatpush.bf16.msra.mxu0 %v3486
        %3757 = vmatpush.bf16.msra.mxu0 %v3485
        %3758 = vmatpush.bf16.msra.mxu0 %v3484
        %3759 = vmatmul.bf16.gmra.mxu0 %v3031
        %v3760 = vpop.f32.mrf.mxu0
        %v3761 = vadd.f32 %v3712, %v3760
        %v3762 = vpop.f32.mrf.mxu0
        %v3763 = vadd.f32 %v3714, %v3762
        %3764 = vmatmul.bf16.gmra.mxu0 %v3040
        %v3765 = vpop.f32.mrf.mxu0
        %v3766 = vadd.f32 %v3717, %v3765
        %v3767 = vpop.f32.mrf.mxu0
        %v3768 = vadd.f32 %v3719, %v3767
        %3769 = vmatmul.bf16.gmra.mxu0 %v3049
        %v3770 = vpop.f32.mrf.mxu0
        %v3771 = vadd.f32 %v3722, %v3770
        %v3772 = vpop.f32.mrf.mxu0
        %v3773 = vadd.f32 %v3724, %v3772
        %3774 = vmatmul.bf16.gmra.mxu0 %v3058
        %v3775 = vpop.f32.mrf.mxu0
        %v3776 = vadd.f32 %v3727, %v3775
        %v3777 = vpop.f32.mrf.mxu0
        %v3778 = vadd.f32 %v3729, %v3777
        %3779 = vmatmul.bf16.gmra.mxu0 %v3067
        %v3780 = vpop.f32.mrf.mxu0
        %v3781 = vadd.f32 %v3732, %v3780
        %v3782 = vpop.f32.mrf.mxu0
        %v3783 = vadd.f32 %v3734, %v3782
        %3784 = vmatmul.bf16.gmra.mxu0 %v3076
        %v3785 = vpop.f32.mrf.mxu0
        %v3786 = vadd.f32 %v3737, %v3785
        %v3787 = vpop.f32.mrf.mxu0
        %v3788 = vadd.f32 %v3739, %v3787
        %3789 = vmatmul.bf16.gmra.mxu0 %v3085
        %v3790 = vpop.f32.mrf.mxu0
        %v3791 = vadd.f32 %v3742, %v3790
        %v3792 = vpop.f32.mrf.mxu0
        %v3793 = vadd.f32 %v3744, %v3792
        %3794 = vmatmul.bf16.gmra.mxu0 %v3094
        %v3795 = vpop.f32.mrf.mxu0
        %v3796 = vadd.f32 %v3747, %v3795
        %v3797 = vpop.f32.mrf.mxu0
        %v3798 = vadd.f32 %v3749, %v3797
        %3799 = vdwg.mxu0
        %3800 = vmatpush.bf16.msra.mxu0 %v3499
        %3801 = vmatpush.bf16.msra.mxu0 %v3498
        %3802 = vmatpush.bf16.msra.mxu0 %v3497
        %3803 = vmatpush.bf16.msra.mxu0 %v3496
        %3804 = vmatpush.bf16.msra.mxu0 %v3495
        %3805 = vmatpush.bf16.msra.mxu0 %v3494
        %3806 = vmatpush.bf16.msra.mxu0 %v3493
        %3807 = vmatpush.bf16.msra.mxu0 %v3492
        %3808 = vmatmul.bf16.gmra.mxu0 %v3032
        %v3809 = vpop.f32.mrf.mxu0
        %v3810 = vadd.f32 %v3761, %v3809
        %v3811 = vpop.f32.mrf.mxu0
        %v3812 = vadd.f32 %v3763, %v3811
        %3813 = vmatmul.bf16.gmra.mxu0 %v3041
        %v3814 = vpop.f32.mrf.mxu0
        %v3815 = vadd.f32 %v3766, %v3814
        %v3816 = vpop.f32.mrf.mxu0
        %v3817 = vadd.f32 %v3768, %v3816
        %3818 = vmatmul.bf16.gmra.mxu0 %v3050
        %v3819 = vpop.f32.mrf.mxu0
        %v3820 = vadd.f32 %v3771, %v3819
        %v3821 = vpop.f32.mrf.mxu0
        %v3822 = vadd.f32 %v3773, %v3821
        %3823 = vmatmul.bf16.gmra.mxu0 %v3059
        %v3824 = vpop.f32.mrf.mxu0
        %v3825 = vadd.f32 %v3776, %v3824
        %v3826 = vpop.f32.mrf.mxu0
        %v3827 = vadd.f32 %v3778, %v3826
        %3828 = vmatmul.bf16.gmra.mxu0 %v3068
        %v3829 = vpop.f32.mrf.mxu0
        %v3830 = vadd.f32 %v3781, %v3829
        %v3831 = vpop.f32.mrf.mxu0
        %v3832 = vadd.f32 %v3783, %v3831
        %3833 = vmatmul.bf16.gmra.mxu0 %v3077
        %v3834 = vpop.f32.mrf.mxu0
        %v3835 = vadd.f32 %v3786, %v3834
        %v3836 = vpop.f32.mrf.mxu0
        %v3837 = vadd.f32 %v3788, %v3836
        %3838 = vmatmul.bf16.gmra.mxu0 %v3086
        %v3839 = vpop.f32.mrf.mxu0
        %v3840 = vadd.f32 %v3791, %v3839
        %v3841 = vpop.f32.mrf.mxu0
        %v3842 = vadd.f32 %v3793, %v3841
        %3843 = vmatmul.bf16.gmra.mxu0 %v3095
        %v3844 = vpop.f32.mrf.mxu0
        %v3845 = vadd.f32 %v3796, %v3844
        %v3846 = vpop.f32.mrf.mxu0
        %v3847 = vadd.f32 %v3798, %v3846
        %3848 = vdwg.mxu0
        %3849 = vmatpush.bf16.msra.mxu0 %v3507
        %3850 = vmatpush.bf16.msra.mxu0 %v3506
        %3851 = vmatpush.bf16.msra.mxu0 %v3505
        %3852 = vmatpush.bf16.msra.mxu0 %v3504
        %3853 = vmatpush.bf16.msra.mxu0 %v3503
        %3854 = vmatpush.bf16.msra.mxu0 %v3502
        %3855 = vmatpush.bf16.msra.mxu0 %v3501
        %3856 = vmatpush.bf16.msra.mxu0 %v3500
        %3857 = vmatmul.bf16.gmra.mxu0 %v3033
        %v3858 = vpop.f32.mrf.mxu0
        %v3859 = vadd.f32 %v3810, %v3858
        %v3860 = vpop.f32.mrf.mxu0
        %v3861 = vadd.f32 %v3812, %v3860
        %3862 = vmatmul.bf16.gmra.mxu0 %v3042
        %v3863 = vpop.f32.mrf.mxu0
        %v3864 = vadd.f32 %v3815, %v3863
        %v3865 = vpop.f32.mrf.mxu0
        %v3866 = vadd.f32 %v3817, %v3865
        %3867 = vmatmul.bf16.gmra.mxu0 %v3051
        %v3868 = vpop.f32.mrf.mxu0
        %v3869 = vadd.f32 %v3820, %v3868
        %v3870 = vpop.f32.mrf.mxu0
        %v3871 = vadd.f32 %v3822, %v3870
        %3872 = vmatmul.bf16.gmra.mxu0 %v3060
        %v3873 = vpop.f32.mrf.mxu0
        %v3874 = vadd.f32 %v3825, %v3873
        %v3875 = vpop.f32.mrf.mxu0
        %v3876 = vadd.f32 %v3827, %v3875
        %3877 = vmatmul.bf16.gmra.mxu0 %v3069
        %v3878 = vpop.f32.mrf.mxu0
        %v3879 = vadd.f32 %v3830, %v3878
        %v3880 = vpop.f32.mrf.mxu0
        %v3881 = vadd.f32 %v3832, %v3880
        %3882 = vmatmul.bf16.gmra.mxu0 %v3078
        %v3883 = vpop.f32.mrf.mxu0
        %v3884 = vadd.f32 %v3835, %v3883
        %v3885 = vpop.f32.mrf.mxu0
        %v3886 = vadd.f32 %v3837, %v3885
        %3887 = vmatmul.bf16.gmra.mxu0 %v3087
        %v3888 = vpop.f32.mrf.mxu0
        %v3889 = vadd.f32 %v3840, %v3888
        %v3890 = vpop.f32.mrf.mxu0
        %v3891 = vadd.f32 %v3842, %v3890
        %3892 = vmatmul.bf16.gmra.mxu0 %v3096
        %v3893 = vpop.f32.mrf.mxu0
        %v3894 = vadd.f32 %v3845, %v3893
        %v3895 = vpop.f32.mrf.mxu0
        %v3896 = vadd.f32 %v3847, %v3895
        %3897 = vdwg.mxu0
        %3898 = vmatpush.bf16.msra.mxu0 %v3515
        %3899 = vmatpush.bf16.msra.mxu0 %v3514
        %3900 = vmatpush.bf16.msra.mxu0 %v3513
        %3901 = vmatpush.bf16.msra.mxu0 %v3512
        %3902 = vmatpush.bf16.msra.mxu0 %v3511
        %3903 = vmatpush.bf16.msra.mxu0 %v3510
        %3904 = vmatpush.bf16.msra.mxu0 %v3509
        %3905 = vmatpush.bf16.msra.mxu0 %v3508
        %3906 = vmatmul.bf16.gmra.mxu0 %v3034
        %v3907 = vpop.f32.mrf.mxu0
        %v3908 = vadd.f32 %v3859, %v3907
        %v3909 = vpop.f32.mrf.mxu0
        %v3910 = vadd.f32 %v3861, %v3909
        %3911 = vmatmul.bf16.gmra.mxu0 %v3043
        %v3912 = vpop.f32.mrf.mxu0
        %v3913 = vadd.f32 %v3864, %v3912
        %v3914 = vpop.f32.mrf.mxu0
        %v3915 = vadd.f32 %v3866, %v3914
        %3916 = vmatmul.bf16.gmra.mxu0 %v3052
        %v3917 = vpop.f32.mrf.mxu0
        %v3918 = vadd.f32 %v3869, %v3917
        %v3919 = vpop.f32.mrf.mxu0
        %v3920 = vadd.f32 %v3871, %v3919
        %3921 = vmatmul.bf16.gmra.mxu0 %v3061
        %v3922 = vpop.f32.mrf.mxu0
        %v3923 = vadd.f32 %v3874, %v3922
        %v3924 = vpop.f32.mrf.mxu0
        %v3925 = vadd.f32 %v3876, %v3924
        %3926 = vmatmul.bf16.gmra.mxu0 %v3070
        %v3927 = vpop.f32.mrf.mxu0
        %v3928 = vadd.f32 %v3879, %v3927
        %v3929 = vpop.f32.mrf.mxu0
        %v3930 = vadd.f32 %v3881, %v3929
        %3931 = vmatmul.bf16.gmra.mxu0 %v3079
        %v3932 = vpop.f32.mrf.mxu0
        %v3933 = vadd.f32 %v3884, %v3932
        %v3934 = vpop.f32.mrf.mxu0
        %v3935 = vadd.f32 %v3886, %v3934
        %3936 = vmatmul.bf16.gmra.mxu0 %v3088
        %v3937 = vpop.f32.mrf.mxu0
        %v3938 = vadd.f32 %v3889, %v3937
        %v3939 = vpop.f32.mrf.mxu0
        %v3940 = vadd.f32 %v3891, %v3939
        %3941 = vmatmul.bf16.gmra.mxu0 %v3097
        %v3942 = vpop.f32.mrf.mxu0
        %v3943 = vadd.f32 %v3894, %v3942
        %v3944 = vpop.f32.mrf.mxu0
        %v3945 = vadd.f32 %v3896, %v3944
        %3946 = vdwg.mxu0
        %3947 = vmatpush.bf16.msra.mxu0 %v3523
        %3948 = vmatpush.bf16.msra.mxu0 %v3522
        %3949 = vmatpush.bf16.msra.mxu0 %v3521
        %3950 = vmatpush.bf16.msra.mxu0 %v3520
        %3951 = vmatpush.bf16.msra.mxu0 %v3519
        %3952 = vmatpush.bf16.msra.mxu0 %v3518
        %3953 = vmatpush.bf16.msra.mxu0 %v3517
        %3954 = vmatpush.bf16.msra.mxu0 %v3516
        %3955 = vmatmul.bf16.gmra.mxu0 %v3035
        %v3956 = vpop.f32.mrf.mxu0
        %v3957 = vadd.f32 %v3908, %v3956
        %v3958 = vpop.f32.mrf.mxu0
        %v3959 = vadd.f32 %v3910, %v3958
        %3960 = vmatmul.bf16.gmra.mxu0 %v3044
        %v3961 = vpop.f32.mrf.mxu0
        %v3962 = vadd.f32 %v3913, %v3961
        %v3963 = vpop.f32.mrf.mxu0
        %v3964 = vadd.f32 %v3915, %v3963
        %3965 = vmatmul.bf16.gmra.mxu0 %v3053
        %v3966 = vpop.f32.mrf.mxu0
        %v3967 = vadd.f32 %v3918, %v3966
        %v3968 = vpop.f32.mrf.mxu0
        %v3969 = vadd.f32 %v3920, %v3968
        %3970 = vmatmul.bf16.gmra.mxu0 %v3062
        %v3971 = vpop.f32.mrf.mxu0
        %v3972 = vadd.f32 %v3923, %v3971
        %v3973 = vpop.f32.mrf.mxu0
        %v3974 = vadd.f32 %v3925, %v3973
        %3975 = vmatmul.bf16.gmra.mxu0 %v3071
        %v3976 = vpop.f32.mrf.mxu0
        %v3977 = vadd.f32 %v3928, %v3976
        %v3978 = vpop.f32.mrf.mxu0
        %v3979 = vadd.f32 %v3930, %v3978
        %3980 = vmatmul.bf16.gmra.mxu0 %v3080
        %v3981 = vpop.f32.mrf.mxu0
        %v3982 = vadd.f32 %v3933, %v3981
        %v3983 = vpop.f32.mrf.mxu0
        %v3984 = vadd.f32 %v3935, %v3983
        %3985 = vmatmul.bf16.gmra.mxu0 %v3089
        %v3986 = vpop.f32.mrf.mxu0
        %v3987 = vadd.f32 %v3938, %v3986
        %v3988 = vpop.f32.mrf.mxu0
        %v3989 = vadd.f32 %v3940, %v3988
        %3990 = vmatmul.bf16.gmra.mxu0 %v3098
        %v3991 = vpop.f32.mrf.mxu0
        %v3992 = vadd.f32 %v3943, %v3991
        %v3993 = vpop.f32.mrf.mxu0
        %v3994 = vadd.f32 %v3945, %v3993
        %3995 = vdwg.mxu0
        %3996 = vmatpush.bf16.msra.mxu0 %v3531
        %3997 = vmatpush.bf16.msra.mxu0 %v3530
        %3998 = vmatpush.bf16.msra.mxu0 %v3529
        %3999 = vmatpush.bf16.msra.mxu0 %v3528
        %4000 = vmatpush.bf16.msra.mxu0 %v3527
        %4001 = vmatpush.bf16.msra.mxu0 %v3526
        %4002 = vmatpush.bf16.msra.mxu0 %v3525
        %4003 = vmatpush.bf16.msra.mxu0 %v3524
        %4004 = vmatmul.bf16.gmra.mxu0 %v3036
        %v4005 = vpop.f32.mrf.mxu0
        %v4006 = vadd.f32 %v3957, %v4005
        %v4007 = vpop.f32.mrf.mxu0
        %v4008 = vadd.f32 %v3959, %v4007
        %4009 = vmatmul.bf16.gmra.mxu0 %v3045
        %v4010 = vpop.f32.mrf.mxu0
        %v4011 = vadd.f32 %v3962, %v4010
        %v4012 = vpop.f32.mrf.mxu0
        %v4013 = vadd.f32 %v3964, %v4012
        %4014 = vmatmul.bf16.gmra.mxu0 %v3054
        %v4015 = vpop.f32.mrf.mxu0
        %v4016 = vadd.f32 %v3967, %v4015
        %v4017 = vpop.f32.mrf.mxu0
        %v4018 = vadd.f32 %v3969, %v4017
        %4019 = vmatmul.bf16.gmra.mxu0 %v3063
        %v4020 = vpop.f32.mrf.mxu0
        %v4021 = vadd.f32 %v3972, %v4020
        %v4022 = vpop.f32.mrf.mxu0
        %v4023 = vadd.f32 %v3974, %v4022
        %4024 = vmatmul.bf16.gmra.mxu0 %v3072
        %v4025 = vpop.f32.mrf.mxu0
        %v4026 = vadd.f32 %v3977, %v4025
        %v4027 = vpop.f32.mrf.mxu0
        %v4028 = vadd.f32 %v3979, %v4027
        %4029 = vmatmul.bf16.gmra.mxu0 %v3081
        %v4030 = vpop.f32.mrf.mxu0
        %v4031 = vadd.f32 %v3982, %v4030
        %v4032 = vpop.f32.mrf.mxu0
        %v4033 = vadd.f32 %v3984, %v4032
        %4034 = vmatmul.bf16.gmra.mxu0 %v3090
        %v4035 = vpop.f32.mrf.mxu0
        %v4036 = vadd.f32 %v3987, %v4035
        %v4037 = vpop.f32.mrf.mxu0
        %v4038 = vadd.f32 %v3989, %v4037
        %4039 = vmatmul.bf16.gmra.mxu0 %v3099
        %v4040 = vpop.f32.mrf.mxu0
        %v4041 = vadd.f32 %v3992, %v4040
        %v4042 = vpop.f32.mrf.mxu0
        %v4043 = vadd.f32 %v3994, %v4042
        %4044 = vdwg.mxu0
        %v4045 = vld [vmem:[%s7] sm:$0x1]
        %v4047 = vperm.slane %v4045, 0
        %v4049 = vmul.f32 %v4006, %v4047
        %v4050 = vmul.f32 %v4008, %v4047
        %v4051 = vmul.f32 %v4011, %v4047
        %v4052 = vmul.f32 %v4013, %v4047
        %v4053 = vmul.f32 %v4016, %v4047
        %v4054 = vmul.f32 %v4018, %v4047
        %v4055 = vmul.f32 %v4021, %v4047
        %v4056 = vmul.f32 %v4023, %v4047
        %v4057 = vmul.f32 %v4026, %v4047
        %v4058 = vmul.f32 %v4028, %v4047
        %v4059 = vmul.f32 %v4031, %v4047
        %v4060 = vmul.f32 %v4033, %v4047
        %v4061 = vmul.f32 %v4036, %v4047
        %v4062 = vmul.f32 %v4038, %v4047
        %v4063 = vmul.f32 %v4041, %v4047
        %v4064 = vmul.f32 %v4043, %v4047
        %v4065 = vld [vmem:[%s8] sm:$0x1]
        %v4067 = vperm.slane %v4065, 0
        %v4069 = vadd.f32 %v4049, %v4067
        %v4070 = vadd.f32 %v4050, %v4067
        %v4071 = vadd.f32 %v4051, %v4067
        %v4072 = vadd.f32 %v4052, %v4067
        %v4073 = vadd.f32 %v4053, %v4067
        %v4074 = vadd.f32 %v4054, %v4067
        %v4075 = vadd.f32 %v4055, %v4067
        %v4076 = vadd.f32 %v4056, %v4067
        %v4077 = vadd.f32 %v4057, %v4067
        %v4078 = vadd.f32 %v4058, %v4067
        %v4079 = vadd.f32 %v4059, %v4067
        %v4080 = vadd.f32 %v4060, %v4067
        %v4081 = vadd.f32 %v4061, %v4067
        %v4082 = vadd.f32 %v4062, %v4067
        %v4083 = vadd.f32 %v4063, %v4067
        %v4084 = vadd.f32 %v4064, %v4067
        %vm4085 = vcmp.gt.f32.partialorder %v4069, 0.0
        %vm4086 = vcmp.gt.f32.partialorder %v4070, 0.0
        %vm4087 = vcmp.gt.f32.partialorder %v4071, 0.0
        %vm4088 = vcmp.gt.f32.partialorder %v4072, 0.0
        %vm4089 = vcmp.gt.f32.partialorder %v4073, 0.0
        %vm4090 = vcmp.gt.f32.partialorder %v4074, 0.0
        %vm4091 = vcmp.gt.f32.partialorder %v4075, 0.0
        %vm4092 = vcmp.gt.f32.partialorder %v4076, 0.0
        %vm4093 = vcmp.gt.f32.partialorder %v4077, 0.0
        %vm4094 = vcmp.gt.f32.partialorder %v4078, 0.0
        %vm4095 = vcmp.gt.f32.partialorder %v4079, 0.0
        %vm4096 = vcmp.gt.f32.partialorder %v4080, 0.0
        %vm4097 = vcmp.gt.f32.partialorder %v4081, 0.0
        %vm4098 = vcmp.gt.f32.partialorder %v4082, 0.0
        %vm4099 = vcmp.gt.f32.partialorder %v4083, 0.0
        %vm4100 = vcmp.gt.f32.partialorder %v4084, 0.0
        %v4101 = vmul.f32 %v4069, 0.1
        %v4102 = vmul.f32 %v4070, 0.1
        %v4103 = vmul.f32 %v4071, 0.1
        %v4104 = vmul.f32 %v4072, 0.1
        %v4105 = vmul.f32 %v4073, 0.1
        %v4106 = vmul.f32 %v4074, 0.1
        %v4107 = vmul.f32 %v4075, 0.1
        %v4108 = vmul.f32 %v4076, 0.1
        %v4109 = vmul.f32 %v4077, 0.1
        %v4110 = vmul.f32 %v4078, 0.1
        %v4111 = vmul.f32 %v4079, 0.1
        %v4112 = vmul.f32 %v4080, 0.1
        %v4113 = vmul.f32 %v4081, 0.1
        %v4114 = vmul.f32 %v4082, 0.1
        %v4115 = vmul.f32 %v4083, 0.1
        %v4116 = vmul.f32 %v4084, 0.1
        %v4117 = vsel %vm4085, %v4069, %v4101
        %v4118 = vsel %vm4086, %v4070, %v4102
        %v4119 = vsel %vm4087, %v4071, %v4103
        %v4120 = vsel %vm4088, %v4072, %v4104
        %v4121 = vsel %vm4089, %v4073, %v4105
        %v4122 = vsel %vm4090, %v4074, %v4106
        %v4123 = vsel %vm4091, %v4075, %v4107
        %v4124 = vsel %vm4092, %v4076, %v4108
        %v4125 = vsel %vm4093, %v4077, %v4109
        %v4126 = vsel %vm4094, %v4078, %v4110
        %v4127 = vsel %vm4095, %v4079, %v4111
        %v4128 = vsel %vm4096, %v4080, %v4112
        %v4129 = vsel %vm4097, %v4081, %v4113
        %v4130 = vsel %vm4098, %v4082, %v4114
        %v4131 = vsel %vm4099, %v4083, %v4115
        %v4132 = vsel %vm4100, %v4084, %v4116
        %v4133 = vld [vmem:[%s442] sm:$0xff]
        %v4134 = vld [vmem:[%s442 + $0x8] sm:$0xff]
        %v4135 = vld [vmem:[%s442 + $0x10] sm:$0xff]
        %v4136 = vld [vmem:[%s442 + $0x18] sm:$0xff]
        %v4137 = vld [vmem:[%s442 + $0x20] sm:$0xff]
        %v4138 = vld [vmem:[%s442 + $0x28] sm:$0xff]
        %v4139 = vld [vmem:[%s442 + $0x30] sm:$0xff]
        %v4140 = vld [vmem:[%s442 + $0x38] sm:$0xff]
        %v4141 = vld [vmem:[%s442 + $0x40] sm:$0xff]
        %v4142 = vld [vmem:[%s442 + $0x48] sm:$0xff]
        %v4143 = vld [vmem:[%s442 + $0x50] sm:$0xff]
        %v4144 = vld [vmem:[%s442 + $0x58] sm:$0xff]
        %v4145 = vld [vmem:[%s442 + $0x60] sm:$0xff]
        %v4146 = vld [vmem:[%s442 + $0x68] sm:$0xff]
        %v4147 = vld [vmem:[%s442 + $0x70] sm:$0xff]
        %v4148 = vld [vmem:[%s442 + $0x78] sm:$0xff]
        %v4149 = vadd.f32 %v4117, %v4133
        %v4150 = vadd.f32 %v4118, %v4134
        %v4151 = vadd.f32 %v4119, %v4135
        %v4152 = vadd.f32 %v4120, %v4136
        %v4153 = vadd.f32 %v4121, %v4137
        %v4154 = vadd.f32 %v4122, %v4138
        %v4155 = vadd.f32 %v4123, %v4139
        %v4156 = vadd.f32 %v4124, %v4140
        %v4157 = vadd.f32 %v4125, %v4141
        %v4158 = vadd.f32 %v4126, %v4142
        %v4159 = vadd.f32 %v4127, %v4143
        %v4160 = vadd.f32 %v4128, %v4144
        %v4161 = vadd.f32 %v4129, %v4145
        %v4162 = vadd.f32 %v4130, %v4146
        %v4163 = vadd.f32 %v4131, %v4147
        %v4164 = vadd.f32 %v4132, %v4148
        %4165 = vst [vmem:[%s517] sm:$0xff] %v4149
        %4166 = vst [vmem:[%s517 + $0x8] sm:$0xff] %v4150
        %4167 = vst [vmem:[%s517 + $0x10] sm:$0xff] %v4151
        %4168 = vst [vmem:[%s517 + $0x18] sm:$0xff] %v4152
        %4169 = vst [vmem:[%s517 + $0x20] sm:$0xff] %v4153
        %4170 = vst [vmem:[%s517 + $0x28] sm:$0xff] %v4154
        %4171 = vst [vmem:[%s517 + $0x30] sm:$0xff] %v4155
        %4172 = vst [vmem:[%s517 + $0x38] sm:$0xff] %v4156
        %4173 = vst [vmem:[%s517 + $0x40] sm:$0xff] %v4157
        %4174 = vst [vmem:[%s517 + $0x48] sm:$0xff] %v4158
        %4175 = vst [vmem:[%s517 + $0x50] sm:$0xff] %v4159
        %4176 = vst [vmem:[%s517 + $0x58] sm:$0xff] %v4160
        %4177 = vst [vmem:[%s517 + $0x60] sm:$0xff] %v4161
        %4178 = vst [vmem:[%s517 + $0x68] sm:$0xff] %v4162
        %4179 = vst [vmem:[%s517 + $0x70] sm:$0xff] %v4163
        %4180 = vst [vmem:[%s517 + $0x78] sm:$0xff] %v4164
        %s4181 = sand.u32 %s278, 1
        %s4182 = scalar_lea.sflag [#allocation6], %s4181
        %s4183 = sand.u32 %s278, 1
        %s4184 = smul.addr %s4183, 128
        %s4185 = scalar_lea.vmem [#allocation13], %s4184
        // Predicated region
        $region77: #{tpu_custom_call.1} parent=55 // pred_check
          %p4186 = pneg %p288
        $region78: #{tpu_custom_call.1} parent=55 // pred_check_branch
          %4188 = sbr.rel (%p4186) target = $region80
        $region79: #{tpu_custom_call.1} parent=55 // pred_region
          %s4189 = smul.u32 8, %s35
          %4191 = vsyncadd %s4182, 0
          %s4192 = smul.addr %s4189, 2
          %s4193 = smul.addr %s34, 32
          %s4194 = sadd.s32 %s4192, %s4193
          %s4195 = smul.addr %s4194, 8
          %s4196 = scalar_lea.hbm %s9, %s4195
          %s4197 = sshll.u32 %s4185, 4
          %s4198 = int_to_ptr.vmem [resolvable:$true] %s4197
          %s4199 = sshll.u32 %s4196, 4
          %s4200 = int_to_ptr.hbm [resolvable:$true] %s4199
          %4205 = dma.vmem_to_hbm [thread:$0]  %s4198, 2048, %s4200, %s4182, 128, 128, 8
        $region80: #{tpu_custom_call.1} parent=55 // pred_fallthru
          _
      $region56: #{tpu_custom_call.1} parent=5 // pred_fallthru
        _
      %p4206 = scmp.le.s32.totalorder 2, %s25
      // Predicated region
      $region81: #{tpu_custom_call.1} parent=5 // pred_check
        %p4207 = pneg %p4206
      $region82: #{tpu_custom_call.1} parent=5 // pred_check_branch
        %4209 = sbr.rel (%p4207) target = $region84
      $region83: #{tpu_custom_call.1} parent=5 // pred_region
        %s4210 = ssub.s32 %s25, 2
        // Predicated region
        $region85: #{tpu_custom_call.1} parent=83 // pred_check
          %p4211 = pneg %p294
        $region86: #{tpu_custom_call.1} parent=83 // pred_check_branch
          %4213 = sbr.rel (%p4211) target = $region88
        $region87: #{tpu_custom_call.1} parent=83 // pred_region
          %s4214 = sand.u32 %s279, 1
          %s4215 = scalar_lea.sflag [#allocation6], %s4214
          %s4216 = sand.u32 %s279, 1
          %s4217 = smul.addr %s4216, 128
          %s4218 = scalar_lea.vmem [#allocation13], %s4217
          %4220 = dma.done %s4215, 2048
        $region88: #{tpu_custom_call.1} parent=83 // pred_fallthru
          _
      $region84: #{tpu_custom_call.1} parent=5 // pred_fallthru
        _
    $region6: #{tpu_custom_call.1} parent=1 // loop_footer
      %s29 = sadd.s32 1, %s25
    $region7: #{tpu_custom_call.1} parent=1 // loop_footer_branch
      %24 = sbr.rel target = $region3
    $region8: #{tpu_custom_call.1} parent=1 // loop_exit
      _
    %4221 = vsyncpa [#allocation5], 1
    %s4222 = scalar_lea.sflag [#allocation5], 1
    %4223 = vsyncpa %s4222, 1
    %4224 = vsyncpa [#allocation8], 1
    %s4225 = scalar_lea.sflag [#allocation8], 1
    %4226 = vsyncpa %s4225, 1
    %4227 = vsyncpa [#allocation11], 1
    %4228 = vsyncpa [#allocation6], 1
    %s4229 = scalar_lea.sflag [#allocation6], 1
    %4230 = vsyncpa %s4229, 1

</llo_original>
